<compile_context>
chip_gen: v7x
topology: tpu7x:2x2x1
jax: 0.10.0
libtpu: 0.0.40
codegen_flags: <defaults>
</compile_context>

<pallas_src>
import functools

import jax
import jax.numpy as jnp
from jax.experimental import pallas as pl
from jax.experimental.pallas import tpu as pltpu


# --------------------------------------------------------------------------- #
# Kernel
# --------------------------------------------------------------------------- #
def _robust_sum_kernel(a_ref, vaug_ref, vt_ref, vsq_ref, o_ref, *,
                       batch_block, L, D, norm, epsilon, gamma, t, delta,
                       assume_nonneg_a, unroll_l):
    # a_ref:   (Bb, tS, S)    f32   attention rows for this tile
    # vaug_ref:(Bb, S, D+1)   mm    [V | 1]  (ones column carries the L1 denom)
    # vt_ref:  (Bb, D, S)     mm    V^T      (hoisted out of the kernel)
    # vsq_ref: (Bb, 1, S)     f32   ||V_j||^2 in lane layout (hoisted)
    # o_ref:   (1, tS, Bb*D)  f32   lane-dense packed output slab
    S = a_ref.shape[-1]
    mm_dtype = vaug_ref.dtype          # bf16 (default) or f32, set by the wrapper

    if not assume_nonneg_a:
        # Only needed for arbitrary-sign A (F.normalize(p=1) semantics).
        ones_col = jnp.ones((S, 1), jnp.float32)

    outs = []
    for bb in range(batch_block):      # small (<=8), statically unrolled
        A = a_ref[bb]                                   # (tS, S) f32
        A_mm = A.astype(mm_dtype)
        Vaug = vaug_ref[bb]                             # (S, D+1)
        VT = vt_ref[bb]                                 # (D, S)
        v_sq = vsq_ref[bb]                              # (1, S) f32

        # M = A @ V   (extra column = row-sum of A, sliced away)
        M = jnp.dot(A_mm, Vaug, preferred_element_type=jnp.float32)[:, :D]

        def one_iteration(M):
            # torch.cdist(M, V) (p=2) via the Gram form on the MXU + clamp.
            m_sq = jnp.sum(M * M, axis=-1, keepdims=True)                # (tS, 1)
            cross = jnp.dot(M.astype(mm_dtype), VT,
                            preferred_element_type=jnp.float32)           # (tS, S)
            dist = jnp.sqrt(jnp.maximum(m_sq + v_sq - 2.0 * cross, 0.0))

            inv = pl.reciprocal(dist + epsilon, approx=True)              # EUP
            if norm in ("L2", "L1"):
                w = inv
            elif norm == "MCP":
                w = jnp.maximum(inv - 1.0 / gamma, epsilon)
            elif norm == "Huber":
                w = jnp.minimum(delta * inv, 1.0)
            else:
                raise ValueError(f"unknown norm {norm!r}")

            ww = w * A                                                    # (tS, S)

            # Fused matmul: columns [:D] = ww @ V, column [D] = row L1 of ww
            # (ww >= 0 for softmax A, so the plain sum IS the L1 norm).
            P = jnp.dot(ww.astype(mm_dtype), Vaug,
                        preferred_element_type=jnp.float32)               # (tS, D+1)
            Mv = P[:, :D]
            if assume_nonneg_a:
                denom = P[:, D:D + 1]
            else:
                denom = jnp.dot(jnp.abs(ww), ones_col,
                                preferred_element_type=jnp.float32)
            denom = jnp.maximum(denom, 1e-12)
            # Exact reciprocal for the (tS, 1) denominator: essentially free, and
            # its error would otherwise scale every output element of the row.
            Mv = Mv * pl.reciprocal(denom, approx=False)

            if t == 1.0:            # module default: skip the convex blend
                return Mv
            return (1.0 - t) * M + t * Mv

        if unroll_l:
            for _ in range(L):
                M = one_iteration(M)
        else:
            M = jax.lax.fori_loop(0, L, lambda _, m: one_iteration(m), M)

        outs.append(M)

    packed = outs[0] if batch_block == 1 else jnp.concatenate(outs, axis=-1)
    o_ref[0] = packed.astype(o_ref.dtype)                # single lane-dense store


# --------------------------------------------------------------------------- #
# Tiling heuristics
# --------------------------------------------------------------------------- #
def _vmem_capacity_bytes():
    """Per-core VMEM: 128 MiB on v5e/v6e, 64 MiB on v7x.  Conservative fallback."""
    try:
        info = pltpu.get_tpu_info()
        for name in ("vmem_capacity_bytes", "vmem_size_bytes", "vmem_bytes"):
            cap = getattr(info, name, None)
            if cap:
                return int(cap)
    except Exception:
        pass
    return 64 << 20


def _choose_batch_block(B, S, D, budget_bytes=4 << 20, max_block=8):
    """Pack several batch elements per grid step: amortizes the ~600-cycle step
    overhead for tiny S and makes the packed output lane-dense (Bb*D >= 128 for
    the module's D=32).  Capped at 8 to keep the unrolled per-element loop and
    compile time small."""
    per_elem = 4 * (S * S + 3 * S * (D + 1))
    best = 1
    for bb in range(1, min(B, max_block) + 1):
        if B % bb == 0 and bb * per_elem <= budget_bytes:
            best = bb
    return best


def _row_tile_bytes(tS, S, D, Bb):
    """Rough per-grid-step VMEM estimate (f32 bytes, over-counts bf16 operands)."""
    return 4 * Bb * (2 * tS * S          # A tile, double buffered
                     + 4 * S * (D + 1)   # Vaug + VT buffers
                     + 2 * S             # v_sq
                     + 2 * tS * D        # output tile
                     + 6 * tS * S)       # cross / dist / w / ww live temporaries


def _choose_row_tile(S, D, Bb, budget, max_tile=512):
    """Largest row tile (multiple of 8, <= max_tile) that fits the VMEM budget.
    Prefers a tile dividing S; otherwise the query-row axis is padded (never a
    full-S fallback, so no VMEM cliff for awkward S)."""
    limit = min(max_tile, S)
    limit -= limit % 8
    for tS in range(limit, 7, -8):
        if S % tS == 0 and _row_tile_bytes(tS, S, D, Bb) <= budget:
            return tS, S
    if S <= 8:
        return 8, 8
    tS = max(limit, 8)
    while tS > 8 and _row_tile_bytes(tS, S, D, Bb) > budget:
        tS -= 8
    s_rows = -(-S // tS) * tS
    return tS, s_rows


# --------------------------------------------------------------------------- #
# Wrappers
# --------------------------------------------------------------------------- #
def robust_sum_pallas(A, V, *, L=3, norm="L2", epsilon=0.01, gamma=4.0, t=1.0,
                      delta=4.0, bf16_matmul=True, assume_nonneg_A=True,
                      row_tile=None, batch_block=None):
    """Pallas implementation of RobustSum.forward.

    A: (B, S, S) float32, V: (B, S, D) float32 -> (B, S, D) float32.
    """
    A = jnp.asarray(A, jnp.float32)
    V = jnp.asarray(V, jnp.float32)
    B, S, S2 = A.shape
    assert S == S2, "A must be (B, S, S)"
    Bv, Sv, D = V.shape
    assert (Bv, Sv) == (B, S), "V must be (B, S, D)"

    mm_dtype = jnp.bfloat16 if bf16_matmul else jnp.float32

    cap = _vmem_capacity_bytes()
    tile_budget = int(cap * 0.5)           # headroom: estimate is rough
    vmem_limit = int(cap * 0.7)            # raise the scoped VMEM limit per chip

    Bb = batch_block if batch_block is not None else _choose_batch_block(B, S, D)
    assert B % Bb == 0, "batch_block must divide B"

    if row_tile is not None:
        tS = row_tile
        assert tS % 8 == 0 or tS == S, "row_tile must be a multiple of 8"
        s_rows = -(-S // tS) * tS
    else:
        tS, s_rows = _choose_row_tile(S, D, Bb, tile_budget)

    # Hoisted, loop-invariant operands (computed once in XLA, resident per block).
    ones = jnp.ones((B, S, 1), jnp.float32)
    Vaug = jnp.concatenate([V, ones], axis=-1).astype(mm_dtype)   # (B, S, D+1)
    VT = jnp.transpose(V, (0, 2, 1)).astype(mm_dtype)             # (B, D, S)
    v_sq = jnp.sum(V * V, axis=-1)[:, None, :]                    # (B, 1, S) f32

    A_in = A
    if s_rows != S:
        # Zero query rows: M=0, ww=0, denom clamp -> output 0; sliced off below.
        A_in = jnp.pad(A, ((0, 0), (0, s_rows - S), (0, 0)))

    # Static unroll of L only while the (tS, S) tile is small; otherwise a carried
    # fori_loop bounds the live ranges (v7x 64 MiB friendliness).
    unroll_l = (L <= 4) and (tS * S * 4 <= (2 << 20))

    kernel = functools.partial(
        _robust_sum_kernel,
        batch_block=Bb, L=L, D=D, norm=norm, epsilon=float(epsilon),
        gamma=float(gamma), t=float(t), delta=float(delta),
        assume_nonneg_a=assume_nonneg_A, unroll_l=unroll_l)

    Bg = B // Bb
    out_packed = pl.pallas_call(
        kernel,
        out_shape=jax.ShapeDtypeStruct((Bg, s_rows, Bb * D), jnp.float32),
        grid_spec=pltpu.PrefetchScalarGridSpec(
            num_scalar_prefetch=0,
            grid=(Bg, s_rows // tS),
            in_specs=[
                # A: row-tiled along the query axis.
                pl.BlockSpec((Bb, tS, S), lambda b, r: (b, r, 0)),
                # Vaug / V^T / ||V||^2: resident across all row tiles of a block.
                pl.BlockSpec((Bb, S, D + 1), lambda b, r: (b, 0, 0)),
                pl.BlockSpec((Bb, D, S), lambda b, r: (b, 0, 0)),
                pl.BlockSpec((Bb, 1, S), lambda b, r: (b, 0, 0)),
            ],
            out_specs=pl.BlockSpec((1, tS, Bb * D), lambda b, r: (b, r, 0)),
        ),
        compiler_params=pltpu.CompilerParams(
            dimension_semantics=("parallel", "parallel"),
            vmem_limit_bytes=vmem_limit,
        ),
    )(A_in, Vaug, VT, v_sq)

    # Undo the lane-dense batch packing: (Bg, s_rows, Bb*D) -> (B, S, D).
    out = (out_packed.reshape(Bg, s_rows, Bb, D)
           .transpose(0, 2, 1, 3)
           .reshape(B, s_rows, D))
    return out[:, :S, :]


def _reference_robust_sum(A, V, *, L=3, norm="L2", epsilon=0.01,
                          gamma=4.0, t=1.0, delta=4.0):
    """Pure-JAX reference mirroring the PyTorch module (explicit pairwise cdist)."""
    M = jnp.einsum("bij,bjd->bid", A, V)
    for _ in range(L):
        diff = M[:, :, None, :] - V[:, None, :, :]
        dist = jnp.sqrt(jnp.maximum(jnp.sum(diff * diff, axis=-1), 0.0))
        if norm in ("L2", "L1"):
            w = 1.0 / (dist + epsilon)
        elif norm == "MCP":
            w = 1.0 / (dist + epsilon) - 1.0 / gamma
            w = jnp.where(w < epsilon, epsilon, w)
        elif norm == "Huber":
            w = delta / (dist + epsilon)
            w = jnp.where(w > 1.0, 1.0, w)
        ww = w * A
        denom = jnp.maximum(jnp.sum(jnp.abs(ww), axis=-1, keepdims=True), 1e-12)
        M = (1.0 - t) * M + t * jnp.einsum("bij,bjd->bid", ww / denom, V)
    return M


def robust_sum(A, V, *, L=3, norm="L2", epsilon=0.01, gamma=4.0, t=1.0, delta=4.0,
               min_pallas_seq=128, force_pallas=False, **pallas_kwargs):
    """Dispatcher: the module's actual seq_len=8 is step-overhead / MXU-fill
    dominated, so tiny sequences go to XLA's batched path; Pallas for S >= 128."""
    S = A.shape[1]
    if not force_pallas and S < min_pallas_seq:
        return _reference_robust_sum(A, V, L=L, norm=norm, epsilon=epsilon,
                                     gamma=gamma, t=t, delta=delta)
    return robust_sum_pallas(A, V, L=L, norm=norm, epsilon=epsilon, gamma=gamma,
                             t=t, delta=delta, **pallas_kwargs)


# --------------------------------------------------------------------------- #
# Self-test
# --------------------------------------------------------------------------- #
if __name__ == "__main__":
    root_key = jax.random.PRNGKey(0)

    def check(seed, B, S, D, norm, tol, **kw):
        k_a, k_v = jax.random.split(jax.random.fold_in(root_key, seed))
        # A: softmax-normalized attention weights (row-stochastic, like the module).
        A = jax.nn.softmax(jax.random.normal(k_a, (B, S, S), jnp.float32), axis=-1)
        V = jax.random.normal(k_v, (B, S, D), jnp.float32)

        out = jax.block_until_ready(
            robust_sum(A, V, L=3, norm=norm, force_pallas=True, **kw))
        ref = jax.block_until_ready(_reference_robust_sum(A, V, L=3, norm=norm))

        assert out.shape == (B, S, D)
        err = float(jnp.max(jnp.abs(out - ref)))
        assert err < tol, f"B={B} S={S} D={D} {norm}: max abs err = {err}"

    # Module's actual shape (seq_len=8, 2*hidden_size=32): batch-packed, lane-dense
    # (Bb=4 -> 128-lane output slab), f32 MXU path for a tight check.
    check(1, B=4, S=8, D=32, norm="L2", tol=1e-2, bf16_matmul=False)
    # bf16 fast path + explicit row tiling: grid = (1, 2), V resident across tiles.
    check(2, B=2, S=256, D=32, norm="L2", tol=3e-2, row_tile=128)
    # Awkward S exercising the query-row padding path + the Huber norm branch.
    check(3, B=2, S=36, D=32, norm="Huber", tol=3e-2)

    print("KERNEL_OK")
</pallas_src>

<mosaic_0001>
module attributes {stable_mosaic.version = 11 : i64} {
  func.func @_robust_sum_kernel(%arg0: i32, %arg1: i32, %arg2: memref<4x8x8xf32, #tpu.memory_space<vmem>>, %arg3: memref<4x8x33xf32, #tpu.memory_space<vmem>>, %arg4: memref<4x32x8xf32, #tpu.memory_space<vmem>>, %arg5: memref<4x1x8xf32, #tpu.memory_space<vmem>>, %arg6: memref<1x8x128xf32, #tpu.memory_space<vmem>>) attributes {dimension_semantics = [#tpu.dimension_semantics<parallel>, #tpu.dimension_semantics<parallel>], iteration_bounds = array<i64: 1, 1>, scalar_prefetch = 0 : i64, scratch_operands = 0 : i64, tpu.core_type = #tpu.core_type<tc>, window_params = [{transform_indices = @transform_0, window_bounds = array<i64: 4, 8, 8>}, {transform_indices = @transform_1, window_bounds = array<i64: 4, 8, 33>}, {transform_indices = @transform_2, window_bounds = array<i64: 4, 32, 8>}, {transform_indices = @transform_3, window_bounds = array<i64: 4, 1, 8>}, {transform_indices = @transform_4, window_bounds = array<i64: 1, 8, 128>}]} {
    %c0 = arith.constant 0 : index
    %c0_0 = arith.constant 0 : index
    %c0_1 = arith.constant 0 : index
    %0 = vector.load %arg2[%c0, %c0_0, %c0_1] : memref<4x8x8xf32, #tpu.memory_space<vmem>>, vector<1x8x8xf32>
    %1 = vector.shape_cast %0 : vector<1x8x8xf32> to vector<8x8xf32>
    %c0_2 = arith.constant 0 : index
    %c0_3 = arith.constant 0 : index
    %c0_4 = arith.constant 0 : index
    %2 = vector.load %arg3[%c0_2, %c0_3, %c0_4] : memref<4x8x33xf32, #tpu.memory_space<vmem>>, vector<1x8x33xf32>
    %3 = vector.shape_cast %2 : vector<1x8x33xf32> to vector<8x33xf32>
    %c0_5 = arith.constant 0 : index
    %c0_6 = arith.constant 0 : index
    %c0_7 = arith.constant 0 : index
    %4 = vector.load %arg4[%c0_5, %c0_6, %c0_7] : memref<4x32x8xf32, #tpu.memory_space<vmem>>, vector<1x32x8xf32>
    %5 = vector.shape_cast %4 : vector<1x32x8xf32> to vector<32x8xf32>
    %c0_8 = arith.constant 0 : index
    %c0_9 = arith.constant 0 : index
    %c0_10 = arith.constant 0 : index
    %6 = vector.load %arg5[%c0_8, %c0_9, %c0_10] : memref<4x1x8xf32, #tpu.memory_space<vmem>>, vector<1x1x8xf32>
    %7 = vector.shape_cast %6 : vector<1x1x8xf32> to vector<1x8xf32>
    %cst = arith.constant dense<0.000000e+00> : vector<8x33xf32>
    %8 = tpu.matmul %1, %3, %cst {dimension_numbers = #tpu.dot_dimension_numbers<[1], [0], [0], [1], [0, 0, 1, 1], [], []>} : vector<8x8xf32>, vector<8x33xf32>, vector<8x33xf32> -> vector<8x33xf32>
    %9 = vector.extract_strided_slice %8 {offsets = [0, 0], sizes = [8, 32], strides = [1, 1]} : vector<8x33xf32> to vector<8x32xf32>
    %10 = arith.mulf %9, %9 : vector<8x32xf32>
    %cst_11 = arith.constant dense<0.000000e+00> : vector<8xf32>
    %11 = vector.multi_reduction <add>, %10, %cst_11 [1] : vector<8x32xf32> to vector<8xf32>
    %12 = vector.shape_cast %11 : vector<8xf32> to vector<8x1xf32>
    %cst_12 = arith.constant dense<0.000000e+00> : vector<8x8xf32>
    %13 = tpu.matmul %9, %5, %cst_12 {dimension_numbers = #tpu.dot_dimension_numbers<[1], [0], [0], [1], [0, 0, 1, 1], [], []>} : vector<8x32xf32>, vector<32x8xf32>, vector<8x8xf32> -> vector<8x8xf32>
    %14 = vector.broadcast %12 : vector<8x1xf32> to vector<8x8xf32>
    %15 = vector.broadcast %7 : vector<1x8xf32> to vector<8x8xf32>
    %16 = arith.addf %14, %15 : vector<8x8xf32>
    %cst_13 = arith.constant 2.000000e+00 : f32
    %17 = vector.broadcast %cst_13 : f32 to vector<8x8xf32>
    %18 = arith.mulf %17, %13 : vector<8x8xf32>
    %19 = arith.subf %16, %18 : vector<8x8xf32>
    %cst_14 = arith.constant 0.000000e+00 : f32
    %20 = vector.broadcast %cst_14 : f32 to vector<8x8xf32>
    %21 = arith.maximumf %19, %20 : vector<8x8xf32>
    %22 = math.sqrt %21 : vector<8x8xf32>
    %cst_15 = arith.constant 0.00999999977 : f32
    %23 = vector.broadcast %cst_15 : f32 to vector<8x8xf32>
    %24 = arith.addf %22, %23 : vector<8x8xf32>
    %25 = tpu.reciprocal %24 {approx = true} : vector<8x8xf32> -> vector<8x8xf32>
    %26 = arith.mulf %25, %1 : vector<8x8xf32>
    %cst_16 = arith.constant dense<0.000000e+00> : vector<8x33xf32>
    %27 = tpu.matmul %26, %3, %cst_16 {dimension_numbers = #tpu.dot_dimension_numbers<[1], [0], [0], [1], [0, 0, 1, 1], [], []>} : vector<8x8xf32>, vector<8x33xf32>, vector<8x33xf32> -> vector<8x33xf32>
    %28 = vector.extract_strided_slice %27 {offsets = [0, 0], sizes = [8, 32], strides = [1, 1]} : vector<8x33xf32> to vector<8x32xf32>
    %29 = vector.extract_strided_slice %27 {offsets = [0, 32], sizes = [8, 1], strides = [1, 1]} : vector<8x33xf32> to vector<8x1xf32>
    %cst_17 = arith.constant 9.99999996E-13 : f32
    %30 = vector.broadcast %cst_17 : f32 to vector<8x1xf32>
    %31 = arith.maximumf %29, %30 : vector<8x1xf32>
    %32 = tpu.reciprocal %31 : vector<8x1xf32> -> vector<8x1xf32>
    %33 = vector.broadcast %32 : vector<8x1xf32> to vector<8x32xf32>
    %34 = arith.mulf %28, %33 : vector<8x32xf32>
    %35 = arith.mulf %34, %34 : vector<8x32xf32>
    %cst_18 = arith.constant dense<0.000000e+00> : vector<8xf32>
    %36 = vector.multi_reduction <add>, %35, %cst_18 [1] : vector<8x32xf32> to vector<8xf32>
    %37 = vector.shape_cast %36 : vector<8xf32> to vector<8x1xf32>
    %cst_19 = arith.constant dense<0.000000e+00> : vector<8x8xf32>
    %38 = tpu.matmul %34, %5, %cst_19 {dimension_numbers = #tpu.dot_dimension_numbers<[1], [0], [0], [1], [0, 0, 1, 1], [], []>} : vector<8x32xf32>, vector<32x8xf32>, vector<8x8xf32> -> vector<8x8xf32>
    %39 = vector.broadcast %37 : vector<8x1xf32> to vector<8x8xf32>
    %40 = vector.broadcast %7 : vector<1x8xf32> to vector<8x8xf32>
    %41 = arith.addf %39, %40 : vector<8x8xf32>
    %cst_20 = arith.constant 2.000000e+00 : f32
    %42 = vector.broadcast %cst_20 : f32 to vector<8x8xf32>
    %43 = arith.mulf %42, %38 : vector<8x8xf32>
    %44 = arith.subf %41, %43 : vector<8x8xf32>
    %cst_21 = arith.constant 0.000000e+00 : f32
    %45 = vector.broadcast %cst_21 : f32 to vector<8x8xf32>
    %46 = arith.maximumf %44, %45 : vector<8x8xf32>
    %47 = math.sqrt %46 : vector<8x8xf32>
    %cst_22 = arith.constant 0.00999999977 : f32
    %48 = vector.broadcast %cst_22 : f32 to vector<8x8xf32>
    %49 = arith.addf %47, %48 : vector<8x8xf32>
    %50 = tpu.reciprocal %49 {approx = true} : vector<8x8xf32> -> vector<8x8xf32>
    %51 = arith.mulf %50, %1 : vector<8x8xf32>
    %cst_23 = arith.constant dense<0.000000e+00> : vector<8x33xf32>
    %52 = tpu.matmul %51, %3, %cst_23 {dimension_numbers = #tpu.dot_dimension_numbers<[1], [0], [0], [1], [0, 0, 1, 1], [], []>} : vector<8x8xf32>, vector<8x33xf32>, vector<8x33xf32> -> vector<8x33xf32>
    %53 = vector.extract_strided_slice %52 {offsets = [0, 0], sizes = [8, 32], strides = [1, 1]} : vector<8x33xf32> to vector<8x32xf32>
    %54 = vector.extract_strided_slice %52 {offsets = [0, 32], sizes = [8, 1], strides = [1, 1]} : vector<8x33xf32> to vector<8x1xf32>
    %cst_24 = arith.constant 9.99999996E-13 : f32
    %55 = vector.broadcast %cst_24 : f32 to vector<8x1xf32>
    %56 = arith.maximumf %54, %55 : vector<8x1xf32>
    %57 = tpu.reciprocal %56 : vector<8x1xf32> -> vector<8x1xf32>
    %58 = vector.broadcast %57 : vector<8x1xf32> to vector<8x32xf32>
    %59 = arith.mulf %53, %58 : vector<8x32xf32>
    %60 = arith.mulf %59, %59 : vector<8x32xf32>
    %cst_25 = arith.constant dense<0.000000e+00> : vector<8xf32>
    %61 = vector.multi_reduction <add>, %60, %cst_25 [1] : vector<8x32xf32> to vector<8xf32>
    %62 = vector.shape_cast %61 : vector<8xf32> to vector<8x1xf32>
    %cst_26 = arith.constant dense<0.000000e+00> : vector<8x8xf32>
    %63 = tpu.matmul %59, %5, %cst_26 {dimension_numbers = #tpu.dot_dimension_numbers<[1], [0], [0], [1], [0, 0, 1, 1], [], []>} : vector<8x32xf32>, vector<32x8xf32>, vector<8x8xf32> -> vector<8x8xf32>
    %64 = vector.broadcast %62 : vector<8x1xf32> to vector<8x8xf32>
    %65 = vector.broadcast %7 : vector<1x8xf32> to vector<8x8xf32>
    %66 = arith.addf %64, %65 : vector<8x8xf32>
    %cst_27 = arith.constant 2.000000e+00 : f32
    %67 = vector.broadcast %cst_27 : f32 to vector<8x8xf32>
    %68 = arith.mulf %67, %63 : vector<8x8xf32>
    %69 = arith.subf %66, %68 : vector<8x8xf32>
    %cst_28 = arith.constant 0.000000e+00 : f32
    %70 = vector.broadcast %cst_28 : f32 to vector<8x8xf32>
    %71 = arith.maximumf %69, %70 : vector<8x8xf32>
    %72 = math.sqrt %71 : vector<8x8xf32>
    %cst_29 = arith.constant 0.00999999977 : f32
    %73 = vector.broadcast %cst_29 : f32 to vector<8x8xf32>
    %74 = arith.addf %72, %73 : vector<8x8xf32>
    %75 = tpu.reciprocal %74 {approx = true} : vector<8x8xf32> -> vector<8x8xf32>
    %76 = arith.mulf %75, %1 : vector<8x8xf32>
    %cst_30 = arith.constant dense<0.000000e+00> : vector<8x33xf32>
    %77 = tpu.matmul %76, %3, %cst_30 {dimension_numbers = #tpu.dot_dimension_numbers<[1], [0], [0], [1], [0, 0, 1, 1], [], []>} : vector<8x8xf32>, vector<8x33xf32>, vector<8x33xf32> -> vector<8x33xf32>
    %78 = vector.extract_strided_slice %77 {offsets = [0, 0], sizes = [8, 32], strides = [1, 1]} : vector<8x33xf32> to vector<8x32xf32>
    %79 = vector.extract_strided_slice %77 {offsets = [0, 32], sizes = [8, 1], strides = [1, 1]} : vector<8x33xf32> to vector<8x1xf32>
    %cst_31 = arith.constant 9.99999996E-13 : f32
    %80 = vector.broadcast %cst_31 : f32 to vector<8x1xf32>
    %81 = arith.maximumf %79, %80 : vector<8x1xf32>
    %82 = tpu.reciprocal %81 : vector<8x1xf32> -> vector<8x1xf32>
    %83 = vector.broadcast %82 : vector<8x1xf32> to vector<8x32xf32>
    %84 = arith.mulf %78, %83 : vector<8x32xf32>
    %c1 = arith.constant 1 : index
    %c0_32 = arith.constant 0 : index
    %c0_33 = arith.constant 0 : index
    %85 = vector.load %arg2[%c1, %c0_32, %c0_33] : memref<4x8x8xf32, #tpu.memory_space<vmem>>, vector<1x8x8xf32>
    %86 = vector.shape_cast %85 : vector<1x8x8xf32> to vector<8x8xf32>
    %c1_34 = arith.constant 1 : index
    %c0_35 = arith.constant 0 : index
    %c0_36 = arith.constant 0 : index
    %87 = vector.load %arg3[%c1_34, %c0_35, %c0_36] : memref<4x8x33xf32, #tpu.memory_space<vmem>>, vector<1x8x33xf32>
    %88 = vector.shape_cast %87 : vector<1x8x33xf32> to vector<8x33xf32>
    %c1_37 = arith.constant 1 : index
    %c0_38 = arith.constant 0 : index
    %c0_39 = arith.constant 0 : index
    %89 = vector.load %arg4[%c1_37, %c0_38, %c0_39] : memref<4x32x8xf32, #tpu.memory_space<vmem>>, vector<1x32x8xf32>
    %90 = vector.shape_cast %89 : vector<1x32x8xf32> to vector<32x8xf32>
    %c1_40 = arith.constant 1 : index
    %c0_41 = arith.constant 0 : index
    %c0_42 = arith.constant 0 : index
    %91 = vector.load %arg5[%c1_40, %c0_41, %c0_42] : memref<4x1x8xf32, #tpu.memory_space<vmem>>, vector<1x1x8xf32>
    %92 = vector.shape_cast %91 : vector<1x1x8xf32> to vector<1x8xf32>
    %cst_43 = arith.constant dense<0.000000e+00> : vector<8x33xf32>
    %93 = tpu.matmul %86, %88, %cst_43 {dimension_numbers = #tpu.dot_dimension_numbers<[1], [0], [0], [1], [0, 0, 1, 1], [], []>} : vector<8x8xf32>, vector<8x33xf32>, vector<8x33xf32> -> vector<8x33xf32>
    %94 = vector.extract_strided_slice %93 {offsets = [0, 0], sizes = [8, 32], strides = [1, 1]} : vector<8x33xf32> to vector<8x32xf32>
    %95 = arith.mulf %94, %94 : vector<8x32xf32>
    %cst_44 = arith.constant dense<0.000000e+00> : vector<8xf32>
    %96 = vector.multi_reduction <add>, %95, %cst_44 [1] : vector<8x32xf32> to vector<8xf32>
    %97 = vector.shape_cast %96 : vector<8xf32> to vector<8x1xf32>
    %cst_45 = arith.constant dense<0.000000e+00> : vector<8x8xf32>
    %98 = tpu.matmul %94, %90, %cst_45 {dimension_numbers = #tpu.dot_dimension_numbers<[1], [0], [0], [1], [0, 0, 1, 1], [], []>} : vector<8x32xf32>, vector<32x8xf32>, vector<8x8xf32> -> vector<8x8xf32>
    %99 = vector.broadcast %97 : vector<8x1xf32> to vector<8x8xf32>
    %100 = vector.broadcast %92 : vector<1x8xf32> to vector<8x8xf32>
    %101 = arith.addf %99, %100 : vector<8x8xf32>
    %cst_46 = arith.constant 2.000000e+00 : f32
    %102 = vector.broadcast %cst_46 : f32 to vector<8x8xf32>
    %103 = arith.mulf %102, %98 : vector<8x8xf32>
    %104 = arith.subf %101, %103 : vector<8x8xf32>
    %cst_47 = arith.constant 0.000000e+00 : f32
    %105 = vector.broadcast %cst_47 : f32 to vector<8x8xf32>
    %106 = arith.maximumf %104, %105 : vector<8x8xf32>
    %107 = math.sqrt %106 : vector<8x8xf32>
    %cst_48 = arith.constant 0.00999999977 : f32
    %108 = vector.broadcast %cst_48 : f32 to vector<8x8xf32>
    %109 = arith.addf %107, %108 : vector<8x8xf32>
    %110 = tpu.reciprocal %109 {approx = true} : vector<8x8xf32> -> vector<8x8xf32>
    %111 = arith.mulf %110, %86 : vector<8x8xf32>
    %cst_49 = arith.constant dense<0.000000e+00> : vector<8x33xf32>
    %112 = tpu.matmul %111, %88, %cst_49 {dimension_numbers = #tpu.dot_dimension_numbers<[1], [0], [0], [1], [0, 0, 1, 1], [], []>} : vector<8x8xf32>, vector<8x33xf32>, vector<8x33xf32> -> vector<8x33xf32>
    %113 = vector.extract_strided_slice %112 {offsets = [0, 0], sizes = [8, 32], strides = [1, 1]} : vector<8x33xf32> to vector<8x32xf32>
    %114 = vector.extract_strided_slice %112 {offsets = [0, 32], sizes = [8, 1], strides = [1, 1]} : vector<8x33xf32> to vector<8x1xf32>
    %cst_50 = arith.constant 9.99999996E-13 : f32
    %115 = vector.broadcast %cst_50 : f32 to vector<8x1xf32>
    %116 = arith.maximumf %114, %115 : vector<8x1xf32>
    %117 = tpu.reciprocal %116 : vector<8x1xf32> -> vector<8x1xf32>
    %118 = vector.broadcast %117 : vector<8x1xf32> to vector<8x32xf32>
    %119 = arith.mulf %113, %118 : vector<8x32xf32>
    %120 = arith.mulf %119, %119 : vector<8x32xf32>
    %cst_51 = arith.constant dense<0.000000e+00> : vector<8xf32>
    %121 = vector.multi_reduction <add>, %120, %cst_51 [1] : vector<8x32xf32> to vector<8xf32>
    %122 = vector.shape_cast %121 : vector<8xf32> to vector<8x1xf32>
    %cst_52 = arith.constant dense<0.000000e+00> : vector<8x8xf32>
    %123 = tpu.matmul %119, %90, %cst_52 {dimension_numbers = #tpu.dot_dimension_numbers<[1], [0], [0], [1], [0, 0, 1, 1], [], []>} : vector<8x32xf32>, vector<32x8xf32>, vector<8x8xf32> -> vector<8x8xf32>
    %124 = vector.broadcast %122 : vector<8x1xf32> to vector<8x8xf32>
    %125 = vector.broadcast %92 : vector<1x8xf32> to vector<8x8xf32>
    %126 = arith.addf %124, %125 : vector<8x8xf32>
    %cst_53 = arith.constant 2.000000e+00 : f32
    %127 = vector.broadcast %cst_53 : f32 to vector<8x8xf32>
    %128 = arith.mulf %127, %123 : vector<8x8xf32>
    %129 = arith.subf %126, %128 : vector<8x8xf32>
    %cst_54 = arith.constant 0.000000e+00 : f32
    %130 = vector.broadcast %cst_54 : f32 to vector<8x8xf32>
    %131 = arith.maximumf %129, %130 : vector<8x8xf32>
    %132 = math.sqrt %131 : vector<8x8xf32>
    %cst_55 = arith.constant 0.00999999977 : f32
    %133 = vector.broadcast %cst_55 : f32 to vector<8x8xf32>
    %134 = arith.addf %132, %133 : vector<8x8xf32>
    %135 = tpu.reciprocal %134 {approx = true} : vector<8x8xf32> -> vector<8x8xf32>
    %136 = arith.mulf %135, %86 : vector<8x8xf32>
    %cst_56 = arith.constant dense<0.000000e+00> : vector<8x33xf32>
    %137 = tpu.matmul %136, %88, %cst_56 {dimension_numbers = #tpu.dot_dimension_numbers<[1], [0], [0], [1], [0, 0, 1, 1], [], []>} : vector<8x8xf32>, vector<8x33xf32>, vector<8x33xf32> -> vector<8x33xf32>
    %138 = vector.extract_strided_slice %137 {offsets = [0, 0], sizes = [8, 32], strides = [1, 1]} : vector<8x33xf32> to vector<8x32xf32>
    %139 = vector.extract_strided_slice %137 {offsets = [0, 32], sizes = [8, 1], strides = [1, 1]} : vector<8x33xf32> to vector<8x1xf32>
    %cst_57 = arith.constant 9.99999996E-13 : f32
    %140 = vector.broadcast %cst_57 : f32 to vector<8x1xf32>
    %141 = arith.maximumf %139, %140 : vector<8x1xf32>
    %142 = tpu.reciprocal %141 : vector<8x1xf32> -> vector<8x1xf32>
    %143 = vector.broadcast %142 : vector<8x1xf32> to vector<8x32xf32>
    %144 = arith.mulf %138, %143 : vector<8x32xf32>
    %145 = arith.mulf %144, %144 : vector<8x32xf32>
    %cst_58 = arith.constant dense<0.000000e+00> : vector<8xf32>
    %146 = vector.multi_reduction <add>, %145, %cst_58 [1] : vector<8x32xf32> to vector<8xf32>
    %147 = vector.shape_cast %146 : vector<8xf32> to vector<8x1xf32>
    %cst_59 = arith.constant dense<0.000000e+00> : vector<8x8xf32>
    %148 = tpu.matmul %144, %90, %cst_59 {dimension_numbers = #tpu.dot_dimension_numbers<[1], [0], [0], [1], [0, 0, 1, 1], [], []>} : vector<8x32xf32>, vector<32x8xf32>, vector<8x8xf32> -> vector<8x8xf32>
    %149 = vector.broadcast %147 : vector<8x1xf32> to vector<8x8xf32>
    %150 = vector.broadcast %92 : vector<1x8xf32> to vector<8x8xf32>
    %151 = arith.addf %149, %150 : vector<8x8xf32>
    %cst_60 = arith.constant 2.000000e+00 : f32
    %152 = vector.broadcast %cst_60 : f32 to vector<8x8xf32>
    %153 = arith.mulf %152, %148 : vector<8x8xf32>
    %154 = arith.subf %151, %153 : vector<8x8xf32>
    %cst_61 = arith.constant 0.000000e+00 : f32
    %155 = vector.broadcast %cst_61 : f32 to vector<8x8xf32>
    %156 = arith.maximumf %154, %155 : vector<8x8xf32>
    %157 = math.sqrt %156 : vector<8x8xf32>
    %cst_62 = arith.constant 0.00999999977 : f32
    %158 = vector.broadcast %cst_62 : f32 to vector<8x8xf32>
    %159 = arith.addf %157, %158 : vector<8x8xf32>
    %160 = tpu.reciprocal %159 {approx = true} : vector<8x8xf32> -> vector<8x8xf32>
    %161 = arith.mulf %160, %86 : vector<8x8xf32>
    %cst_63 = arith.constant dense<0.000000e+00> : vector<8x33xf32>
    %162 = tpu.matmul %161, %88, %cst_63 {dimension_numbers = #tpu.dot_dimension_numbers<[1], [0], [0], [1], [0, 0, 1, 1], [], []>} : vector<8x8xf32>, vector<8x33xf32>, vector<8x33xf32> -> vector<8x33xf32>
    %163 = vector.extract_strided_slice %162 {offsets = [0, 0], sizes = [8, 32], strides = [1, 1]} : vector<8x33xf32> to vector<8x32xf32>
    %164 = vector.extract_strided_slice %162 {offsets = [0, 32], sizes = [8, 1], strides = [1, 1]} : vector<8x33xf32> to vector<8x1xf32>
    %cst_64 = arith.constant 9.99999996E-13 : f32
    %165 = vector.broadcast %cst_64 : f32 to vector<8x1xf32>
    %166 = arith.maximumf %164, %165 : vector<8x1xf32>
    %167 = tpu.reciprocal %166 : vector<8x1xf32> -> vector<8x1xf32>
    %168 = vector.broadcast %167 : vector<8x1xf32> to vector<8x32xf32>
    %169 = arith.mulf %163, %168 : vector<8x32xf32>
    %c2 = arith.constant 2 : index
    %c0_65 = arith.constant 0 : index
    %c0_66 = arith.constant 0 : index
    %170 = vector.load %arg2[%c2, %c0_65, %c0_66] : memref<4x8x8xf32, #tpu.memory_space<vmem>>, vector<1x8x8xf32>
    %171 = vector.shape_cast %170 : vector<1x8x8xf32> to vector<8x8xf32>
    %c2_67 = arith.constant 2 : index
    %c0_68 = arith.constant 0 : index
    %c0_69 = arith.constant 0 : index
    %172 = vector.load %arg3[%c2_67, %c0_68, %c0_69] : memref<4x8x33xf32, #tpu.memory_space<vmem>>, vector<1x8x33xf32>
    %173 = vector.shape_cast %172 : vector<1x8x33xf32> to vector<8x33xf32>
    %c2_70 = arith.constant 2 : index
    %c0_71 = arith.constant 0 : index
    %c0_72 = arith.constant 0 : index
    %174 = vector.load %arg4[%c2_70, %c0_71, %c0_72] : memref<4x32x8xf32, #tpu.memory_space<vmem>>, vector<1x32x8xf32>
    %175 = vector.shape_cast %174 : vector<1x32x8xf32> to vector<32x8xf32>
    %c2_73 = arith.constant 2 : index
    %c0_74 = arith.constant 0 : index
    %c0_75 = arith.constant 0 : index
    %176 = vector.load %arg5[%c2_73, %c0_74, %c0_75] : memref<4x1x8xf32, #tpu.memory_space<vmem>>, vector<1x1x8xf32>
    %177 = vector.shape_cast %176 : vector<1x1x8xf32> to vector<1x8xf32>
    %cst_76 = arith.constant dense<0.000000e+00> : vector<8x33xf32>
    %178 = tpu.matmul %171, %173, %cst_76 {dimension_numbers = #tpu.dot_dimension_numbers<[1], [0], [0], [1], [0, 0, 1, 1], [], []>} : vector<8x8xf32>, vector<8x33xf32>, vector<8x33xf32> -> vector<8x33xf32>
    %179 = vector.extract_strided_slice %178 {offsets = [0, 0], sizes = [8, 32], strides = [1, 1]} : vector<8x33xf32> to vector<8x32xf32>
    %180 = arith.mulf %179, %179 : vector<8x32xf32>
    %cst_77 = arith.constant dense<0.000000e+00> : vector<8xf32>
    %181 = vector.multi_reduction <add>, %180, %cst_77 [1] : vector<8x32xf32> to vector<8xf32>
    %182 = vector.shape_cast %181 : vector<8xf32> to vector<8x1xf32>
    %cst_78 = arith.constant dense<0.000000e+00> : vector<8x8xf32>
    %183 = tpu.matmul %179, %175, %cst_78 {dimension_numbers = #tpu.dot_dimension_numbers<[1], [0], [0], [1], [0, 0, 1, 1], [], []>} : vector<8x32xf32>, vector<32x8xf32>, vector<8x8xf32> -> vector<8x8xf32>
    %184 = vector.broadcast %182 : vector<8x1xf32> to vector<8x8xf32>
    %185 = vector.broadcast %177 : vector<1x8xf32> to vector<8x8xf32>
    %186 = arith.addf %184, %185 : vector<8x8xf32>
    %cst_79 = arith.constant 2.000000e+00 : f32
    %187 = vector.broadcast %cst_79 : f32 to vector<8x8xf32>
    %188 = arith.mulf %187, %183 : vector<8x8xf32>
    %189 = arith.subf %186, %188 : vector<8x8xf32>
    %cst_80 = arith.constant 0.000000e+00 : f32
    %190 = vector.broadcast %cst_80 : f32 to vector<8x8xf32>
    %191 = arith.maximumf %189, %190 : vector<8x8xf32>
    %192 = math.sqrt %191 : vector<8x8xf32>
    %cst_81 = arith.constant 0.00999999977 : f32
    %193 = vector.broadcast %cst_81 : f32 to vector<8x8xf32>
    %194 = arith.addf %192, %193 : vector<8x8xf32>
    %195 = tpu.reciprocal %194 {approx = true} : vector<8x8xf32> -> vector<8x8xf32>
    %196 = arith.mulf %195, %171 : vector<8x8xf32>
    %cst_82 = arith.constant dense<0.000000e+00> : vector<8x33xf32>
    %197 = tpu.matmul %196, %173, %cst_82 {dimension_numbers = #tpu.dot_dimension_numbers<[1], [0], [0], [1], [0, 0, 1, 1], [], []>} : vector<8x8xf32>, vector<8x33xf32>, vector<8x33xf32> -> vector<8x33xf32>
    %198 = vector.extract_strided_slice %197 {offsets = [0, 0], sizes = [8, 32], strides = [1, 1]} : vector<8x33xf32> to vector<8x32xf32>
    %199 = vector.extract_strided_slice %197 {offsets = [0, 32], sizes = [8, 1], strides = [1, 1]} : vector<8x33xf32> to vector<8x1xf32>
    %cst_83 = arith.constant 9.99999996E-13 : f32
    %200 = vector.broadcast %cst_83 : f32 to vector<8x1xf32>
    %201 = arith.maximumf %199, %200 : vector<8x1xf32>
    %202 = tpu.reciprocal %201 : vector<8x1xf32> -> vector<8x1xf32>
    %203 = vector.broadcast %202 : vector<8x1xf32> to vector<8x32xf32>
    %204 = arith.mulf %198, %203 : vector<8x32xf32>
    %205 = arith.mulf %204, %204 : vector<8x32xf32>
    %cst_84 = arith.constant dense<0.000000e+00> : vector<8xf32>
    %206 = vector.multi_reduction <add>, %205, %cst_84 [1] : vector<8x32xf32> to vector<8xf32>
    %207 = vector.shape_cast %206 : vector<8xf32> to vector<8x1xf32>
    %cst_85 = arith.constant dense<0.000000e+00> : vector<8x8xf32>
    %208 = tpu.matmul %204, %175, %cst_85 {dimension_numbers = #tpu.dot_dimension_numbers<[1], [0], [0], [1], [0, 0, 1, 1], [], []>} : vector<8x32xf32>, vector<32x8xf32>, vector<8x8xf32> -> vector<8x8xf32>
    %209 = vector.broadcast %207 : vector<8x1xf32> to vector<8x8xf32>
    %210 = vector.broadcast %177 : vector<1x8xf32> to vector<8x8xf32>
    %211 = arith.addf %209, %210 : vector<8x8xf32>
    %cst_86 = arith.constant 2.000000e+00 : f32
    %212 = vector.broadcast %cst_86 : f32 to vector<8x8xf32>
    %213 = arith.mulf %212, %208 : vector<8x8xf32>
    %214 = arith.subf %211, %213 : vector<8x8xf32>
    %cst_87 = arith.constant 0.000000e+00 : f32
    %215 = vector.broadcast %cst_87 : f32 to vector<8x8xf32>
    %216 = arith.maximumf %214, %215 : vector<8x8xf32>
    %217 = math.sqrt %216 : vector<8x8xf32>
    %cst_88 = arith.constant 0.00999999977 : f32
    %218 = vector.broadcast %cst_88 : f32 to vector<8x8xf32>
    %219 = arith.addf %217, %218 : vector<8x8xf32>
    %220 = tpu.reciprocal %219 {approx = true} : vector<8x8xf32> -> vector<8x8xf32>
    %221 = arith.mulf %220, %171 : vector<8x8xf32>
    %cst_89 = arith.constant dense<0.000000e+00> : vector<8x33xf32>
    %222 = tpu.matmul %221, %173, %cst_89 {dimension_numbers = #tpu.dot_dimension_numbers<[1], [0], [0], [1], [0, 0, 1, 1], [], []>} : vector<8x8xf32>, vector<8x33xf32>, vector<8x33xf32> -> vector<8x33xf32>
    %223 = vector.extract_strided_slice %222 {offsets = [0, 0], sizes = [8, 32], strides = [1, 1]} : vector<8x33xf32> to vector<8x32xf32>
    %224 = vector.extract_strided_slice %222 {offsets = [0, 32], sizes = [8, 1], strides = [1, 1]} : vector<8x33xf32> to vector<8x1xf32>
    %cst_90 = arith.constant 9.99999996E-13 : f32
    %225 = vector.broadcast %cst_90 : f32 to vector<8x1xf32>
    %226 = arith.maximumf %224, %225 : vector<8x1xf32>
    %227 = tpu.reciprocal %226 : vector<8x1xf32> -> vector<8x1xf32>
    %228 = vector.broadcast %227 : vector<8x1xf32> to vector<8x32xf32>
    %229 = arith.mulf %223, %228 : vector<8x32xf32>
    %230 = arith.mulf %229, %229 : vector<8x32xf32>
    %cst_91 = arith.constant dense<0.000000e+00> : vector<8xf32>
    %231 = vector.multi_reduction <add>, %230, %cst_91 [1] : vector<8x32xf32> to vector<8xf32>
    %232 = vector.shape_cast %231 : vector<8xf32> to vector<8x1xf32>
    %cst_92 = arith.constant dense<0.000000e+00> : vector<8x8xf32>
    %233 = tpu.matmul %229, %175, %cst_92 {dimension_numbers = #tpu.dot_dimension_numbers<[1], [0], [0], [1], [0, 0, 1, 1], [], []>} : vector<8x32xf32>, vector<32x8xf32>, vector<8x8xf32> -> vector<8x8xf32>
    %234 = vector.broadcast %232 : vector<8x1xf32> to vector<8x8xf32>
    %235 = vector.broadcast %177 : vector<1x8xf32> to vector<8x8xf32>
    %236 = arith.addf %234, %235 : vector<8x8xf32>
    %cst_93 = arith.constant 2.000000e+00 : f32
    %237 = vector.broadcast %cst_93 : f32 to vector<8x8xf32>
    %238 = arith.mulf %237, %233 : vector<8x8xf32>
    %239 = arith.subf %236, %238 : vector<8x8xf32>
    %cst_94 = arith.constant 0.000000e+00 : f32
    %240 = vector.broadcast %cst_94 : f32 to vector<8x8xf32>
    %241 = arith.maximumf %239, %240 : vector<8x8xf32>
    %242 = math.sqrt %241 : vector<8x8xf32>
    %cst_95 = arith.constant 0.00999999977 : f32
    %243 = vector.broadcast %cst_95 : f32 to vector<8x8xf32>
    %244 = arith.addf %242, %243 : vector<8x8xf32>
    %245 = tpu.reciprocal %244 {approx = true} : vector<8x8xf32> -> vector<8x8xf32>
    %246 = arith.mulf %245, %171 : vector<8x8xf32>
    %cst_96 = arith.constant dense<0.000000e+00> : vector<8x33xf32>
    %247 = tpu.matmul %246, %173, %cst_96 {dimension_numbers = #tpu.dot_dimension_numbers<[1], [0], [0], [1], [0, 0, 1, 1], [], []>} : vector<8x8xf32>, vector<8x33xf32>, vector<8x33xf32> -> vector<8x33xf32>
    %248 = vector.extract_strided_slice %247 {offsets = [0, 0], sizes = [8, 32], strides = [1, 1]} : vector<8x33xf32> to vector<8x32xf32>
    %249 = vector.extract_strided_slice %247 {offsets = [0, 32], sizes = [8, 1], strides = [1, 1]} : vector<8x33xf32> to vector<8x1xf32>
    %cst_97 = arith.constant 9.99999996E-13 : f32
    %250 = vector.broadcast %cst_97 : f32 to vector<8x1xf32>
    %251 = arith.maximumf %249, %250 : vector<8x1xf32>
    %252 = tpu.reciprocal %251 : vector<8x1xf32> -> vector<8x1xf32>
    %253 = vector.broadcast %252 : vector<8x1xf32> to vector<8x32xf32>
    %254 = arith.mulf %248, %253 : vector<8x32xf32>
    %c3 = arith.constant 3 : index
    %c0_98 = arith.constant 0 : index
    %c0_99 = arith.constant 0 : index
    %255 = vector.load %arg2[%c3, %c0_98, %c0_99] : memref<4x8x8xf32, #tpu.memory_space<vmem>>, vector<1x8x8xf32>
    %256 = vector.shape_cast %255 : vector<1x8x8xf32> to vector<8x8xf32>
    %c3_100 = arith.constant 3 : index
    %c0_101 = arith.constant 0 : index
    %c0_102 = arith.constant 0 : index
    %257 = vector.load %arg3[%c3_100, %c0_101, %c0_102] : memref<4x8x33xf32, #tpu.memory_space<vmem>>, vector<1x8x33xf32>
    %258 = vector.shape_cast %257 : vector<1x8x33xf32> to vector<8x33xf32>
    %c3_103 = arith.constant 3 : index
    %c0_104 = arith.constant 0 : index
    %c0_105 = arith.constant 0 : index
    %259 = vector.load %arg4[%c3_103, %c0_104, %c0_105] : memref<4x32x8xf32, #tpu.memory_space<vmem>>, vector<1x32x8xf32>
    %260 = vector.shape_cast %259 : vector<1x32x8xf32> to vector<32x8xf32>
    %c3_106 = arith.constant 3 : index
    %c0_107 = arith.constant 0 : index
    %c0_108 = arith.constant 0 : index
    %261 = vector.load %arg5[%c3_106, %c0_107, %c0_108] : memref<4x1x8xf32, #tpu.memory_space<vmem>>, vector<1x1x8xf32>
    %262 = vector.shape_cast %261 : vector<1x1x8xf32> to vector<1x8xf32>
    %cst_109 = arith.constant dense<0.000000e+00> : vector<8x33xf32>
    %263 = tpu.matmul %256, %258, %cst_109 {dimension_numbers = #tpu.dot_dimension_numbers<[1], [0], [0], [1], [0, 0, 1, 1], [], []>} : vector<8x8xf32>, vector<8x33xf32>, vector<8x33xf32> -> vector<8x33xf32>
    %264 = vector.extract_strided_slice %263 {offsets = [0, 0], sizes = [8, 32], strides = [1, 1]} : vector<8x33xf32> to vector<8x32xf32>
    %265 = arith.mulf %264, %264 : vector<8x32xf32>
    %cst_110 = arith.constant dense<0.000000e+00> : vector<8xf32>
    %266 = vector.multi_reduction <add>, %265, %cst_110 [1] : vector<8x32xf32> to vector<8xf32>
    %267 = vector.shape_cast %266 : vector<8xf32> to vector<8x1xf32>
    %cst_111 = arith.constant dense<0.000000e+00> : vector<8x8xf32>
    %268 = tpu.matmul %264, %260, %cst_111 {dimension_numbers = #tpu.dot_dimension_numbers<[1], [0], [0], [1], [0, 0, 1, 1], [], []>} : vector<8x32xf32>, vector<32x8xf32>, vector<8x8xf32> -> vector<8x8xf32>
    %269 = vector.broadcast %267 : vector<8x1xf32> to vector<8x8xf32>
    %270 = vector.broadcast %262 : vector<1x8xf32> to vector<8x8xf32>
    %271 = arith.addf %269, %270 : vector<8x8xf32>
    %cst_112 = arith.constant 2.000000e+00 : f32
    %272 = vector.broadcast %cst_112 : f32 to vector<8x8xf32>
    %273 = arith.mulf %272, %268 : vector<8x8xf32>
    %274 = arith.subf %271, %273 : vector<8x8xf32>
    %cst_113 = arith.constant 0.000000e+00 : f32
    %275 = vector.broadcast %cst_113 : f32 to vector<8x8xf32>
    %276 = arith.maximumf %274, %275 : vector<8x8xf32>
    %277 = math.sqrt %276 : vector<8x8xf32>
    %cst_114 = arith.constant 0.00999999977 : f32
    %278 = vector.broadcast %cst_114 : f32 to vector<8x8xf32>
    %279 = arith.addf %277, %278 : vector<8x8xf32>
    %280 = tpu.reciprocal %279 {approx = true} : vector<8x8xf32> -> vector<8x8xf32>
    %281 = arith.mulf %280, %256 : vector<8x8xf32>
    %cst_115 = arith.constant dense<0.000000e+00> : vector<8x33xf32>
    %282 = tpu.matmul %281, %258, %cst_115 {dimension_numbers = #tpu.dot_dimension_numbers<[1], [0], [0], [1], [0, 0, 1, 1], [], []>} : vector<8x8xf32>, vector<8x33xf32>, vector<8x33xf32> -> vector<8x33xf32>
    %283 = vector.extract_strided_slice %282 {offsets = [0, 0], sizes = [8, 32], strides = [1, 1]} : vector<8x33xf32> to vector<8x32xf32>
    %284 = vector.extract_strided_slice %282 {offsets = [0, 32], sizes = [8, 1], strides = [1, 1]} : vector<8x33xf32> to vector<8x1xf32>
    %cst_116 = arith.constant 9.99999996E-13 : f32
    %285 = vector.broadcast %cst_116 : f32 to vector<8x1xf32>
    %286 = arith.maximumf %284, %285 : vector<8x1xf32>
    %287 = tpu.reciprocal %286 : vector<8x1xf32> -> vector<8x1xf32>
    %288 = vector.broadcast %287 : vector<8x1xf32> to vector<8x32xf32>
    %289 = arith.mulf %283, %288 : vector<8x32xf32>
    %290 = arith.mulf %289, %289 : vector<8x32xf32>
    %cst_117 = arith.constant dense<0.000000e+00> : vector<8xf32>
    %291 = vector.multi_reduction <add>, %290, %cst_117 [1] : vector<8x32xf32> to vector<8xf32>
    %292 = vector.shape_cast %291 : vector<8xf32> to vector<8x1xf32>
    %cst_118 = arith.constant dense<0.000000e+00> : vector<8x8xf32>
    %293 = tpu.matmul %289, %260, %cst_118 {dimension_numbers = #tpu.dot_dimension_numbers<[1], [0], [0], [1], [0, 0, 1, 1], [], []>} : vector<8x32xf32>, vector<32x8xf32>, vector<8x8xf32> -> vector<8x8xf32>
    %294 = vector.broadcast %292 : vector<8x1xf32> to vector<8x8xf32>
    %295 = vector.broadcast %262 : vector<1x8xf32> to vector<8x8xf32>
    %296 = arith.addf %294, %295 : vector<8x8xf32>
    %cst_119 = arith.constant 2.000000e+00 : f32
    %297 = vector.broadcast %cst_119 : f32 to vector<8x8xf32>
    %298 = arith.mulf %297, %293 : vector<8x8xf32>
    %299 = arith.subf %296, %298 : vector<8x8xf32>
    %cst_120 = arith.constant 0.000000e+00 : f32
    %300 = vector.broadcast %cst_120 : f32 to vector<8x8xf32>
    %301 = arith.maximumf %299, %300 : vector<8x8xf32>
    %302 = math.sqrt %301 : vector<8x8xf32>
    %cst_121 = arith.constant 0.00999999977 : f32
    %303 = vector.broadcast %cst_121 : f32 to vector<8x8xf32>
    %304 = arith.addf %302, %303 : vector<8x8xf32>
    %305 = tpu.reciprocal %304 {approx = true} : vector<8x8xf32> -> vector<8x8xf32>
    %306 = arith.mulf %305, %256 : vector<8x8xf32>
    %cst_122 = arith.constant dense<0.000000e+00> : vector<8x33xf32>
    %307 = tpu.matmul %306, %258, %cst_122 {dimension_numbers = #tpu.dot_dimension_numbers<[1], [0], [0], [1], [0, 0, 1, 1], [], []>} : vector<8x8xf32>, vector<8x33xf32>, vector<8x33xf32> -> vector<8x33xf32>
    %308 = vector.extract_strided_slice %307 {offsets = [0, 0], sizes = [8, 32], strides = [1, 1]} : vector<8x33xf32> to vector<8x32xf32>
    %309 = vector.extract_strided_slice %307 {offsets = [0, 32], sizes = [8, 1], strides = [1, 1]} : vector<8x33xf32> to vector<8x1xf32>
    %cst_123 = arith.constant 9.99999996E-13 : f32
    %310 = vector.broadcast %cst_123 : f32 to vector<8x1xf32>
    %311 = arith.maximumf %309, %310 : vector<8x1xf32>
    %312 = tpu.reciprocal %311 : vector<8x1xf32> -> vector<8x1xf32>
    %313 = vector.broadcast %312 : vector<8x1xf32> to vector<8x32xf32>
    %314 = arith.mulf %308, %313 : vector<8x32xf32>
    %315 = arith.mulf %314, %314 : vector<8x32xf32>
    %cst_124 = arith.constant dense<0.000000e+00> : vector<8xf32>
    %316 = vector.multi_reduction <add>, %315, %cst_124 [1] : vector<8x32xf32> to vector<8xf32>
    %317 = vector.shape_cast %316 : vector<8xf32> to vector<8x1xf32>
    %cst_125 = arith.constant dense<0.000000e+00> : vector<8x8xf32>
    %318 = tpu.matmul %314, %260, %cst_125 {dimension_numbers = #tpu.dot_dimension_numbers<[1], [0], [0], [1], [0, 0, 1, 1], [], []>} : vector<8x32xf32>, vector<32x8xf32>, vector<8x8xf32> -> vector<8x8xf32>
    %319 = vector.broadcast %317 : vector<8x1xf32> to vector<8x8xf32>
    %320 = vector.broadcast %262 : vector<1x8xf32> to vector<8x8xf32>
    %321 = arith.addf %319, %320 : vector<8x8xf32>
    %cst_126 = arith.constant 2.000000e+00 : f32
    %322 = vector.broadcast %cst_126 : f32 to vector<8x8xf32>
    %323 = arith.mulf %322, %318 : vector<8x8xf32>
    %324 = arith.subf %321, %323 : vector<8x8xf32>
    %cst_127 = arith.constant 0.000000e+00 : f32
    %325 = vector.broadcast %cst_127 : f32 to vector<8x8xf32>
    %326 = arith.maximumf %324, %325 : vector<8x8xf32>
    %327 = math.sqrt %326 : vector<8x8xf32>
    %cst_128 = arith.constant 0.00999999977 : f32
    %328 = vector.broadcast %cst_128 : f32 to vector<8x8xf32>
    %329 = arith.addf %327, %328 : vector<8x8xf32>
    %330 = tpu.reciprocal %329 {approx = true} : vector<8x8xf32> -> vector<8x8xf32>
    %331 = arith.mulf %330, %256 : vector<8x8xf32>
    %cst_129 = arith.constant dense<0.000000e+00> : vector<8x33xf32>
    %332 = tpu.matmul %331, %258, %cst_129 {dimension_numbers = #tpu.dot_dimension_numbers<[1], [0], [0], [1], [0, 0, 1, 1], [], []>} : vector<8x8xf32>, vector<8x33xf32>, vector<8x33xf32> -> vector<8x33xf32>
    %333 = vector.extract_strided_slice %332 {offsets = [0, 0], sizes = [8, 32], strides = [1, 1]} : vector<8x33xf32> to vector<8x32xf32>
    %334 = vector.extract_strided_slice %332 {offsets = [0, 32], sizes = [8, 1], strides = [1, 1]} : vector<8x33xf32> to vector<8x1xf32>
    %cst_130 = arith.constant 9.99999996E-13 : f32
    %335 = vector.broadcast %cst_130 : f32 to vector<8x1xf32>
    %336 = arith.maximumf %334, %335 : vector<8x1xf32>
    %337 = tpu.reciprocal %336 : vector<8x1xf32> -> vector<8x1xf32>
    %338 = vector.broadcast %337 : vector<8x1xf32> to vector<8x32xf32>
    %339 = arith.mulf %333, %338 : vector<8x32xf32>
    %340 = tpu.concatenate %84, %169, %254, %339 in 1 : vector<8x32xf32>, vector<8x32xf32>, vector<8x32xf32>, vector<8x32xf32> -> vector<8x128xf32>
    %c0_131 = arith.constant 0 : index
    %c0_132 = arith.constant 0 : index
    %c0_133 = arith.constant 0 : index
    %341 = vector.load %arg6[%c0_131, %c0_132, %c0_133] : memref<1x8x128xf32, #tpu.memory_space<vmem>>, vector<1x8x128xf32>
    %342 = vector.shape_cast %341 : vector<1x8x128xf32> to vector<8x128xf32>
    %343 = vector.shape_cast %340 : vector<8x128xf32> to vector<1x8x128xf32>
    tpu.vector_store %arg6[%c0_131, %c0_132, %c0_133], %343 {strides = array<i32>} : memref<1x8x128xf32, #tpu.memory_space<vmem>>, vector<1x8x128xf32>,
    return
  }
  func.func @transform_0(%arg0: i32, %arg1: i32) -> (i32, i32, i32) {
    %c0_i32 = arith.constant 0 : i32
    %c0_i32_0 = arith.constant 0 : i32
    return %arg0, %arg1, %c0_i32 : i32, i32, i32
  }
  func.func @transform_1(%arg0: i32, %arg1: i32) -> (i32, i32, i32) {
    %c0_i32 = arith.constant 0 : i32
    %c0_i32_0 = arith.constant 0 : i32
    %c0_i32_1 = arith.constant 0 : i32
    return %arg0, %c0_i32, %c0_i32_0 : i32, i32, i32
  }
  func.func @transform_2(%arg0: i32, %arg1: i32) -> (i32, i32, i32) {
    %c0_i32 = arith.constant 0 : i32
    %c0_i32_0 = arith.constant 0 : i32
    %c0_i32_1 = arith.constant 0 : i32
    return %arg0, %c0_i32, %c0_i32_0 : i32, i32, i32
  }
  func.func @transform_3(%arg0: i32, %arg1: i32) -> (i32, i32, i32) {
    %c0_i32 = arith.constant 0 : i32
    %c0_i32_0 = arith.constant 0 : i32
    %c0_i32_1 = arith.constant 0 : i32
    return %arg0, %c0_i32, %c0_i32_0 : i32, i32, i32
  }
  func.func @transform_4(%arg0: i32, %arg1: i32) -> (i32, i32, i32) {
    %c0_i32 = arith.constant 0 : i32
    %c0_i32_0 = arith.constant 0 : i32
    return %arg0, %arg1, %c0_i32 : i32, i32, i32
  }
}

</mosaic_0001>

<llo_original>
// kernel: tpu_custom_call.1
$region0: #{tpu_custom_call.1}
  #allocation0 [shape = 'u32[]', space=smem, size = 0x4, offset = 0x4, fixed_abs, tag = 'smem constant byte address 0x4 - core index']
  #allocation1 [shape = 'u32[144,128]{1,0:T(1,128)}', space=vmem, size = 0x12000, scoped, tag = 'internal scratch']
  %s0 = inlined_call_operand.vmem [shape: f32[4,8,8], index: 0, kind: input, shape index: {}]
  %s1 = inlined_call_operand.vmem [shape: f32[4,8,33], index: 1, kind: input, shape index: {}]
  %s2 = inlined_call_operand.vmem [shape: f32[4,32,8], index: 2, kind: input, shape index: {}]
  %s3 = inlined_call_operand.vmem [shape: f32[4,1,8], index: 3, kind: input, shape index: {}]
  %s4 = inlined_call_operand.hbm [shape: f32[1,8,128], index: 4, kind: output, shape index: {}]
  %s5 = sld [smem:[#allocation0]]
  $region26: #{tpu_custom_call.1} parent=0
    _
  %s7 = ssub.s32 1, %s5
  %s8 = scalar_select 0, %s7, %s5
  $region1: #{tpu_custom_call.1} parent=0
    #allocation2 [shape = 'u8[4096]{0}', space=vmem, size = 0x1000, scoped, tag = 'output window, operand 0, single buffered']
    #allocation3 [shape = 's32[1]{0}', space=sflag, size = 0x4, scoped, tag = 'scoped memory for tpu_custom_call.1']
    %9 = vsyncpa [#allocation3], 0
    // Predicated region
    $region2: #{tpu_custom_call.1} parent=1 // pred_check
      _
    $region3: #{tpu_custom_call.1} parent=1 // pred_check_branch
      %11 = sbr.rel (0) target = $region5
    $region4: #{tpu_custom_call.1} parent=1 // pred_region
      _
    $region5: #{tpu_custom_call.1} parent=1 // pred_fallthru
      _
    // Predicated region
    $region6: #{tpu_custom_call.1} parent=1 // pred_check
      _
    $region7: #{tpu_custom_call.1} parent=1 // pred_check_branch
      %13 = sbr.rel (0) target = $region9
    $region8: #{tpu_custom_call.1} parent=1 // pred_region
      _
    $region9: #{tpu_custom_call.1} parent=1 // pred_fallthru
      _
    // Predicated region
    $region10: #{tpu_custom_call.1} parent=1 // pred_check
      _
    $region11: #{tpu_custom_call.1} parent=1 // pred_check_branch
      %15 = sbr.rel (0) target = $region13
    $region12: #{tpu_custom_call.1} parent=1 // pred_region
      _
    $region13: #{tpu_custom_call.1} parent=1 // pred_fallthru
      _
    // Predicated region
    $region14: #{tpu_custom_call.1} parent=1 // pred_check
      _
    $region15: #{tpu_custom_call.1} parent=1 // pred_check_branch
      %17 = sbr.rel (0) target = $region17
    $region16: #{tpu_custom_call.1} parent=1 // pred_region
      _
    $region17: #{tpu_custom_call.1} parent=1 // pred_fallthru
      _
    %v18 = vld [vmem:[%s0] sm:$0xff]
    %v19 = vld [vmem:[%s1] sm:$0xff]
    %v20 = vld [vmem:[%s2] sm:$0xff]
    %v21 = vld [vmem:[%s2 + $0x8] sm:$0xff]
    %v22 = vld [vmem:[%s2 + $0x10] sm:$0xff]
    %v23 = vld [vmem:[%s2 + $0x18] sm:$0xff]
    %v24 = vld [vmem:[%s3] sm:$0x1]
    %vm25 = vcmask 64512
    %v27 = vsel %vm25, %v18, 0
    %29 = vmatprep.subr.mxu0 0.0
    %30 = vmatpush1.msra.mxu0 %v19
    %31 = vmatprep.subr.mxu0 0.0
    %32 = vmatpush1.msra.mxu0 0.0
    %33 = vmatprep.subr.mxu0 0.0
    %34 = vmatpush1.msra.mxu0 0.0
    %35 = vmatprep.subr.mxu0 0.0
    %36 = vmatpush1.msra.mxu0 0.0
    %37 = vmatprep.subr.mxu0 0.0
    %38 = vmatpush1.msra.mxu0 0.0
    %39 = vmatprep.subr.mxu0 0.0
    %40 = vmatpush1.msra.mxu0 0.0
    %41 = vmatprep.subr.mxu0 0.0
    %42 = vmatpush1.msra.mxu0 0.0
    %43 = vmatprep.subr.mxu0 0.0
    %44 = vmatpush1.msra.mxu0 0.0
    %45 = vmatprep.subr.mxu0 0.0
    %46 = vmatpush1.msra.mxu0 0.0
    %47 = vmatprep.subr.mxu0 0.0
    %48 = vmatpush1.msra.mxu0 0.0
    %49 = vmatprep.subr.mxu0 0.0
    %50 = vmatpush1.msra.mxu0 0.0
    %51 = vmatprep.subr.mxu0 0.0
    %52 = vmatpush1.msra.mxu0 0.0
    %53 = vmatprep.subr.mxu0 0.0
    %54 = vmatpush1.msra.mxu0 0.0
    %55 = vmatprep.subr.mxu0 0.0
    %56 = vmatpush1.msra.mxu0 0.0
    %57 = vmatprep.subr.mxu0 0.0
    %58 = vmatpush1.msra.mxu0 0.0
    %59 = vmatprep.subr.mxu0 0.0
    %60 = vmatpush1.msra.mxu0 0.0
    %61 = vmatprep.subr.mxu0 0.0
    %62 = vmatpush1.msra.mxu0 0.0
    %63 = vmatprep.subr.mxu0 0.0
    %64 = vmatpush1.msra.mxu0 0.0
    %65 = vmatprep.subr.mxu0 0.0
    %66 = vmatpush1.msra.mxu0 0.0
    %67 = vmatprep.subr.mxu0 0.0
    %68 = vmatpush1.msra.mxu0 0.0
    %69 = vmatprep.subr.mxu0 0.0
    %70 = vmatpush1.msra.mxu0 0.0
    %71 = vmatprep.subr.mxu0 0.0
    %72 = vmatpush1.msra.mxu0 0.0
    %73 = vmatprep.subr.mxu0 0.0
    %74 = vmatpush1.msra.mxu0 0.0
    %75 = vmatprep.subr.mxu0 0.0
    %76 = vmatpush1.msra.mxu0 0.0
    %77 = vmatprep.subr.mxu0 0.0
    %78 = vmatpush1.msra.mxu0 0.0
    %79 = vmatprep.subr.mxu0 0.0
    %80 = vmatpush1.msra.mxu0 0.0
    %81 = vmatprep.subr.mxu0 0.0
    %82 = vmatpush1.msra.mxu0 0.0
    %83 = vmatprep.subr.mxu0 0.0
    %84 = vmatpush1.msra.mxu0 0.0
    %85 = vmatprep.subr.mxu0 0.0
    %86 = vmatpush1.msra.mxu0 0.0
    %87 = vmatprep.subr.mxu0 0.0
    %88 = vmatpush1.msra.mxu0 0.0
    %89 = vmatprep.subr.mxu0 0.0
    %90 = vmatpush1.msra.mxu0 0.0
    %91 = vmatprep.subr.mxu0 0.0
    %92 = vmatpush1.msra.mxu0 0.0
    %93 = vmatprep.mubr.f32.mxu0 0.0
    %94 = vmatmul.mubr.f32.gmra.mrb[0].mxu0 %v27
    %v95 = vpop.f32.mrb[0].mxu0
    %v96 = vadd.f32 0.0, %v95
    %v97 = vpop.f32.mrb[0].mxu0
    %98 = vdwg.mxu0
    %v99 = vmul.f32 %v96, %v96
    %vm100 = vcmask 261120
    %v101 = vsel %vm100, %v99, 0.0
    %102 = vadd.xlane.f32.xlu0 %v101
    %v103 = vpop.xlane.xlu0 %102
    %v105 = vsel %vm100, %v96, 0
    %107 = vmatprep.subr.mxu0 0.0
    %108 = vmatpush1.msra.mxu0 %v20
    %109 = vmatprep.subr.mxu0 0.0
    %110 = vmatpush1.msra.mxu0 %v21
    %111 = vmatprep.subr.mxu0 0.0
    %112 = vmatpush1.msra.mxu0 %v22
    %113 = vmatprep.subr.mxu0 0.0
    %114 = vmatpush1.msra.mxu0 %v23
    %115 = vmatprep.subr.mxu0 0.0
    %116 = vmatpush1.msra.mxu0 0.0
    %117 = vmatprep.subr.mxu0 0.0
    %118 = vmatpush1.msra.mxu0 0.0
    %119 = vmatprep.subr.mxu0 0.0
    %120 = vmatpush1.msra.mxu0 0.0
    %121 = vmatprep.subr.mxu0 0.0
    %122 = vmatpush1.msra.mxu0 0.0
    %123 = vmatprep.subr.mxu0 0.0
    %124 = vmatpush1.msra.mxu0 0.0
    %125 = vmatprep.subr.mxu0 0.0
    %126 = vmatpush1.msra.mxu0 0.0
    %127 = vmatprep.subr.mxu0 0.0
    %128 = vmatpush1.msra.mxu0 0.0
    %129 = vmatprep.subr.mxu0 0.0
    %130 = vmatpush1.msra.mxu0 0.0
    %131 = vmatprep.subr.mxu0 0.0
    %132 = vmatpush1.msra.mxu0 0.0
    %133 = vmatprep.subr.mxu0 0.0
    %134 = vmatpush1.msra.mxu0 0.0
    %135 = vmatprep.subr.mxu0 0.0
    %136 = vmatpush1.msra.mxu0 0.0
    %137 = vmatprep.subr.mxu0 0.0
    %138 = vmatpush1.msra.mxu0 0.0
    %139 = vmatprep.subr.mxu0 0.0
    %140 = vmatpush1.msra.mxu0 0.0
    %141 = vmatprep.subr.mxu0 0.0
    %142 = vmatpush1.msra.mxu0 0.0
    %143 = vmatprep.subr.mxu0 0.0
    %144 = vmatpush1.msra.mxu0 0.0
    %145 = vmatprep.subr.mxu0 0.0
    %146 = vmatpush1.msra.mxu0 0.0
    %147 = vmatprep.subr.mxu0 0.0
    %148 = vmatpush1.msra.mxu0 0.0
    %149 = vmatprep.subr.mxu0 0.0
    %150 = vmatpush1.msra.mxu0 0.0
    %151 = vmatprep.subr.mxu0 0.0
    %152 = vmatpush1.msra.mxu0 0.0
    %153 = vmatprep.subr.mxu0 0.0
    %154 = vmatpush1.msra.mxu0 0.0
    %155 = vmatprep.subr.mxu0 0.0
    %156 = vmatpush1.msra.mxu0 0.0
    %157 = vmatprep.subr.mxu0 0.0
    %158 = vmatpush1.msra.mxu0 0.0
    %159 = vmatprep.subr.mxu0 0.0
    %160 = vmatpush1.msra.mxu0 0.0
    %161 = vmatprep.subr.mxu0 0.0
    %162 = vmatpush1.msra.mxu0 0.0
    %163 = vmatprep.subr.mxu0 0.0
    %164 = vmatpush1.msra.mxu0 0.0
    %165 = vmatprep.subr.mxu0 0.0
    %166 = vmatpush1.msra.mxu0 0.0
    %167 = vmatprep.subr.mxu0 0.0
    %168 = vmatpush1.msra.mxu0 0.0
    %169 = vmatprep.subr.mxu0 0.0
    %170 = vmatpush1.msra.mxu0 0.0
    %171 = vmatprep.mubr.f32.mxu0 0.0
    %172 = vmatmul.mubr.f32.gmra.mrb[0].mxu0 %v105
    %v173 = vpop.f32.mrb[0].mxu0
    %v174 = vadd.f32 0.0, %v173
    %v175 = vpop.f32.mrb[0].mxu0
    %176 = vdwg.mxu0
    %v178 = vlaneseq
    %v179 = vshrl.u32 %v178, 7
    %v180 = vsub.s32 0, %v179
    %v181 = vrot.slane %v24, %v180
    %v183 = vadd.f32 %v103, %v181
    %v184 = vmul.f32 %v174, 2.0
    %v185 = vsub.f32 %v183, %v184
    %v186 = vmax.f32 %v185, 0.0
    %v187 = vrsqrt.pop %v186
    %v188 = vmul.f32 %v186, %v187
    %vm189 = vcmp.eq.f32.partialorder %v186, inf
    %v190 = vsel %vm189, %v186, %v188
    %vm191 = vcmp.eq.f32.partialorder %v186, 0.0
    %v192 = vand.u32 %v186, 2147483648
    %v193 = vsel %vm191, %v192, %v190
    %v194 = vadd.f32 %v193, 0.01
    %v195 = vrcp.pop %v194
    %v196 = vmul.f32 %v195, %v18
    %v198 = vsel %vm25, %v196, 0
    %200 = vmatprep.subr.mxu0 0.0
    %201 = vmatpush1.msra.mxu0 %v19
    %202 = vmatprep.subr.mxu0 0.0
    %203 = vmatpush1.msra.mxu0 0.0
    %204 = vmatprep.subr.mxu0 0.0
    %205 = vmatpush1.msra.mxu0 0.0
    %206 = vmatprep.subr.mxu0 0.0
    %207 = vmatpush1.msra.mxu0 0.0
    %208 = vmatprep.subr.mxu0 0.0
    %209 = vmatpush1.msra.mxu0 0.0
    %210 = vmatprep.subr.mxu0 0.0
    %211 = vmatpush1.msra.mxu0 0.0
    %212 = vmatprep.subr.mxu0 0.0
    %213 = vmatpush1.msra.mxu0 0.0
    %214 = vmatprep.subr.mxu0 0.0
    %215 = vmatpush1.msra.mxu0 0.0
    %216 = vmatprep.subr.mxu0 0.0
    %217 = vmatpush1.msra.mxu0 0.0
    %218 = vmatprep.subr.mxu0 0.0
    %219 = vmatpush1.msra.mxu0 0.0
    %220 = vmatprep.subr.mxu0 0.0
    %221 = vmatpush1.msra.mxu0 0.0
    %222 = vmatprep.subr.mxu0 0.0
    %223 = vmatpush1.msra.mxu0 0.0
    %224 = vmatprep.subr.mxu0 0.0
    %225 = vmatpush1.msra.mxu0 0.0
    %226 = vmatprep.subr.mxu0 0.0
    %227 = vmatpush1.msra.mxu0 0.0
    %228 = vmatprep.subr.mxu0 0.0
    %229 = vmatpush1.msra.mxu0 0.0
    %230 = vmatprep.subr.mxu0 0.0
    %231 = vmatpush1.msra.mxu0 0.0
    %232 = vmatprep.subr.mxu0 0.0
    %233 = vmatpush1.msra.mxu0 0.0
    %234 = vmatprep.subr.mxu0 0.0
    %235 = vmatpush1.msra.mxu0 0.0
    %236 = vmatprep.subr.mxu0 0.0
    %237 = vmatpush1.msra.mxu0 0.0
    %238 = vmatprep.subr.mxu0 0.0
    %239 = vmatpush1.msra.mxu0 0.0
    %240 = vmatprep.subr.mxu0 0.0
    %241 = vmatpush1.msra.mxu0 0.0
    %242 = vmatprep.subr.mxu0 0.0
    %243 = vmatpush1.msra.mxu0 0.0
    %244 = vmatprep.subr.mxu0 0.0
    %245 = vmatpush1.msra.mxu0 0.0
    %246 = vmatprep.subr.mxu0 0.0
    %247 = vmatpush1.msra.mxu0 0.0
    %248 = vmatprep.subr.mxu0 0.0
    %249 = vmatpush1.msra.mxu0 0.0
    %250 = vmatprep.subr.mxu0 0.0
    %251 = vmatpush1.msra.mxu0 0.0
    %252 = vmatprep.subr.mxu0 0.0
    %253 = vmatpush1.msra.mxu0 0.0
    %254 = vmatprep.subr.mxu0 0.0
    %255 = vmatpush1.msra.mxu0 0.0
    %256 = vmatprep.subr.mxu0 0.0
    %257 = vmatpush1.msra.mxu0 0.0
    %258 = vmatprep.subr.mxu0 0.0
    %259 = vmatpush1.msra.mxu0 0.0
    %260 = vmatprep.subr.mxu0 0.0
    %261 = vmatpush1.msra.mxu0 0.0
    %262 = vmatprep.subr.mxu0 0.0
    %263 = vmatpush1.msra.mxu0 0.0
    %264 = vmatprep.mubr.f32.mxu0 0.0
    %265 = vmatmul.mubr.f32.gmra.mrb[0].mxu0 %v198
    %v266 = vpop.f32.mrb[0].mxu0
    %v267 = vadd.f32 0.0, %v266
    %v268 = vpop.f32.mrb[0].mxu0
    %269 = vdwg.mxu0
    %v270 = vmax.f32 %v267, 1e-12
    %v271 = vrcp.pop %v270
    %273 = vset.pattern.permute.xlu0 32
    %274 = vperm.xlu0 %273, %v271
    %v275 = vpop.permute.xlu0 %274
    %v277 = vmul.f32 %v267, %v275
    %v278 = vmul.f32 %v277, %v277
    %v279 = vsel %vm100, %v278, 0.0
    %280 = vadd.xlane.f32.xlu0 %v279
    %v281 = vpop.xlane.xlu0 %280
    %v283 = vsel %vm100, %v277, 0
    %285 = vmatprep.subr.mxu0 0.0
    %286 = vmatpush1.msra.mxu0 %v20
    %287 = vmatprep.subr.mxu0 0.0
    %288 = vmatpush1.msra.mxu0 %v21
    %289 = vmatprep.subr.mxu0 0.0
    %290 = vmatpush1.msra.mxu0 %v22
    %291 = vmatprep.subr.mxu0 0.0
    %292 = vmatpush1.msra.mxu0 %v23
    %293 = vmatprep.subr.mxu0 0.0
    %294 = vmatpush1.msra.mxu0 0.0
    %295 = vmatprep.subr.mxu0 0.0
    %296 = vmatpush1.msra.mxu0 0.0
    %297 = vmatprep.subr.mxu0 0.0
    %298 = vmatpush1.msra.mxu0 0.0
    %299 = vmatprep.subr.mxu0 0.0
    %300 = vmatpush1.msra.mxu0 0.0
    %301 = vmatprep.subr.mxu0 0.0
    %302 = vmatpush1.msra.mxu0 0.0
    %303 = vmatprep.subr.mxu0 0.0
    %304 = vmatpush1.msra.mxu0 0.0
    %305 = vmatprep.subr.mxu0 0.0
    %306 = vmatpush1.msra.mxu0 0.0
    %307 = vmatprep.subr.mxu0 0.0
    %308 = vmatpush1.msra.mxu0 0.0
    %309 = vmatprep.subr.mxu0 0.0
    %310 = vmatpush1.msra.mxu0 0.0
    %311 = vmatprep.subr.mxu0 0.0
    %312 = vmatpush1.msra.mxu0 0.0
    %313 = vmatprep.subr.mxu0 0.0
    %314 = vmatpush1.msra.mxu0 0.0
    %315 = vmatprep.subr.mxu0 0.0
    %316 = vmatpush1.msra.mxu0 0.0
    %317 = vmatprep.subr.mxu0 0.0
    %318 = vmatpush1.msra.mxu0 0.0
    %319 = vmatprep.subr.mxu0 0.0
    %320 = vmatpush1.msra.mxu0 0.0
    %321 = vmatprep.subr.mxu0 0.0
    %322 = vmatpush1.msra.mxu0 0.0
    %323 = vmatprep.subr.mxu0 0.0
    %324 = vmatpush1.msra.mxu0 0.0
    %325 = vmatprep.subr.mxu0 0.0
    %326 = vmatpush1.msra.mxu0 0.0
    %327 = vmatprep.subr.mxu0 0.0
    %328 = vmatpush1.msra.mxu0 0.0
    %329 = vmatprep.subr.mxu0 0.0
    %330 = vmatpush1.msra.mxu0 0.0
    %331 = vmatprep.subr.mxu0 0.0
    %332 = vmatpush1.msra.mxu0 0.0
    %333 = vmatprep.subr.mxu0 0.0
    %334 = vmatpush1.msra.mxu0 0.0
    %335 = vmatprep.subr.mxu0 0.0
    %336 = vmatpush1.msra.mxu0 0.0
    %337 = vmatprep.subr.mxu0 0.0
    %338 = vmatpush1.msra.mxu0 0.0
    %339 = vmatprep.subr.mxu0 0.0
    %340 = vmatpush1.msra.mxu0 0.0
    %341 = vmatprep.subr.mxu0 0.0
    %342 = vmatpush1.msra.mxu0 0.0
    %343 = vmatprep.subr.mxu0 0.0
    %344 = vmatpush1.msra.mxu0 0.0
    %345 = vmatprep.subr.mxu0 0.0
    %346 = vmatpush1.msra.mxu0 0.0
    %347 = vmatprep.subr.mxu0 0.0
    %348 = vmatpush1.msra.mxu0 0.0
    %349 = vmatprep.mubr.f32.mxu0 0.0
    %350 = vmatmul.mubr.f32.gmra.mrb[0].mxu0 %v283
    %v351 = vpop.f32.mrb[0].mxu0
    %v352 = vadd.f32 0.0, %v351
    %v353 = vpop.f32.mrb[0].mxu0
    %354 = vdwg.mxu0
    %v355 = vadd.f32 %v281, %v181
    %v356 = vmul.f32 %v352, 2.0
    %v357 = vsub.f32 %v355, %v356
    %v358 = vmax.f32 %v357, 0.0
    %v359 = vrsqrt.pop %v358
    %v360 = vmul.f32 %v358, %v359
    %vm361 = vcmp.eq.f32.partialorder %v358, inf
    %v362 = vsel %vm361, %v358, %v360
    %vm363 = vcmp.eq.f32.partialorder %v358, 0.0
    %v364 = vand.u32 %v358, 2147483648
    %v365 = vsel %vm363, %v364, %v362
    %v366 = vadd.f32 %v365, 0.01
    %v367 = vrcp.pop %v366
    %v368 = vmul.f32 %v367, %v18
    %v370 = vsel %vm25, %v368, 0
    %372 = vmatprep.subr.mxu0 0.0
    %373 = vmatpush1.msra.mxu0 %v19
    %374 = vmatprep.subr.mxu0 0.0
    %375 = vmatpush1.msra.mxu0 0.0
    %376 = vmatprep.subr.mxu0 0.0
    %377 = vmatpush1.msra.mxu0 0.0
    %378 = vmatprep.subr.mxu0 0.0
    %379 = vmatpush1.msra.mxu0 0.0
    %380 = vmatprep.subr.mxu0 0.0
    %381 = vmatpush1.msra.mxu0 0.0
    %382 = vmatprep.subr.mxu0 0.0
    %383 = vmatpush1.msra.mxu0 0.0
    %384 = vmatprep.subr.mxu0 0.0
    %385 = vmatpush1.msra.mxu0 0.0
    %386 = vmatprep.subr.mxu0 0.0
    %387 = vmatpush1.msra.mxu0 0.0
    %388 = vmatprep.subr.mxu0 0.0
    %389 = vmatpush1.msra.mxu0 0.0
    %390 = vmatprep.subr.mxu0 0.0
    %391 = vmatpush1.msra.mxu0 0.0
    %392 = vmatprep.subr.mxu0 0.0
    %393 = vmatpush1.msra.mxu0 0.0
    %394 = vmatprep.subr.mxu0 0.0
    %395 = vmatpush1.msra.mxu0 0.0
    %396 = vmatprep.subr.mxu0 0.0
    %397 = vmatpush1.msra.mxu0 0.0
    %398 = vmatprep.subr.mxu0 0.0
    %399 = vmatpush1.msra.mxu0 0.0
    %400 = vmatprep.subr.mxu0 0.0
    %401 = vmatpush1.msra.mxu0 0.0
    %402 = vmatprep.subr.mxu0 0.0
    %403 = vmatpush1.msra.mxu0 0.0
    %404 = vmatprep.subr.mxu0 0.0
    %405 = vmatpush1.msra.mxu0 0.0
    %406 = vmatprep.subr.mxu0 0.0
    %407 = vmatpush1.msra.mxu0 0.0
    %408 = vmatprep.subr.mxu0 0.0
    %409 = vmatpush1.msra.mxu0 0.0
    %410 = vmatprep.subr.mxu0 0.0
    %411 = vmatpush1.msra.mxu0 0.0
    %412 = vmatprep.subr.mxu0 0.0
    %413 = vmatpush1.msra.mxu0 0.0
    %414 = vmatprep.subr.mxu0 0.0
    %415 = vmatpush1.msra.mxu0 0.0
    %416 = vmatprep.subr.mxu0 0.0
    %417 = vmatpush1.msra.mxu0 0.0
    %418 = vmatprep.subr.mxu0 0.0
    %419 = vmatpush1.msra.mxu0 0.0
    %420 = vmatprep.subr.mxu0 0.0
    %421 = vmatpush1.msra.mxu0 0.0
    %422 = vmatprep.subr.mxu0 0.0
    %423 = vmatpush1.msra.mxu0 0.0
    %424 = vmatprep.subr.mxu0 0.0
    %425 = vmatpush1.msra.mxu0 0.0
    %426 = vmatprep.subr.mxu0 0.0
    %427 = vmatpush1.msra.mxu0 0.0
    %428 = vmatprep.subr.mxu0 0.0
    %429 = vmatpush1.msra.mxu0 0.0
    %430 = vmatprep.subr.mxu0 0.0
    %431 = vmatpush1.msra.mxu0 0.0
    %432 = vmatprep.subr.mxu0 0.0
    %433 = vmatpush1.msra.mxu0 0.0
    %434 = vmatprep.subr.mxu0 0.0
    %435 = vmatpush1.msra.mxu0 0.0
    %436 = vmatprep.mubr.f32.mxu0 0.0
    %437 = vmatmul.mubr.f32.gmra.mrb[0].mxu0 %v370
    %v438 = vpop.f32.mrb[0].mxu0
    %v439 = vadd.f32 0.0, %v438
    %v440 = vpop.f32.mrb[0].mxu0
    %441 = vdwg.mxu0
    %v442 = vmax.f32 %v439, 1e-12
    %v443 = vrcp.pop %v442
    %445 = vset.pattern.permute.xlu0 32
    %446 = vperm.xlu0 %445, %v443
    %v447 = vpop.permute.xlu0 %446
    %v449 = vmul.f32 %v439, %v447
    %v450 = vmul.f32 %v449, %v449
    %v451 = vsel %vm100, %v450, 0.0
    %452 = vadd.xlane.f32.xlu0 %v451
    %v453 = vpop.xlane.xlu0 %452
    %v455 = vsel %vm100, %v449, 0
    %457 = vmatprep.subr.mxu0 0.0
    %458 = vmatpush1.msra.mxu0 %v20
    %459 = vmatprep.subr.mxu0 0.0
    %460 = vmatpush1.msra.mxu0 %v21
    %461 = vmatprep.subr.mxu0 0.0
    %462 = vmatpush1.msra.mxu0 %v22
    %463 = vmatprep.subr.mxu0 0.0
    %464 = vmatpush1.msra.mxu0 %v23
    %465 = vmatprep.subr.mxu0 0.0
    %466 = vmatpush1.msra.mxu0 0.0
    %467 = vmatprep.subr.mxu0 0.0
    %468 = vmatpush1.msra.mxu0 0.0
    %469 = vmatprep.subr.mxu0 0.0
    %470 = vmatpush1.msra.mxu0 0.0
    %471 = vmatprep.subr.mxu0 0.0
    %472 = vmatpush1.msra.mxu0 0.0
    %473 = vmatprep.subr.mxu0 0.0
    %474 = vmatpush1.msra.mxu0 0.0
    %475 = vmatprep.subr.mxu0 0.0
    %476 = vmatpush1.msra.mxu0 0.0
    %477 = vmatprep.subr.mxu0 0.0
    %478 = vmatpush1.msra.mxu0 0.0
    %479 = vmatprep.subr.mxu0 0.0
    %480 = vmatpush1.msra.mxu0 0.0
    %481 = vmatprep.subr.mxu0 0.0
    %482 = vmatpush1.msra.mxu0 0.0
    %483 = vmatprep.subr.mxu0 0.0
    %484 = vmatpush1.msra.mxu0 0.0
    %485 = vmatprep.subr.mxu0 0.0
    %486 = vmatpush1.msra.mxu0 0.0
    %487 = vmatprep.subr.mxu0 0.0
    %488 = vmatpush1.msra.mxu0 0.0
    %489 = vmatprep.subr.mxu0 0.0
    %490 = vmatpush1.msra.mxu0 0.0
    %491 = vmatprep.subr.mxu0 0.0
    %492 = vmatpush1.msra.mxu0 0.0
    %493 = vmatprep.subr.mxu0 0.0
    %494 = vmatpush1.msra.mxu0 0.0
    %495 = vmatprep.subr.mxu0 0.0
    %496 = vmatpush1.msra.mxu0 0.0
    %497 = vmatprep.subr.mxu0 0.0
    %498 = vmatpush1.msra.mxu0 0.0
    %499 = vmatprep.subr.mxu0 0.0
    %500 = vmatpush1.msra.mxu0 0.0
    %501 = vmatprep.subr.mxu0 0.0
    %502 = vmatpush1.msra.mxu0 0.0
    %503 = vmatprep.subr.mxu0 0.0
    %504 = vmatpush1.msra.mxu0 0.0
    %505 = vmatprep.subr.mxu0 0.0
    %506 = vmatpush1.msra.mxu0 0.0
    %507 = vmatprep.subr.mxu0 0.0
    %508 = vmatpush1.msra.mxu0 0.0
    %509 = vmatprep.subr.mxu0 0.0
    %510 = vmatpush1.msra.mxu0 0.0
    %511 = vmatprep.subr.mxu0 0.0
    %512 = vmatpush1.msra.mxu0 0.0
    %513 = vmatprep.subr.mxu0 0.0
    %514 = vmatpush1.msra.mxu0 0.0
    %515 = vmatprep.subr.mxu0 0.0
    %516 = vmatpush1.msra.mxu0 0.0
    %517 = vmatprep.subr.mxu0 0.0
    %518 = vmatpush1.msra.mxu0 0.0
    %519 = vmatprep.subr.mxu0 0.0
    %520 = vmatpush1.msra.mxu0 0.0
    %521 = vmatprep.mubr.f32.mxu0 0.0
    %522 = vmatmul.mubr.f32.gmra.mrb[0].mxu0 %v455
    %v523 = vpop.f32.mrb[0].mxu0
    %v524 = vadd.f32 0.0, %v523
    %v525 = vpop.f32.mrb[0].mxu0
    %526 = vdwg.mxu0
    %v527 = vadd.f32 %v453, %v181
    %v528 = vmul.f32 %v524, 2.0
    %v529 = vsub.f32 %v527, %v528
    %v530 = vmax.f32 %v529, 0.0
    %v531 = vrsqrt.pop %v530
    %v532 = vmul.f32 %v530, %v531
    %vm533 = vcmp.eq.f32.partialorder %v530, inf
    %v534 = vsel %vm533, %v530, %v532
    %vm535 = vcmp.eq.f32.partialorder %v530, 0.0
    %v536 = vand.u32 %v530, 2147483648
    %v537 = vsel %vm535, %v536, %v534
    %v538 = vadd.f32 %v537, 0.01
    %v539 = vrcp.pop %v538
    %v540 = vmul.f32 %v539, %v18
    %v542 = vsel %vm25, %v540, 0
    %544 = vmatprep.subr.mxu0 0.0
    %545 = vmatpush1.msra.mxu0 %v19
    %546 = vmatprep.subr.mxu0 0.0
    %547 = vmatpush1.msra.mxu0 0.0
    %548 = vmatprep.subr.mxu0 0.0
    %549 = vmatpush1.msra.mxu0 0.0
    %550 = vmatprep.subr.mxu0 0.0
    %551 = vmatpush1.msra.mxu0 0.0
    %552 = vmatprep.subr.mxu0 0.0
    %553 = vmatpush1.msra.mxu0 0.0
    %554 = vmatprep.subr.mxu0 0.0
    %555 = vmatpush1.msra.mxu0 0.0
    %556 = vmatprep.subr.mxu0 0.0
    %557 = vmatpush1.msra.mxu0 0.0
    %558 = vmatprep.subr.mxu0 0.0
    %559 = vmatpush1.msra.mxu0 0.0
    %560 = vmatprep.subr.mxu0 0.0
    %561 = vmatpush1.msra.mxu0 0.0
    %562 = vmatprep.subr.mxu0 0.0
    %563 = vmatpush1.msra.mxu0 0.0
    %564 = vmatprep.subr.mxu0 0.0
    %565 = vmatpush1.msra.mxu0 0.0
    %566 = vmatprep.subr.mxu0 0.0
    %567 = vmatpush1.msra.mxu0 0.0
    %568 = vmatprep.subr.mxu0 0.0
    %569 = vmatpush1.msra.mxu0 0.0
    %570 = vmatprep.subr.mxu0 0.0
    %571 = vmatpush1.msra.mxu0 0.0
    %572 = vmatprep.subr.mxu0 0.0
    %573 = vmatpush1.msra.mxu0 0.0
    %574 = vmatprep.subr.mxu0 0.0
    %575 = vmatpush1.msra.mxu0 0.0
    %576 = vmatprep.subr.mxu0 0.0
    %577 = vmatpush1.msra.mxu0 0.0
    %578 = vmatprep.subr.mxu0 0.0
    %579 = vmatpush1.msra.mxu0 0.0
    %580 = vmatprep.subr.mxu0 0.0
    %581 = vmatpush1.msra.mxu0 0.0
    %582 = vmatprep.subr.mxu0 0.0
    %583 = vmatpush1.msra.mxu0 0.0
    %584 = vmatprep.subr.mxu0 0.0
    %585 = vmatpush1.msra.mxu0 0.0
    %586 = vmatprep.subr.mxu0 0.0
    %587 = vmatpush1.msra.mxu0 0.0
    %588 = vmatprep.subr.mxu0 0.0
    %589 = vmatpush1.msra.mxu0 0.0
    %590 = vmatprep.subr.mxu0 0.0
    %591 = vmatpush1.msra.mxu0 0.0
    %592 = vmatprep.subr.mxu0 0.0
    %593 = vmatpush1.msra.mxu0 0.0
    %594 = vmatprep.subr.mxu0 0.0
    %595 = vmatpush1.msra.mxu0 0.0
    %596 = vmatprep.subr.mxu0 0.0
    %597 = vmatpush1.msra.mxu0 0.0
    %598 = vmatprep.subr.mxu0 0.0
    %599 = vmatpush1.msra.mxu0 0.0
    %600 = vmatprep.subr.mxu0 0.0
    %601 = vmatpush1.msra.mxu0 0.0
    %602 = vmatprep.subr.mxu0 0.0
    %603 = vmatpush1.msra.mxu0 0.0
    %604 = vmatprep.subr.mxu0 0.0
    %605 = vmatpush1.msra.mxu0 0.0
    %606 = vmatprep.subr.mxu0 0.0
    %607 = vmatpush1.msra.mxu0 0.0
    %608 = vmatprep.mubr.f32.mxu0 0.0
    %609 = vmatmul.mubr.f32.gmra.mrb[0].mxu0 %v542
    %v610 = vpop.f32.mrb[0].mxu0
    %v611 = vadd.f32 0.0, %v610
    %v612 = vpop.f32.mrb[0].mxu0
    %613 = vdwg.mxu0
    %v614 = vmax.f32 %v611, 1e-12
    %v615 = vrcp.pop %v614
    %617 = vset.pattern.permute.xlu0 32
    %618 = vperm.xlu0 %617, %v615
    %v619 = vpop.permute.xlu0 %618
    %v621 = vmul.f32 %v611, %v619
    %s622 = scalar_lea.vmem %s0, 8
    %v623 = vld [vmem:[%s622] sm:$0xff]
    %s624 = scalar_lea.vmem %s1, 8
    %v625 = vld [vmem:[%s624] sm:$0xff]
    %s626 = scalar_lea.vmem %s2, 32
    %v627 = vld [vmem:[%s626] sm:$0xff]
    %v628 = vld [vmem:[%s626 + $0x8] sm:$0xff]
    %v629 = vld [vmem:[%s626 + $0x10] sm:$0xff]
    %v630 = vld [vmem:[%s626 + $0x18] sm:$0xff]
    %s631 = scalar_lea.vmem %s3, 1
    %v632 = vld [vmem:[%s631] sm:$0x1]
    %v634 = vsel %vm25, %v623, 0
    %636 = vmatprep.subr.mxu0 0.0
    %637 = vmatpush1.msra.mxu0 %v625
    %638 = vmatprep.subr.mxu0 0.0
    %639 = vmatpush1.msra.mxu0 0.0
    %640 = vmatprep.subr.mxu0 0.0
    %641 = vmatpush1.msra.mxu0 0.0
    %642 = vmatprep.subr.mxu0 0.0
    %643 = vmatpush1.msra.mxu0 0.0
    %644 = vmatprep.subr.mxu0 0.0
    %645 = vmatpush1.msra.mxu0 0.0
    %646 = vmatprep.subr.mxu0 0.0
    %647 = vmatpush1.msra.mxu0 0.0
    %648 = vmatprep.subr.mxu0 0.0
    %649 = vmatpush1.msra.mxu0 0.0
    %650 = vmatprep.subr.mxu0 0.0
    %651 = vmatpush1.msra.mxu0 0.0
    %652 = vmatprep.subr.mxu0 0.0
    %653 = vmatpush1.msra.mxu0 0.0
    %654 = vmatprep.subr.mxu0 0.0
    %655 = vmatpush1.msra.mxu0 0.0
    %656 = vmatprep.subr.mxu0 0.0
    %657 = vmatpush1.msra.mxu0 0.0
    %658 = vmatprep.subr.mxu0 0.0
    %659 = vmatpush1.msra.mxu0 0.0
    %660 = vmatprep.subr.mxu0 0.0
    %661 = vmatpush1.msra.mxu0 0.0
    %662 = vmatprep.subr.mxu0 0.0
    %663 = vmatpush1.msra.mxu0 0.0
    %664 = vmatprep.subr.mxu0 0.0
    %665 = vmatpush1.msra.mxu0 0.0
    %666 = vmatprep.subr.mxu0 0.0
    %667 = vmatpush1.msra.mxu0 0.0
    %668 = vmatprep.subr.mxu0 0.0
    %669 = vmatpush1.msra.mxu0 0.0
    %670 = vmatprep.subr.mxu0 0.0
    %671 = vmatpush1.msra.mxu0 0.0
    %672 = vmatprep.subr.mxu0 0.0
    %673 = vmatpush1.msra.mxu0 0.0
    %674 = vmatprep.subr.mxu0 0.0
    %675 = vmatpush1.msra.mxu0 0.0
    %676 = vmatprep.subr.mxu0 0.0
    %677 = vmatpush1.msra.mxu0 0.0
    %678 = vmatprep.subr.mxu0 0.0
    %679 = vmatpush1.msra.mxu0 0.0
    %680 = vmatprep.subr.mxu0 0.0
    %681 = vmatpush1.msra.mxu0 0.0
    %682 = vmatprep.subr.mxu0 0.0
    %683 = vmatpush1.msra.mxu0 0.0
    %684 = vmatprep.subr.mxu0 0.0
    %685 = vmatpush1.msra.mxu0 0.0
    %686 = vmatprep.subr.mxu0 0.0
    %687 = vmatpush1.msra.mxu0 0.0
    %688 = vmatprep.subr.mxu0 0.0
    %689 = vmatpush1.msra.mxu0 0.0
    %690 = vmatprep.subr.mxu0 0.0
    %691 = vmatpush1.msra.mxu0 0.0
    %692 = vmatprep.subr.mxu0 0.0
    %693 = vmatpush1.msra.mxu0 0.0
    %694 = vmatprep.subr.mxu0 0.0
    %695 = vmatpush1.msra.mxu0 0.0
    %696 = vmatprep.subr.mxu0 0.0
    %697 = vmatpush1.msra.mxu0 0.0
    %698 = vmatprep.subr.mxu0 0.0
    %699 = vmatpush1.msra.mxu0 0.0
    %700 = vmatprep.mubr.f32.mxu0 0.0
    %701 = vmatmul.mubr.f32.gmra.mrb[0].mxu0 %v634
    %v702 = vpop.f32.mrb[0].mxu0
    %v703 = vadd.f32 0.0, %v702
    %v704 = vpop.f32.mrb[0].mxu0
    %705 = vdwg.mxu0
    %v706 = vmul.f32 %v703, %v703
    %v707 = vsel %vm100, %v706, 0.0
    %708 = vadd.xlane.f32.xlu0 %v707
    %v709 = vpop.xlane.xlu0 %708
    %v711 = vsel %vm100, %v703, 0
    %713 = vmatprep.subr.mxu0 0.0
    %714 = vmatpush1.msra.mxu0 %v627
    %715 = vmatprep.subr.mxu0 0.0
    %716 = vmatpush1.msra.mxu0 %v628
    %717 = vmatprep.subr.mxu0 0.0
    %718 = vmatpush1.msra.mxu0 %v629
    %719 = vmatprep.subr.mxu0 0.0
    %720 = vmatpush1.msra.mxu0 %v630
    %721 = vmatprep.subr.mxu0 0.0
    %722 = vmatpush1.msra.mxu0 0.0
    %723 = vmatprep.subr.mxu0 0.0
    %724 = vmatpush1.msra.mxu0 0.0
    %725 = vmatprep.subr.mxu0 0.0
    %726 = vmatpush1.msra.mxu0 0.0
    %727 = vmatprep.subr.mxu0 0.0
    %728 = vmatpush1.msra.mxu0 0.0
    %729 = vmatprep.subr.mxu0 0.0
    %730 = vmatpush1.msra.mxu0 0.0
    %731 = vmatprep.subr.mxu0 0.0
    %732 = vmatpush1.msra.mxu0 0.0
    %733 = vmatprep.subr.mxu0 0.0
    %734 = vmatpush1.msra.mxu0 0.0
    %735 = vmatprep.subr.mxu0 0.0
    %736 = vmatpush1.msra.mxu0 0.0
    %737 = vmatprep.subr.mxu0 0.0
    %738 = vmatpush1.msra.mxu0 0.0
    %739 = vmatprep.subr.mxu0 0.0
    %740 = vmatpush1.msra.mxu0 0.0
    %741 = vmatprep.subr.mxu0 0.0
    %742 = vmatpush1.msra.mxu0 0.0
    %743 = vmatprep.subr.mxu0 0.0
    %744 = vmatpush1.msra.mxu0 0.0
    %745 = vmatprep.subr.mxu0 0.0
    %746 = vmatpush1.msra.mxu0 0.0
    %747 = vmatprep.subr.mxu0 0.0
    %748 = vmatpush1.msra.mxu0 0.0
    %749 = vmatprep.subr.mxu0 0.0
    %750 = vmatpush1.msra.mxu0 0.0
    %751 = vmatprep.subr.mxu0 0.0
    %752 = vmatpush1.msra.mxu0 0.0
    %753 = vmatprep.subr.mxu0 0.0
    %754 = vmatpush1.msra.mxu0 0.0
    %755 = vmatprep.subr.mxu0 0.0
    %756 = vmatpush1.msra.mxu0 0.0
    %757 = vmatprep.subr.mxu0 0.0
    %758 = vmatpush1.msra.mxu0 0.0
    %759 = vmatprep.subr.mxu0 0.0
    %760 = vmatpush1.msra.mxu0 0.0
    %761 = vmatprep.subr.mxu0 0.0
    %762 = vmatpush1.msra.mxu0 0.0
    %763 = vmatprep.subr.mxu0 0.0
    %764 = vmatpush1.msra.mxu0 0.0
    %765 = vmatprep.subr.mxu0 0.0
    %766 = vmatpush1.msra.mxu0 0.0
    %767 = vmatprep.subr.mxu0 0.0
    %768 = vmatpush1.msra.mxu0 0.0
    %769 = vmatprep.subr.mxu0 0.0
    %770 = vmatpush1.msra.mxu0 0.0
    %771 = vmatprep.subr.mxu0 0.0
    %772 = vmatpush1.msra.mxu0 0.0
    %773 = vmatprep.subr.mxu0 0.0
    %774 = vmatpush1.msra.mxu0 0.0
    %775 = vmatprep.subr.mxu0 0.0
    %776 = vmatpush1.msra.mxu0 0.0
    %777 = vmatprep.mubr.f32.mxu0 0.0
    %778 = vmatmul.mubr.f32.gmra.mrb[0].mxu0 %v711
    %v779 = vpop.f32.mrb[0].mxu0
    %v780 = vadd.f32 0.0, %v779
    %v781 = vpop.f32.mrb[0].mxu0
    %782 = vdwg.mxu0
    %v784 = vlaneseq
    %v785 = vshrl.u32 %v784, 7
    %v786 = vsub.s32 0, %v785
    %v787 = vrot.slane %v632, %v786
    %v789 = vadd.f32 %v709, %v787
    %v790 = vmul.f32 %v780, 2.0
    %v791 = vsub.f32 %v789, %v790
    %v792 = vmax.f32 %v791, 0.0
    %v793 = vrsqrt.pop %v792
    %v794 = vmul.f32 %v792, %v793
    %vm795 = vcmp.eq.f32.partialorder %v792, inf
    %v796 = vsel %vm795, %v792, %v794
    %vm797 = vcmp.eq.f32.partialorder %v792, 0.0
    %v798 = vand.u32 %v792, 2147483648
    %v799 = vsel %vm797, %v798, %v796
    %v800 = vadd.f32 %v799, 0.01
    %v801 = vrcp.pop %v800
    %v802 = vmul.f32 %v801, %v623
    %v804 = vsel %vm25, %v802, 0
    %806 = vmatprep.subr.mxu0 0.0
    %807 = vmatpush1.msra.mxu0 %v625
    %808 = vmatprep.subr.mxu0 0.0
    %809 = vmatpush1.msra.mxu0 0.0
    %810 = vmatprep.subr.mxu0 0.0
    %811 = vmatpush1.msra.mxu0 0.0
    %812 = vmatprep.subr.mxu0 0.0
    %813 = vmatpush1.msra.mxu0 0.0
    %814 = vmatprep.subr.mxu0 0.0
    %815 = vmatpush1.msra.mxu0 0.0
    %816 = vmatprep.subr.mxu0 0.0
    %817 = vmatpush1.msra.mxu0 0.0
    %818 = vmatprep.subr.mxu0 0.0
    %819 = vmatpush1.msra.mxu0 0.0
    %820 = vmatprep.subr.mxu0 0.0
    %821 = vmatpush1.msra.mxu0 0.0
    %822 = vmatprep.subr.mxu0 0.0
    %823 = vmatpush1.msra.mxu0 0.0
    %824 = vmatprep.subr.mxu0 0.0
    %825 = vmatpush1.msra.mxu0 0.0
    %826 = vmatprep.subr.mxu0 0.0
    %827 = vmatpush1.msra.mxu0 0.0
    %828 = vmatprep.subr.mxu0 0.0
    %829 = vmatpush1.msra.mxu0 0.0
    %830 = vmatprep.subr.mxu0 0.0
    %831 = vmatpush1.msra.mxu0 0.0
    %832 = vmatprep.subr.mxu0 0.0
    %833 = vmatpush1.msra.mxu0 0.0
    %834 = vmatprep.subr.mxu0 0.0
    %835 = vmatpush1.msra.mxu0 0.0
    %836 = vmatprep.subr.mxu0 0.0
    %837 = vmatpush1.msra.mxu0 0.0
    %838 = vmatprep.subr.mxu0 0.0
    %839 = vmatpush1.msra.mxu0 0.0
    %840 = vmatprep.subr.mxu0 0.0
    %841 = vmatpush1.msra.mxu0 0.0
    %842 = vmatprep.subr.mxu0 0.0
    %843 = vmatpush1.msra.mxu0 0.0
    %844 = vmatprep.subr.mxu0 0.0
    %845 = vmatpush1.msra.mxu0 0.0
    %846 = vmatprep.subr.mxu0 0.0
    %847 = vmatpush1.msra.mxu0 0.0
    %848 = vmatprep.subr.mxu0 0.0
    %849 = vmatpush1.msra.mxu0 0.0
    %850 = vmatprep.subr.mxu0 0.0
    %851 = vmatpush1.msra.mxu0 0.0
    %852 = vmatprep.subr.mxu0 0.0
    %853 = vmatpush1.msra.mxu0 0.0
    %854 = vmatprep.subr.mxu0 0.0
    %855 = vmatpush1.msra.mxu0 0.0
    %856 = vmatprep.subr.mxu0 0.0
    %857 = vmatpush1.msra.mxu0 0.0
    %858 = vmatprep.subr.mxu0 0.0
    %859 = vmatpush1.msra.mxu0 0.0
    %860 = vmatprep.subr.mxu0 0.0
    %861 = vmatpush1.msra.mxu0 0.0
    %862 = vmatprep.subr.mxu0 0.0
    %863 = vmatpush1.msra.mxu0 0.0
    %864 = vmatprep.subr.mxu0 0.0
    %865 = vmatpush1.msra.mxu0 0.0
    %866 = vmatprep.subr.mxu0 0.0
    %867 = vmatpush1.msra.mxu0 0.0
    %868 = vmatprep.subr.mxu0 0.0
    %869 = vmatpush1.msra.mxu0 0.0
    %870 = vmatprep.mubr.f32.mxu0 0.0
    %871 = vmatmul.mubr.f32.gmra.mrb[0].mxu0 %v804
    %v872 = vpop.f32.mrb[0].mxu0
    %v873 = vadd.f32 0.0, %v872
    %v874 = vpop.f32.mrb[0].mxu0
    %875 = vdwg.mxu0
    %v876 = vmax.f32 %v873, 1e-12
    %v877 = vrcp.pop %v876
    %879 = vset.pattern.permute.xlu0 32
    %880 = vperm.xlu0 %879, %v877
    %v881 = vpop.permute.xlu0 %880
    %v883 = vmul.f32 %v873, %v881
    %v884 = vmul.f32 %v883, %v883
    %v885 = vsel %vm100, %v884, 0.0
    %886 = vadd.xlane.f32.xlu0 %v885
    %v887 = vpop.xlane.xlu0 %886
    %v889 = vsel %vm100, %v883, 0
    %891 = vmatprep.subr.mxu0 0.0
    %892 = vmatpush1.msra.mxu0 %v627
    %893 = vmatprep.subr.mxu0 0.0
    %894 = vmatpush1.msra.mxu0 %v628
    %895 = vmatprep.subr.mxu0 0.0
    %896 = vmatpush1.msra.mxu0 %v629
    %897 = vmatprep.subr.mxu0 0.0
    %898 = vmatpush1.msra.mxu0 %v630
    %899 = vmatprep.subr.mxu0 0.0
    %900 = vmatpush1.msra.mxu0 0.0
    %901 = vmatprep.subr.mxu0 0.0
    %902 = vmatpush1.msra.mxu0 0.0
    %903 = vmatprep.subr.mxu0 0.0
    %904 = vmatpush1.msra.mxu0 0.0
    %905 = vmatprep.subr.mxu0 0.0
    %906 = vmatpush1.msra.mxu0 0.0
    %907 = vmatprep.subr.mxu0 0.0
    %908 = vmatpush1.msra.mxu0 0.0
    %909 = vmatprep.subr.mxu0 0.0
    %910 = vmatpush1.msra.mxu0 0.0
    %911 = vmatprep.subr.mxu0 0.0
    %912 = vmatpush1.msra.mxu0 0.0
    %913 = vmatprep.subr.mxu0 0.0
    %914 = vmatpush1.msra.mxu0 0.0
    %915 = vmatprep.subr.mxu0 0.0
    %916 = vmatpush1.msra.mxu0 0.0
    %917 = vmatprep.subr.mxu0 0.0
    %918 = vmatpush1.msra.mxu0 0.0
    %919 = vmatprep.subr.mxu0 0.0
    %920 = vmatpush1.msra.mxu0 0.0
    %921 = vmatprep.subr.mxu0 0.0
    %922 = vmatpush1.msra.mxu0 0.0
    %923 = vmatprep.subr.mxu0 0.0
    %924 = vmatpush1.msra.mxu0 0.0
    %925 = vmatprep.subr.mxu0 0.0
    %926 = vmatpush1.msra.mxu0 0.0
    %927 = vmatprep.subr.mxu0 0.0
    %928 = vmatpush1.msra.mxu0 0.0
    %929 = vmatprep.subr.mxu0 0.0
    %930 = vmatpush1.msra.mxu0 0.0
    %931 = vmatprep.subr.mxu0 0.0
    %932 = vmatpush1.msra.mxu0 0.0
    %933 = vmatprep.subr.mxu0 0.0
    %934 = vmatpush1.msra.mxu0 0.0
    %935 = vmatprep.subr.mxu0 0.0
    %936 = vmatpush1.msra.mxu0 0.0
    %937 = vmatprep.subr.mxu0 0.0
    %938 = vmatpush1.msra.mxu0 0.0
    %939 = vmatprep.subr.mxu0 0.0
    %940 = vmatpush1.msra.mxu0 0.0
    %941 = vmatprep.subr.mxu0 0.0
    %942 = vmatpush1.msra.mxu0 0.0
    %943 = vmatprep.subr.mxu0 0.0
    %944 = vmatpush1.msra.mxu0 0.0
    %945 = vmatprep.subr.mxu0 0.0
    %946 = vmatpush1.msra.mxu0 0.0
    %947 = vmatprep.subr.mxu0 0.0
    %948 = vmatpush1.msra.mxu0 0.0
    %949 = vmatprep.subr.mxu0 0.0
    %950 = vmatpush1.msra.mxu0 0.0
    %951 = vmatprep.subr.mxu0 0.0
    %952 = vmatpush1.msra.mxu0 0.0
    %953 = vmatprep.subr.mxu0 0.0
    %954 = vmatpush1.msra.mxu0 0.0
    %955 = vmatprep.mubr.f32.mxu0 0.0
    %956 = vmatmul.mubr.f32.gmra.mrb[0].mxu0 %v889
    %v957 = vpop.f32.mrb[0].mxu0
    %v958 = vadd.f32 0.0, %v957
    %v959 = vpop.f32.mrb[0].mxu0
    %960 = vdwg.mxu0
    %v961 = vadd.f32 %v887, %v787
    %v962 = vmul.f32 %v958, 2.0
    %v963 = vsub.f32 %v961, %v962
    %v964 = vmax.f32 %v963, 0.0
    %v965 = vrsqrt.pop %v964
    %v966 = vmul.f32 %v964, %v965
    %vm967 = vcmp.eq.f32.partialorder %v964, inf
    %v968 = vsel %vm967, %v964, %v966
    %vm969 = vcmp.eq.f32.partialorder %v964, 0.0
    %v970 = vand.u32 %v964, 2147483648
    %v971 = vsel %vm969, %v970, %v968
    %v972 = vadd.f32 %v971, 0.01
    %v973 = vrcp.pop %v972
    %v974 = vmul.f32 %v973, %v623
    %v976 = vsel %vm25, %v974, 0
    %978 = vmatprep.subr.mxu0 0.0
    %979 = vmatpush1.msra.mxu0 %v625
    %980 = vmatprep.subr.mxu0 0.0
    %981 = vmatpush1.msra.mxu0 0.0
    %982 = vmatprep.subr.mxu0 0.0
    %983 = vmatpush1.msra.mxu0 0.0
    %984 = vmatprep.subr.mxu0 0.0
    %985 = vmatpush1.msra.mxu0 0.0
    %986 = vmatprep.subr.mxu0 0.0
    %987 = vmatpush1.msra.mxu0 0.0
    %988 = vmatprep.subr.mxu0 0.0
    %989 = vmatpush1.msra.mxu0 0.0
    %990 = vmatprep.subr.mxu0 0.0
    %991 = vmatpush1.msra.mxu0 0.0
    %992 = vmatprep.subr.mxu0 0.0
    %993 = vmatpush1.msra.mxu0 0.0
    %994 = vmatprep.subr.mxu0 0.0
    %995 = vmatpush1.msra.mxu0 0.0
    %996 = vmatprep.subr.mxu0 0.0
    %997 = vmatpush1.msra.mxu0 0.0
    %998 = vmatprep.subr.mxu0 0.0
    %999 = vmatpush1.msra.mxu0 0.0
    %1000 = vmatprep.subr.mxu0 0.0
    %1001 = vmatpush1.msra.mxu0 0.0
    %1002 = vmatprep.subr.mxu0 0.0
    %1003 = vmatpush1.msra.mxu0 0.0
    %1004 = vmatprep.subr.mxu0 0.0
    %1005 = vmatpush1.msra.mxu0 0.0
    %1006 = vmatprep.subr.mxu0 0.0
    %1007 = vmatpush1.msra.mxu0 0.0
    %1008 = vmatprep.subr.mxu0 0.0
    %1009 = vmatpush1.msra.mxu0 0.0
    %1010 = vmatprep.subr.mxu0 0.0
    %1011 = vmatpush1.msra.mxu0 0.0
    %1012 = vmatprep.subr.mxu0 0.0
    %1013 = vmatpush1.msra.mxu0 0.0
    %1014 = vmatprep.subr.mxu0 0.0
    %1015 = vmatpush1.msra.mxu0 0.0
    %1016 = vmatprep.subr.mxu0 0.0
    %1017 = vmatpush1.msra.mxu0 0.0
    %1018 = vmatprep.subr.mxu0 0.0
    %1019 = vmatpush1.msra.mxu0 0.0
    %1020 = vmatprep.subr.mxu0 0.0
    %1021 = vmatpush1.msra.mxu0 0.0
    %1022 = vmatprep.subr.mxu0 0.0
    %1023 = vmatpush1.msra.mxu0 0.0
    %1024 = vmatprep.subr.mxu0 0.0
    %1025 = vmatpush1.msra.mxu0 0.0
    %1026 = vmatprep.subr.mxu0 0.0
    %1027 = vmatpush1.msra.mxu0 0.0
    %1028 = vmatprep.subr.mxu0 0.0
    %1029 = vmatpush1.msra.mxu0 0.0
    %1030 = vmatprep.subr.mxu0 0.0
    %1031 = vmatpush1.msra.mxu0 0.0
    %1032 = vmatprep.subr.mxu0 0.0
    %1033 = vmatpush1.msra.mxu0 0.0
    %1034 = vmatprep.subr.mxu0 0.0
    %1035 = vmatpush1.msra.mxu0 0.0
    %1036 = vmatprep.subr.mxu0 0.0
    %1037 = vmatpush1.msra.mxu0 0.0
    %1038 = vmatprep.subr.mxu0 0.0
    %1039 = vmatpush1.msra.mxu0 0.0
    %1040 = vmatprep.subr.mxu0 0.0
    %1041 = vmatpush1.msra.mxu0 0.0
    %1042 = vmatprep.mubr.f32.mxu0 0.0
    %1043 = vmatmul.mubr.f32.gmra.mrb[0].mxu0 %v976
    %v1044 = vpop.f32.mrb[0].mxu0
    %v1045 = vadd.f32 0.0, %v1044
    %v1046 = vpop.f32.mrb[0].mxu0
    %1047 = vdwg.mxu0
    %v1048 = vmax.f32 %v1045, 1e-12
    %v1049 = vrcp.pop %v1048
    %1051 = vset.pattern.permute.xlu0 32
    %1052 = vperm.xlu0 %1051, %v1049
    %v1053 = vpop.permute.xlu0 %1052
    %v1055 = vmul.f32 %v1045, %v1053
    %v1056 = vmul.f32 %v1055, %v1055
    %v1057 = vsel %vm100, %v1056, 0.0
    %1058 = vadd.xlane.f32.xlu0 %v1057
    %v1059 = vpop.xlane.xlu0 %1058
    %v1061 = vsel %vm100, %v1055, 0
    %1063 = vmatprep.subr.mxu0 0.0
    %1064 = vmatpush1.msra.mxu0 %v627
    %1065 = vmatprep.subr.mxu0 0.0
    %1066 = vmatpush1.msra.mxu0 %v628
    %1067 = vmatprep.subr.mxu0 0.0
    %1068 = vmatpush1.msra.mxu0 %v629
    %1069 = vmatprep.subr.mxu0 0.0
    %1070 = vmatpush1.msra.mxu0 %v630
    %1071 = vmatprep.subr.mxu0 0.0
    %1072 = vmatpush1.msra.mxu0 0.0
    %1073 = vmatprep.subr.mxu0 0.0
    %1074 = vmatpush1.msra.mxu0 0.0
    %1075 = vmatprep.subr.mxu0 0.0
    %1076 = vmatpush1.msra.mxu0 0.0
    %1077 = vmatprep.subr.mxu0 0.0
    %1078 = vmatpush1.msra.mxu0 0.0
    %1079 = vmatprep.subr.mxu0 0.0
    %1080 = vmatpush1.msra.mxu0 0.0
    %1081 = vmatprep.subr.mxu0 0.0
    %1082 = vmatpush1.msra.mxu0 0.0
    %1083 = vmatprep.subr.mxu0 0.0
    %1084 = vmatpush1.msra.mxu0 0.0
    %1085 = vmatprep.subr.mxu0 0.0
    %1086 = vmatpush1.msra.mxu0 0.0
    %1087 = vmatprep.subr.mxu0 0.0
    %1088 = vmatpush1.msra.mxu0 0.0
    %1089 = vmatprep.subr.mxu0 0.0
    %1090 = vmatpush1.msra.mxu0 0.0
    %1091 = vmatprep.subr.mxu0 0.0
    %1092 = vmatpush1.msra.mxu0 0.0
    %1093 = vmatprep.subr.mxu0 0.0
    %1094 = vmatpush1.msra.mxu0 0.0
    %1095 = vmatprep.subr.mxu0 0.0
    %1096 = vmatpush1.msra.mxu0 0.0
    %1097 = vmatprep.subr.mxu0 0.0
    %1098 = vmatpush1.msra.mxu0 0.0
    %1099 = vmatprep.subr.mxu0 0.0
    %1100 = vmatpush1.msra.mxu0 0.0
    %1101 = vmatprep.subr.mxu0 0.0
    %1102 = vmatpush1.msra.mxu0 0.0
    %1103 = vmatprep.subr.mxu0 0.0
    %1104 = vmatpush1.msra.mxu0 0.0
    %1105 = vmatprep.subr.mxu0 0.0
    %1106 = vmatpush1.msra.mxu0 0.0
    %1107 = vmatprep.subr.mxu0 0.0
    %1108 = vmatpush1.msra.mxu0 0.0
    %1109 = vmatprep.subr.mxu0 0.0
    %1110 = vmatpush1.msra.mxu0 0.0
    %1111 = vmatprep.subr.mxu0 0.0
    %1112 = vmatpush1.msra.mxu0 0.0
    %1113 = vmatprep.subr.mxu0 0.0
    %1114 = vmatpush1.msra.mxu0 0.0
    %1115 = vmatprep.subr.mxu0 0.0
    %1116 = vmatpush1.msra.mxu0 0.0
    %1117 = vmatprep.subr.mxu0 0.0
    %1118 = vmatpush1.msra.mxu0 0.0
    %1119 = vmatprep.subr.mxu0 0.0
    %1120 = vmatpush1.msra.mxu0 0.0
    %1121 = vmatprep.subr.mxu0 0.0
    %1122 = vmatpush1.msra.mxu0 0.0
    %1123 = vmatprep.subr.mxu0 0.0
    %1124 = vmatpush1.msra.mxu0 0.0
    %1125 = vmatprep.subr.mxu0 0.0
    %1126 = vmatpush1.msra.mxu0 0.0
    %1127 = vmatprep.mubr.f32.mxu0 0.0
    %1128 = vmatmul.mubr.f32.gmra.mrb[0].mxu0 %v1061
    %v1129 = vpop.f32.mrb[0].mxu0
    %v1130 = vadd.f32 0.0, %v1129
    %v1131 = vpop.f32.mrb[0].mxu0
    %1132 = vdwg.mxu0
    %v1133 = vadd.f32 %v1059, %v787
    %v1134 = vmul.f32 %v1130, 2.0
    %v1135 = vsub.f32 %v1133, %v1134
    %v1136 = vmax.f32 %v1135, 0.0
    %v1137 = vrsqrt.pop %v1136
    %v1138 = vmul.f32 %v1136, %v1137
    %vm1139 = vcmp.eq.f32.partialorder %v1136, inf
    %v1140 = vsel %vm1139, %v1136, %v1138
    %vm1141 = vcmp.eq.f32.partialorder %v1136, 0.0
    %v1142 = vand.u32 %v1136, 2147483648
    %v1143 = vsel %vm1141, %v1142, %v1140
    %v1144 = vadd.f32 %v1143, 0.01
    %v1145 = vrcp.pop %v1144
    %v1146 = vmul.f32 %v1145, %v623
    %v1148 = vsel %vm25, %v1146, 0
    %1150 = vmatprep.subr.mxu0 0.0
    %1151 = vmatpush1.msra.mxu0 %v625
    %1152 = vmatprep.subr.mxu0 0.0
    %1153 = vmatpush1.msra.mxu0 0.0
    %1154 = vmatprep.subr.mxu0 0.0
    %1155 = vmatpush1.msra.mxu0 0.0
    %1156 = vmatprep.subr.mxu0 0.0
    %1157 = vmatpush1.msra.mxu0 0.0
    %1158 = vmatprep.subr.mxu0 0.0
    %1159 = vmatpush1.msra.mxu0 0.0
    %1160 = vmatprep.subr.mxu0 0.0
    %1161 = vmatpush1.msra.mxu0 0.0
    %1162 = vmatprep.subr.mxu0 0.0
    %1163 = vmatpush1.msra.mxu0 0.0
    %1164 = vmatprep.subr.mxu0 0.0
    %1165 = vmatpush1.msra.mxu0 0.0
    %1166 = vmatprep.subr.mxu0 0.0
    %1167 = vmatpush1.msra.mxu0 0.0
    %1168 = vmatprep.subr.mxu0 0.0
    %1169 = vmatpush1.msra.mxu0 0.0
    %1170 = vmatprep.subr.mxu0 0.0
    %1171 = vmatpush1.msra.mxu0 0.0
    %1172 = vmatprep.subr.mxu0 0.0
    %1173 = vmatpush1.msra.mxu0 0.0
    %1174 = vmatprep.subr.mxu0 0.0
    %1175 = vmatpush1.msra.mxu0 0.0
    %1176 = vmatprep.subr.mxu0 0.0
    %1177 = vmatpush1.msra.mxu0 0.0
    %1178 = vmatprep.subr.mxu0 0.0
    %1179 = vmatpush1.msra.mxu0 0.0
    %1180 = vmatprep.subr.mxu0 0.0
    %1181 = vmatpush1.msra.mxu0 0.0
    %1182 = vmatprep.subr.mxu0 0.0
    %1183 = vmatpush1.msra.mxu0 0.0
    %1184 = vmatprep.subr.mxu0 0.0
    %1185 = vmatpush1.msra.mxu0 0.0
    %1186 = vmatprep.subr.mxu0 0.0
    %1187 = vmatpush1.msra.mxu0 0.0
    %1188 = vmatprep.subr.mxu0 0.0
    %1189 = vmatpush1.msra.mxu0 0.0
    %1190 = vmatprep.subr.mxu0 0.0
    %1191 = vmatpush1.msra.mxu0 0.0
    %1192 = vmatprep.subr.mxu0 0.0
    %1193 = vmatpush1.msra.mxu0 0.0
    %1194 = vmatprep.subr.mxu0 0.0
    %1195 = vmatpush1.msra.mxu0 0.0
    %1196 = vmatprep.subr.mxu0 0.0
    %1197 = vmatpush1.msra.mxu0 0.0
    %1198 = vmatprep.subr.mxu0 0.0
    %1199 = vmatpush1.msra.mxu0 0.0
    %1200 = vmatprep.subr.mxu0 0.0
    %1201 = vmatpush1.msra.mxu0 0.0
    %1202 = vmatprep.subr.mxu0 0.0
    %1203 = vmatpush1.msra.mxu0 0.0
    %1204 = vmatprep.subr.mxu0 0.0
    %1205 = vmatpush1.msra.mxu0 0.0
    %1206 = vmatprep.subr.mxu0 0.0
    %1207 = vmatpush1.msra.mxu0 0.0
    %1208 = vmatprep.subr.mxu0 0.0
    %1209 = vmatpush1.msra.mxu0 0.0
    %1210 = vmatprep.subr.mxu0 0.0
    %1211 = vmatpush1.msra.mxu0 0.0
    %1212 = vmatprep.subr.mxu0 0.0
    %1213 = vmatpush1.msra.mxu0 0.0
    %1214 = vmatprep.mubr.f32.mxu0 0.0
    %1215 = vmatmul.mubr.f32.gmra.mrb[0].mxu0 %v1148
    %v1216 = vpop.f32.mrb[0].mxu0
    %v1217 = vadd.f32 0.0, %v1216
    %v1218 = vpop.f32.mrb[0].mxu0
    %1219 = vdwg.mxu0
    %v1220 = vmax.f32 %v1217, 1e-12
    %v1221 = vrcp.pop %v1220
    %1223 = vset.pattern.permute.xlu0 32
    %1224 = vperm.xlu0 %1223, %v1221
    %v1225 = vpop.permute.xlu0 %1224
    %v1227 = vmul.f32 %v1217, %v1225
    %s1228 = scalar_lea.vmem %s0, 16
    %v1229 = vld [vmem:[%s1228] sm:$0xff]
    %s1230 = scalar_lea.vmem %s1, 16
    %v1231 = vld [vmem:[%s1230] sm:$0xff]
    %s1232 = scalar_lea.vmem %s2, 64
    %v1233 = vld [vmem:[%s1232] sm:$0xff]
    %v1234 = vld [vmem:[%s1232 + $0x8] sm:$0xff]
    %v1235 = vld [vmem:[%s1232 + $0x10] sm:$0xff]
    %v1236 = vld [vmem:[%s1232 + $0x18] sm:$0xff]
    %s1237 = scalar_lea.vmem %s3, 2
    %v1238 = vld [vmem:[%s1237] sm:$0x1]
    %v1240 = vsel %vm25, %v1229, 0
    %1242 = vmatprep.subr.mxu0 0.0
    %1243 = vmatpush1.msra.mxu0 %v1231
    %1244 = vmatprep.subr.mxu0 0.0
    %1245 = vmatpush1.msra.mxu0 0.0
    %1246 = vmatprep.subr.mxu0 0.0
    %1247 = vmatpush1.msra.mxu0 0.0
    %1248 = vmatprep.subr.mxu0 0.0
    %1249 = vmatpush1.msra.mxu0 0.0
    %1250 = vmatprep.subr.mxu0 0.0
    %1251 = vmatpush1.msra.mxu0 0.0
    %1252 = vmatprep.subr.mxu0 0.0
    %1253 = vmatpush1.msra.mxu0 0.0
    %1254 = vmatprep.subr.mxu0 0.0
    %1255 = vmatpush1.msra.mxu0 0.0
    %1256 = vmatprep.subr.mxu0 0.0
    %1257 = vmatpush1.msra.mxu0 0.0
    %1258 = vmatprep.subr.mxu0 0.0
    %1259 = vmatpush1.msra.mxu0 0.0
    %1260 = vmatprep.subr.mxu0 0.0
    %1261 = vmatpush1.msra.mxu0 0.0
    %1262 = vmatprep.subr.mxu0 0.0
    %1263 = vmatpush1.msra.mxu0 0.0
    %1264 = vmatprep.subr.mxu0 0.0
    %1265 = vmatpush1.msra.mxu0 0.0
    %1266 = vmatprep.subr.mxu0 0.0
    %1267 = vmatpush1.msra.mxu0 0.0
    %1268 = vmatprep.subr.mxu0 0.0
    %1269 = vmatpush1.msra.mxu0 0.0
    %1270 = vmatprep.subr.mxu0 0.0
    %1271 = vmatpush1.msra.mxu0 0.0
    %1272 = vmatprep.subr.mxu0 0.0
    %1273 = vmatpush1.msra.mxu0 0.0
    %1274 = vmatprep.subr.mxu0 0.0
    %1275 = vmatpush1.msra.mxu0 0.0
    %1276 = vmatprep.subr.mxu0 0.0
    %1277 = vmatpush1.msra.mxu0 0.0
    %1278 = vmatprep.subr.mxu0 0.0
    %1279 = vmatpush1.msra.mxu0 0.0
    %1280 = vmatprep.subr.mxu0 0.0
    %1281 = vmatpush1.msra.mxu0 0.0
    %1282 = vmatprep.subr.mxu0 0.0
    %1283 = vmatpush1.msra.mxu0 0.0
    %1284 = vmatprep.subr.mxu0 0.0
    %1285 = vmatpush1.msra.mxu0 0.0
    %1286 = vmatprep.subr.mxu0 0.0
    %1287 = vmatpush1.msra.mxu0 0.0
    %1288 = vmatprep.subr.mxu0 0.0
    %1289 = vmatpush1.msra.mxu0 0.0
    %1290 = vmatprep.subr.mxu0 0.0
    %1291 = vmatpush1.msra.mxu0 0.0
    %1292 = vmatprep.subr.mxu0 0.0
    %1293 = vmatpush1.msra.mxu0 0.0
    %1294 = vmatprep.subr.mxu0 0.0
    %1295 = vmatpush1.msra.mxu0 0.0
    %1296 = vmatprep.subr.mxu0 0.0
    %1297 = vmatpush1.msra.mxu0 0.0
    %1298 = vmatprep.subr.mxu0 0.0
    %1299 = vmatpush1.msra.mxu0 0.0
    %1300 = vmatprep.subr.mxu0 0.0
    %1301 = vmatpush1.msra.mxu0 0.0
    %1302 = vmatprep.subr.mxu0 0.0
    %1303 = vmatpush1.msra.mxu0 0.0
    %1304 = vmatprep.subr.mxu0 0.0
    %1305 = vmatpush1.msra.mxu0 0.0
    %1306 = vmatprep.mubr.f32.mxu0 0.0
    %1307 = vmatmul.mubr.f32.gmra.mrb[0].mxu0 %v1240
    %v1308 = vpop.f32.mrb[0].mxu0
    %v1309 = vadd.f32 0.0, %v1308
    %v1310 = vpop.f32.mrb[0].mxu0
    %1311 = vdwg.mxu0
    %v1312 = vmul.f32 %v1309, %v1309
    %v1313 = vsel %vm100, %v1312, 0.0
    %1314 = vadd.xlane.f32.xlu0 %v1313
    %v1315 = vpop.xlane.xlu0 %1314
    %v1317 = vsel %vm100, %v1309, 0
    %1319 = vmatprep.subr.mxu0 0.0
    %1320 = vmatpush1.msra.mxu0 %v1233
    %1321 = vmatprep.subr.mxu0 0.0
    %1322 = vmatpush1.msra.mxu0 %v1234
    %1323 = vmatprep.subr.mxu0 0.0
    %1324 = vmatpush1.msra.mxu0 %v1235
    %1325 = vmatprep.subr.mxu0 0.0
    %1326 = vmatpush1.msra.mxu0 %v1236
    %1327 = vmatprep.subr.mxu0 0.0
    %1328 = vmatpush1.msra.mxu0 0.0
    %1329 = vmatprep.subr.mxu0 0.0
    %1330 = vmatpush1.msra.mxu0 0.0
    %1331 = vmatprep.subr.mxu0 0.0
    %1332 = vmatpush1.msra.mxu0 0.0
    %1333 = vmatprep.subr.mxu0 0.0
    %1334 = vmatpush1.msra.mxu0 0.0
    %1335 = vmatprep.subr.mxu0 0.0
    %1336 = vmatpush1.msra.mxu0 0.0
    %1337 = vmatprep.subr.mxu0 0.0
    %1338 = vmatpush1.msra.mxu0 0.0
    %1339 = vmatprep.subr.mxu0 0.0
    %1340 = vmatpush1.msra.mxu0 0.0
    %1341 = vmatprep.subr.mxu0 0.0
    %1342 = vmatpush1.msra.mxu0 0.0
    %1343 = vmatprep.subr.mxu0 0.0
    %1344 = vmatpush1.msra.mxu0 0.0
    %1345 = vmatprep.subr.mxu0 0.0
    %1346 = vmatpush1.msra.mxu0 0.0
    %1347 = vmatprep.subr.mxu0 0.0
    %1348 = vmatpush1.msra.mxu0 0.0
    %1349 = vmatprep.subr.mxu0 0.0
    %1350 = vmatpush1.msra.mxu0 0.0
    %1351 = vmatprep.subr.mxu0 0.0
    %1352 = vmatpush1.msra.mxu0 0.0
    %1353 = vmatprep.subr.mxu0 0.0
    %1354 = vmatpush1.msra.mxu0 0.0
    %1355 = vmatprep.subr.mxu0 0.0
    %1356 = vmatpush1.msra.mxu0 0.0
    %1357 = vmatprep.subr.mxu0 0.0
    %1358 = vmatpush1.msra.mxu0 0.0
    %1359 = vmatprep.subr.mxu0 0.0
    %1360 = vmatpush1.msra.mxu0 0.0
    %1361 = vmatprep.subr.mxu0 0.0
    %1362 = vmatpush1.msra.mxu0 0.0
    %1363 = vmatprep.subr.mxu0 0.0
    %1364 = vmatpush1.msra.mxu0 0.0
    %1365 = vmatprep.subr.mxu0 0.0
    %1366 = vmatpush1.msra.mxu0 0.0
    %1367 = vmatprep.subr.mxu0 0.0
    %1368 = vmatpush1.msra.mxu0 0.0
    %1369 = vmatprep.subr.mxu0 0.0
    %1370 = vmatpush1.msra.mxu0 0.0
    %1371 = vmatprep.subr.mxu0 0.0
    %1372 = vmatpush1.msra.mxu0 0.0
    %1373 = vmatprep.subr.mxu0 0.0
    %1374 = vmatpush1.msra.mxu0 0.0
    %1375 = vmatprep.subr.mxu0 0.0
    %1376 = vmatpush1.msra.mxu0 0.0
    %1377 = vmatprep.subr.mxu0 0.0
    %1378 = vmatpush1.msra.mxu0 0.0
    %1379 = vmatprep.subr.mxu0 0.0
    %1380 = vmatpush1.msra.mxu0 0.0
    %1381 = vmatprep.subr.mxu0 0.0
    %1382 = vmatpush1.msra.mxu0 0.0
    %1383 = vmatprep.mubr.f32.mxu0 0.0
    %1384 = vmatmul.mubr.f32.gmra.mrb[0].mxu0 %v1317
    %v1385 = vpop.f32.mrb[0].mxu0
    %v1386 = vadd.f32 0.0, %v1385
    %v1387 = vpop.f32.mrb[0].mxu0
    %1388 = vdwg.mxu0
    %v1390 = vlaneseq
    %v1391 = vshrl.u32 %v1390, 7
    %v1392 = vsub.s32 0, %v1391
    %v1393 = vrot.slane %v1238, %v1392
    %v1395 = vadd.f32 %v1315, %v1393
    %v1396 = vmul.f32 %v1386, 2.0
    %v1397 = vsub.f32 %v1395, %v1396
    %v1398 = vmax.f32 %v1397, 0.0
    %v1399 = vrsqrt.pop %v1398
    %v1400 = vmul.f32 %v1398, %v1399
    %vm1401 = vcmp.eq.f32.partialorder %v1398, inf
    %v1402 = vsel %vm1401, %v1398, %v1400
    %vm1403 = vcmp.eq.f32.partialorder %v1398, 0.0
    %v1404 = vand.u32 %v1398, 2147483648
    %v1405 = vsel %vm1403, %v1404, %v1402
    %v1406 = vadd.f32 %v1405, 0.01
    %v1407 = vrcp.pop %v1406
    %v1408 = vmul.f32 %v1407, %v1229
    %v1410 = vsel %vm25, %v1408, 0
    %1412 = vmatprep.subr.mxu0 0.0
    %1413 = vmatpush1.msra.mxu0 %v1231
    %1414 = vmatprep.subr.mxu0 0.0
    %1415 = vmatpush1.msra.mxu0 0.0
    %1416 = vmatprep.subr.mxu0 0.0
    %1417 = vmatpush1.msra.mxu0 0.0
    %1418 = vmatprep.subr.mxu0 0.0
    %1419 = vmatpush1.msra.mxu0 0.0
    %1420 = vmatprep.subr.mxu0 0.0
    %1421 = vmatpush1.msra.mxu0 0.0
    %1422 = vmatprep.subr.mxu0 0.0
    %1423 = vmatpush1.msra.mxu0 0.0
    %1424 = vmatprep.subr.mxu0 0.0
    %1425 = vmatpush1.msra.mxu0 0.0
    %1426 = vmatprep.subr.mxu0 0.0
    %1427 = vmatpush1.msra.mxu0 0.0
    %1428 = vmatprep.subr.mxu0 0.0
    %1429 = vmatpush1.msra.mxu0 0.0
    %1430 = vmatprep.subr.mxu0 0.0
    %1431 = vmatpush1.msra.mxu0 0.0
    %1432 = vmatprep.subr.mxu0 0.0
    %1433 = vmatpush1.msra.mxu0 0.0
    %1434 = vmatprep.subr.mxu0 0.0
    %1435 = vmatpush1.msra.mxu0 0.0
    %1436 = vmatprep.subr.mxu0 0.0
    %1437 = vmatpush1.msra.mxu0 0.0
    %1438 = vmatprep.subr.mxu0 0.0
    %1439 = vmatpush1.msra.mxu0 0.0
    %1440 = vmatprep.subr.mxu0 0.0
    %1441 = vmatpush1.msra.mxu0 0.0
    %1442 = vmatprep.subr.mxu0 0.0
    %1443 = vmatpush1.msra.mxu0 0.0
    %1444 = vmatprep.subr.mxu0 0.0
    %1445 = vmatpush1.msra.mxu0 0.0
    %1446 = vmatprep.subr.mxu0 0.0
    %1447 = vmatpush1.msra.mxu0 0.0
    %1448 = vmatprep.subr.mxu0 0.0
    %1449 = vmatpush1.msra.mxu0 0.0
    %1450 = vmatprep.subr.mxu0 0.0
    %1451 = vmatpush1.msra.mxu0 0.0
    %1452 = vmatprep.subr.mxu0 0.0
    %1453 = vmatpush1.msra.mxu0 0.0
    %1454 = vmatprep.subr.mxu0 0.0
    %1455 = vmatpush1.msra.mxu0 0.0
    %1456 = vmatprep.subr.mxu0 0.0
    %1457 = vmatpush1.msra.mxu0 0.0
    %1458 = vmatprep.subr.mxu0 0.0
    %1459 = vmatpush1.msra.mxu0 0.0
    %1460 = vmatprep.subr.mxu0 0.0
    %1461 = vmatpush1.msra.mxu0 0.0
    %1462 = vmatprep.subr.mxu0 0.0
    %1463 = vmatpush1.msra.mxu0 0.0
    %1464 = vmatprep.subr.mxu0 0.0
    %1465 = vmatpush1.msra.mxu0 0.0
    %1466 = vmatprep.subr.mxu0 0.0
    %1467 = vmatpush1.msra.mxu0 0.0
    %1468 = vmatprep.subr.mxu0 0.0
    %1469 = vmatpush1.msra.mxu0 0.0
    %1470 = vmatprep.subr.mxu0 0.0
    %1471 = vmatpush1.msra.mxu0 0.0
    %1472 = vmatprep.subr.mxu0 0.0
    %1473 = vmatpush1.msra.mxu0 0.0
    %1474 = vmatprep.subr.mxu0 0.0
    %1475 = vmatpush1.msra.mxu0 0.0
    %1476 = vmatprep.mubr.f32.mxu0 0.0
    %1477 = vmatmul.mubr.f32.gmra.mrb[0].mxu0 %v1410
    %v1478 = vpop.f32.mrb[0].mxu0
    %v1479 = vadd.f32 0.0, %v1478
    %v1480 = vpop.f32.mrb[0].mxu0
    %1481 = vdwg.mxu0
    %v1482 = vmax.f32 %v1479, 1e-12
    %v1483 = vrcp.pop %v1482
    %1485 = vset.pattern.permute.xlu0 32
    %1486 = vperm.xlu0 %1485, %v1483
    %v1487 = vpop.permute.xlu0 %1486
    %v1489 = vmul.f32 %v1479, %v1487
    %v1490 = vmul.f32 %v1489, %v1489
    %v1491 = vsel %vm100, %v1490, 0.0
    %1492 = vadd.xlane.f32.xlu0 %v1491
    %v1493 = vpop.xlane.xlu0 %1492
    %v1495 = vsel %vm100, %v1489, 0
    %1497 = vmatprep.subr.mxu0 0.0
    %1498 = vmatpush1.msra.mxu0 %v1233
    %1499 = vmatprep.subr.mxu0 0.0
    %1500 = vmatpush1.msra.mxu0 %v1234
    %1501 = vmatprep.subr.mxu0 0.0
    %1502 = vmatpush1.msra.mxu0 %v1235
    %1503 = vmatprep.subr.mxu0 0.0
    %1504 = vmatpush1.msra.mxu0 %v1236
    %1505 = vmatprep.subr.mxu0 0.0
    %1506 = vmatpush1.msra.mxu0 0.0
    %1507 = vmatprep.subr.mxu0 0.0
    %1508 = vmatpush1.msra.mxu0 0.0
    %1509 = vmatprep.subr.mxu0 0.0
    %1510 = vmatpush1.msra.mxu0 0.0
    %1511 = vmatprep.subr.mxu0 0.0
    %1512 = vmatpush1.msra.mxu0 0.0
    %1513 = vmatprep.subr.mxu0 0.0
    %1514 = vmatpush1.msra.mxu0 0.0
    %1515 = vmatprep.subr.mxu0 0.0
    %1516 = vmatpush1.msra.mxu0 0.0
    %1517 = vmatprep.subr.mxu0 0.0
    %1518 = vmatpush1.msra.mxu0 0.0
    %1519 = vmatprep.subr.mxu0 0.0
    %1520 = vmatpush1.msra.mxu0 0.0
    %1521 = vmatprep.subr.mxu0 0.0
    %1522 = vmatpush1.msra.mxu0 0.0
    %1523 = vmatprep.subr.mxu0 0.0
    %1524 = vmatpush1.msra.mxu0 0.0
    %1525 = vmatprep.subr.mxu0 0.0
    %1526 = vmatpush1.msra.mxu0 0.0
    %1527 = vmatprep.subr.mxu0 0.0
    %1528 = vmatpush1.msra.mxu0 0.0
    %1529 = vmatprep.subr.mxu0 0.0
    %1530 = vmatpush1.msra.mxu0 0.0
    %1531 = vmatprep.subr.mxu0 0.0
    %1532 = vmatpush1.msra.mxu0 0.0
    %1533 = vmatprep.subr.mxu0 0.0
    %1534 = vmatpush1.msra.mxu0 0.0
    %1535 = vmatprep.subr.mxu0 0.0
    %1536 = vmatpush1.msra.mxu0 0.0
    %1537 = vmatprep.subr.mxu0 0.0
    %1538 = vmatpush1.msra.mxu0 0.0
    %1539 = vmatprep.subr.mxu0 0.0
    %1540 = vmatpush1.msra.mxu0 0.0
    %1541 = vmatprep.subr.mxu0 0.0
    %1542 = vmatpush1.msra.mxu0 0.0
    %1543 = vmatprep.subr.mxu0 0.0
    %1544 = vmatpush1.msra.mxu0 0.0
    %1545 = vmatprep.subr.mxu0 0.0
    %1546 = vmatpush1.msra.mxu0 0.0
    %1547 = vmatprep.subr.mxu0 0.0
    %1548 = vmatpush1.msra.mxu0 0.0
    %1549 = vmatprep.subr.mxu0 0.0
    %1550 = vmatpush1.msra.mxu0 0.0
    %1551 = vmatprep.subr.mxu0 0.0
    %1552 = vmatpush1.msra.mxu0 0.0
    %1553 = vmatprep.subr.mxu0 0.0
    %1554 = vmatpush1.msra.mxu0 0.0
    %1555 = vmatprep.subr.mxu0 0.0
    %1556 = vmatpush1.msra.mxu0 0.0
    %1557 = vmatprep.subr.mxu0 0.0
    %1558 = vmatpush1.msra.mxu0 0.0
    %1559 = vmatprep.subr.mxu0 0.0
    %1560 = vmatpush1.msra.mxu0 0.0
    %1561 = vmatprep.mubr.f32.mxu0 0.0
    %1562 = vmatmul.mubr.f32.gmra.mrb[0].mxu0 %v1495
    %v1563 = vpop.f32.mrb[0].mxu0
    %v1564 = vadd.f32 0.0, %v1563
    %v1565 = vpop.f32.mrb[0].mxu0
    %1566 = vdwg.mxu0
    %v1567 = vadd.f32 %v1493, %v1393
    %v1568 = vmul.f32 %v1564, 2.0
    %v1569 = vsub.f32 %v1567, %v1568
    %v1570 = vmax.f32 %v1569, 0.0
    %v1571 = vrsqrt.pop %v1570
    %v1572 = vmul.f32 %v1570, %v1571
    %vm1573 = vcmp.eq.f32.partialorder %v1570, inf
    %v1574 = vsel %vm1573, %v1570, %v1572
    %vm1575 = vcmp.eq.f32.partialorder %v1570, 0.0
    %v1576 = vand.u32 %v1570, 2147483648
    %v1577 = vsel %vm1575, %v1576, %v1574
    %v1578 = vadd.f32 %v1577, 0.01
    %v1579 = vrcp.pop %v1578
    %v1580 = vmul.f32 %v1579, %v1229
    %v1582 = vsel %vm25, %v1580, 0
    %1584 = vmatprep.subr.mxu0 0.0
    %1585 = vmatpush1.msra.mxu0 %v1231
    %1586 = vmatprep.subr.mxu0 0.0
    %1587 = vmatpush1.msra.mxu0 0.0
    %1588 = vmatprep.subr.mxu0 0.0
    %1589 = vmatpush1.msra.mxu0 0.0
    %1590 = vmatprep.subr.mxu0 0.0
    %1591 = vmatpush1.msra.mxu0 0.0
    %1592 = vmatprep.subr.mxu0 0.0
    %1593 = vmatpush1.msra.mxu0 0.0
    %1594 = vmatprep.subr.mxu0 0.0
    %1595 = vmatpush1.msra.mxu0 0.0
    %1596 = vmatprep.subr.mxu0 0.0
    %1597 = vmatpush1.msra.mxu0 0.0
    %1598 = vmatprep.subr.mxu0 0.0
    %1599 = vmatpush1.msra.mxu0 0.0
    %1600 = vmatprep.subr.mxu0 0.0
    %1601 = vmatpush1.msra.mxu0 0.0
    %1602 = vmatprep.subr.mxu0 0.0
    %1603 = vmatpush1.msra.mxu0 0.0
    %1604 = vmatprep.subr.mxu0 0.0
    %1605 = vmatpush1.msra.mxu0 0.0
    %1606 = vmatprep.subr.mxu0 0.0
    %1607 = vmatpush1.msra.mxu0 0.0
    %1608 = vmatprep.subr.mxu0 0.0
    %1609 = vmatpush1.msra.mxu0 0.0
    %1610 = vmatprep.subr.mxu0 0.0
    %1611 = vmatpush1.msra.mxu0 0.0
    %1612 = vmatprep.subr.mxu0 0.0
    %1613 = vmatpush1.msra.mxu0 0.0
    %1614 = vmatprep.subr.mxu0 0.0
    %1615 = vmatpush1.msra.mxu0 0.0
    %1616 = vmatprep.subr.mxu0 0.0
    %1617 = vmatpush1.msra.mxu0 0.0
    %1618 = vmatprep.subr.mxu0 0.0
    %1619 = vmatpush1.msra.mxu0 0.0
    %1620 = vmatprep.subr.mxu0 0.0
    %1621 = vmatpush1.msra.mxu0 0.0
    %1622 = vmatprep.subr.mxu0 0.0
    %1623 = vmatpush1.msra.mxu0 0.0
    %1624 = vmatprep.subr.mxu0 0.0
    %1625 = vmatpush1.msra.mxu0 0.0
    %1626 = vmatprep.subr.mxu0 0.0
    %1627 = vmatpush1.msra.mxu0 0.0
    %1628 = vmatprep.subr.mxu0 0.0
    %1629 = vmatpush1.msra.mxu0 0.0
    %1630 = vmatprep.subr.mxu0 0.0
    %1631 = vmatpush1.msra.mxu0 0.0
    %1632 = vmatprep.subr.mxu0 0.0
    %1633 = vmatpush1.msra.mxu0 0.0
    %1634 = vmatprep.subr.mxu0 0.0
    %1635 = vmatpush1.msra.mxu0 0.0
    %1636 = vmatprep.subr.mxu0 0.0
    %1637 = vmatpush1.msra.mxu0 0.0
    %1638 = vmatprep.subr.mxu0 0.0
    %1639 = vmatpush1.msra.mxu0 0.0
    %1640 = vmatprep.subr.mxu0 0.0
    %1641 = vmatpush1.msra.mxu0 0.0
    %1642 = vmatprep.subr.mxu0 0.0
    %1643 = vmatpush1.msra.mxu0 0.0
    %1644 = vmatprep.subr.mxu0 0.0
    %1645 = vmatpush1.msra.mxu0 0.0
    %1646 = vmatprep.subr.mxu0 0.0
    %1647 = vmatpush1.msra.mxu0 0.0
    %1648 = vmatprep.mubr.f32.mxu0 0.0
    %1649 = vmatmul.mubr.f32.gmra.mrb[0].mxu0 %v1582
    %v1650 = vpop.f32.mrb[0].mxu0
    %v1651 = vadd.f32 0.0, %v1650
    %v1652 = vpop.f32.mrb[0].mxu0
    %1653 = vdwg.mxu0
    %v1654 = vmax.f32 %v1651, 1e-12
    %v1655 = vrcp.pop %v1654
    %1657 = vset.pattern.permute.xlu0 32
    %1658 = vperm.xlu0 %1657, %v1655
    %v1659 = vpop.permute.xlu0 %1658
    %v1661 = vmul.f32 %v1651, %v1659
    %v1662 = vmul.f32 %v1661, %v1661
    %v1663 = vsel %vm100, %v1662, 0.0
    %1664 = vadd.xlane.f32.xlu0 %v1663
    %v1665 = vpop.xlane.xlu0 %1664
    %v1667 = vsel %vm100, %v1661, 0
    %1669 = vmatprep.subr.mxu0 0.0
    %1670 = vmatpush1.msra.mxu0 %v1233
    %1671 = vmatprep.subr.mxu0 0.0
    %1672 = vmatpush1.msra.mxu0 %v1234
    %1673 = vmatprep.subr.mxu0 0.0
    %1674 = vmatpush1.msra.mxu0 %v1235
    %1675 = vmatprep.subr.mxu0 0.0
    %1676 = vmatpush1.msra.mxu0 %v1236
    %1677 = vmatprep.subr.mxu0 0.0
    %1678 = vmatpush1.msra.mxu0 0.0
    %1679 = vmatprep.subr.mxu0 0.0
    %1680 = vmatpush1.msra.mxu0 0.0
    %1681 = vmatprep.subr.mxu0 0.0
    %1682 = vmatpush1.msra.mxu0 0.0
    %1683 = vmatprep.subr.mxu0 0.0
    %1684 = vmatpush1.msra.mxu0 0.0
    %1685 = vmatprep.subr.mxu0 0.0
    %1686 = vmatpush1.msra.mxu0 0.0
    %1687 = vmatprep.subr.mxu0 0.0
    %1688 = vmatpush1.msra.mxu0 0.0
    %1689 = vmatprep.subr.mxu0 0.0
    %1690 = vmatpush1.msra.mxu0 0.0
    %1691 = vmatprep.subr.mxu0 0.0
    %1692 = vmatpush1.msra.mxu0 0.0
    %1693 = vmatprep.subr.mxu0 0.0
    %1694 = vmatpush1.msra.mxu0 0.0
    %1695 = vmatprep.subr.mxu0 0.0
    %1696 = vmatpush1.msra.mxu0 0.0
    %1697 = vmatprep.subr.mxu0 0.0
    %1698 = vmatpush1.msra.mxu0 0.0
    %1699 = vmatprep.subr.mxu0 0.0
    %1700 = vmatpush1.msra.mxu0 0.0
    %1701 = vmatprep.subr.mxu0 0.0
    %1702 = vmatpush1.msra.mxu0 0.0
    %1703 = vmatprep.subr.mxu0 0.0
    %1704 = vmatpush1.msra.mxu0 0.0
    %1705 = vmatprep.subr.mxu0 0.0
    %1706 = vmatpush1.msra.mxu0 0.0
    %1707 = vmatprep.subr.mxu0 0.0
    %1708 = vmatpush1.msra.mxu0 0.0
    %1709 = vmatprep.subr.mxu0 0.0
    %1710 = vmatpush1.msra.mxu0 0.0
    %1711 = vmatprep.subr.mxu0 0.0
    %1712 = vmatpush1.msra.mxu0 0.0
    %1713 = vmatprep.subr.mxu0 0.0
    %1714 = vmatpush1.msra.mxu0 0.0
    %1715 = vmatprep.subr.mxu0 0.0
    %1716 = vmatpush1.msra.mxu0 0.0
    %1717 = vmatprep.subr.mxu0 0.0
    %1718 = vmatpush1.msra.mxu0 0.0
    %1719 = vmatprep.subr.mxu0 0.0
    %1720 = vmatpush1.msra.mxu0 0.0
    %1721 = vmatprep.subr.mxu0 0.0
    %1722 = vmatpush1.msra.mxu0 0.0
    %1723 = vmatprep.subr.mxu0 0.0
    %1724 = vmatpush1.msra.mxu0 0.0
    %1725 = vmatprep.subr.mxu0 0.0
    %1726 = vmatpush1.msra.mxu0 0.0
    %1727 = vmatprep.subr.mxu0 0.0
    %1728 = vmatpush1.msra.mxu0 0.0
    %1729 = vmatprep.subr.mxu0 0.0
    %1730 = vmatpush1.msra.mxu0 0.0
    %1731 = vmatprep.subr.mxu0 0.0
    %1732 = vmatpush1.msra.mxu0 0.0
    %1733 = vmatprep.mubr.f32.mxu0 0.0
    %1734 = vmatmul.mubr.f32.gmra.mrb[0].mxu0 %v1667
    %v1735 = vpop.f32.mrb[0].mxu0
    %v1736 = vadd.f32 0.0, %v1735
    %v1737 = vpop.f32.mrb[0].mxu0
    %1738 = vdwg.mxu0
    %v1739 = vadd.f32 %v1665, %v1393
    %v1740 = vmul.f32 %v1736, 2.0
    %v1741 = vsub.f32 %v1739, %v1740
    %v1742 = vmax.f32 %v1741, 0.0
    %v1743 = vrsqrt.pop %v1742
    %v1744 = vmul.f32 %v1742, %v1743
    %vm1745 = vcmp.eq.f32.partialorder %v1742, inf
    %v1746 = vsel %vm1745, %v1742, %v1744
    %vm1747 = vcmp.eq.f32.partialorder %v1742, 0.0
    %v1748 = vand.u32 %v1742, 2147483648
    %v1749 = vsel %vm1747, %v1748, %v1746
    %v1750 = vadd.f32 %v1749, 0.01
    %v1751 = vrcp.pop %v1750
    %v1752 = vmul.f32 %v1751, %v1229
    %v1754 = vsel %vm25, %v1752, 0
    %1756 = vmatprep.subr.mxu0 0.0
    %1757 = vmatpush1.msra.mxu0 %v1231
    %1758 = vmatprep.subr.mxu0 0.0
    %1759 = vmatpush1.msra.mxu0 0.0
    %1760 = vmatprep.subr.mxu0 0.0
    %1761 = vmatpush1.msra.mxu0 0.0
    %1762 = vmatprep.subr.mxu0 0.0
    %1763 = vmatpush1.msra.mxu0 0.0
    %1764 = vmatprep.subr.mxu0 0.0
    %1765 = vmatpush1.msra.mxu0 0.0
    %1766 = vmatprep.subr.mxu0 0.0
    %1767 = vmatpush1.msra.mxu0 0.0
    %1768 = vmatprep.subr.mxu0 0.0
    %1769 = vmatpush1.msra.mxu0 0.0
    %1770 = vmatprep.subr.mxu0 0.0
    %1771 = vmatpush1.msra.mxu0 0.0
    %1772 = vmatprep.subr.mxu0 0.0
    %1773 = vmatpush1.msra.mxu0 0.0
    %1774 = vmatprep.subr.mxu0 0.0
    %1775 = vmatpush1.msra.mxu0 0.0
    %1776 = vmatprep.subr.mxu0 0.0
    %1777 = vmatpush1.msra.mxu0 0.0
    %1778 = vmatprep.subr.mxu0 0.0
    %1779 = vmatpush1.msra.mxu0 0.0
    %1780 = vmatprep.subr.mxu0 0.0
    %1781 = vmatpush1.msra.mxu0 0.0
    %1782 = vmatprep.subr.mxu0 0.0
    %1783 = vmatpush1.msra.mxu0 0.0
    %1784 = vmatprep.subr.mxu0 0.0
    %1785 = vmatpush1.msra.mxu0 0.0
    %1786 = vmatprep.subr.mxu0 0.0
    %1787 = vmatpush1.msra.mxu0 0.0
    %1788 = vmatprep.subr.mxu0 0.0
    %1789 = vmatpush1.msra.mxu0 0.0
    %1790 = vmatprep.subr.mxu0 0.0
    %1791 = vmatpush1.msra.mxu0 0.0
    %1792 = vmatprep.subr.mxu0 0.0
    %1793 = vmatpush1.msra.mxu0 0.0
    %1794 = vmatprep.subr.mxu0 0.0
    %1795 = vmatpush1.msra.mxu0 0.0
    %1796 = vmatprep.subr.mxu0 0.0
    %1797 = vmatpush1.msra.mxu0 0.0
    %1798 = vmatprep.subr.mxu0 0.0
    %1799 = vmatpush1.msra.mxu0 0.0
    %1800 = vmatprep.subr.mxu0 0.0
    %1801 = vmatpush1.msra.mxu0 0.0
    %1802 = vmatprep.subr.mxu0 0.0
    %1803 = vmatpush1.msra.mxu0 0.0
    %1804 = vmatprep.subr.mxu0 0.0
    %1805 = vmatpush1.msra.mxu0 0.0
    %1806 = vmatprep.subr.mxu0 0.0
    %1807 = vmatpush1.msra.mxu0 0.0
    %1808 = vmatprep.subr.mxu0 0.0
    %1809 = vmatpush1.msra.mxu0 0.0
    %1810 = vmatprep.subr.mxu0 0.0
    %1811 = vmatpush1.msra.mxu0 0.0
    %1812 = vmatprep.subr.mxu0 0.0
    %1813 = vmatpush1.msra.mxu0 0.0
    %1814 = vmatprep.subr.mxu0 0.0
    %1815 = vmatpush1.msra.mxu0 0.0
    %1816 = vmatprep.subr.mxu0 0.0
    %1817 = vmatpush1.msra.mxu0 0.0
    %1818 = vmatprep.subr.mxu0 0.0
    %1819 = vmatpush1.msra.mxu0 0.0
    %1820 = vmatprep.mubr.f32.mxu0 0.0
    %1821 = vmatmul.mubr.f32.gmra.mrb[0].mxu0 %v1754
    %v1822 = vpop.f32.mrb[0].mxu0
    %v1823 = vadd.f32 0.0, %v1822
    %v1824 = vpop.f32.mrb[0].mxu0
    %1825 = vdwg.mxu0
    %v1826 = vmax.f32 %v1823, 1e-12
    %v1827 = vrcp.pop %v1826
    %1829 = vset.pattern.permute.xlu0 32
    %1830 = vperm.xlu0 %1829, %v1827
    %v1831 = vpop.permute.xlu0 %1830
    %v1833 = vmul.f32 %v1823, %v1831
    %s1834 = scalar_lea.vmem %s0, 24
    %v1835 = vld [vmem:[%s1834] sm:$0xff]
    %s1836 = scalar_lea.vmem %s1, 24
    %v1837 = vld [vmem:[%s1836] sm:$0xff]
    %s1838 = scalar_lea.vmem %s2, 96
    %v1839 = vld [vmem:[%s1838] sm:$0xff]
    %v1840 = vld [vmem:[%s1838 + $0x8] sm:$0xff]
    %v1841 = vld [vmem:[%s1838 + $0x10] sm:$0xff]
    %v1842 = vld [vmem:[%s1838 + $0x18] sm:$0xff]
    %s1843 = scalar_lea.vmem %s3, 3
    %v1844 = vld [vmem:[%s1843] sm:$0x1]
    %v1846 = vsel %vm25, %v1835, 0
    %1848 = vmatprep.subr.mxu0 0.0
    %1849 = vmatpush1.msra.mxu0 %v1837
    %1850 = vmatprep.subr.mxu0 0.0
    %1851 = vmatpush1.msra.mxu0 0.0
    %1852 = vmatprep.subr.mxu0 0.0
    %1853 = vmatpush1.msra.mxu0 0.0
    %1854 = vmatprep.subr.mxu0 0.0
    %1855 = vmatpush1.msra.mxu0 0.0
    %1856 = vmatprep.subr.mxu0 0.0
    %1857 = vmatpush1.msra.mxu0 0.0
    %1858 = vmatprep.subr.mxu0 0.0
    %1859 = vmatpush1.msra.mxu0 0.0
    %1860 = vmatprep.subr.mxu0 0.0
    %1861 = vmatpush1.msra.mxu0 0.0
    %1862 = vmatprep.subr.mxu0 0.0
    %1863 = vmatpush1.msra.mxu0 0.0
    %1864 = vmatprep.subr.mxu0 0.0
    %1865 = vmatpush1.msra.mxu0 0.0
    %1866 = vmatprep.subr.mxu0 0.0
    %1867 = vmatpush1.msra.mxu0 0.0
    %1868 = vmatprep.subr.mxu0 0.0
    %1869 = vmatpush1.msra.mxu0 0.0
    %1870 = vmatprep.subr.mxu0 0.0
    %1871 = vmatpush1.msra.mxu0 0.0
    %1872 = vmatprep.subr.mxu0 0.0
    %1873 = vmatpush1.msra.mxu0 0.0
    %1874 = vmatprep.subr.mxu0 0.0
    %1875 = vmatpush1.msra.mxu0 0.0
    %1876 = vmatprep.subr.mxu0 0.0
    %1877 = vmatpush1.msra.mxu0 0.0
    %1878 = vmatprep.subr.mxu0 0.0
    %1879 = vmatpush1.msra.mxu0 0.0
    %1880 = vmatprep.subr.mxu0 0.0
    %1881 = vmatpush1.msra.mxu0 0.0
    %1882 = vmatprep.subr.mxu0 0.0
    %1883 = vmatpush1.msra.mxu0 0.0
    %1884 = vmatprep.subr.mxu0 0.0
    %1885 = vmatpush1.msra.mxu0 0.0
    %1886 = vmatprep.subr.mxu0 0.0
    %1887 = vmatpush1.msra.mxu0 0.0
    %1888 = vmatprep.subr.mxu0 0.0
    %1889 = vmatpush1.msra.mxu0 0.0
    %1890 = vmatprep.subr.mxu0 0.0
    %1891 = vmatpush1.msra.mxu0 0.0
    %1892 = vmatprep.subr.mxu0 0.0
    %1893 = vmatpush1.msra.mxu0 0.0
    %1894 = vmatprep.subr.mxu0 0.0
    %1895 = vmatpush1.msra.mxu0 0.0
    %1896 = vmatprep.subr.mxu0 0.0
    %1897 = vmatpush1.msra.mxu0 0.0
    %1898 = vmatprep.subr.mxu0 0.0
    %1899 = vmatpush1.msra.mxu0 0.0
    %1900 = vmatprep.subr.mxu0 0.0
    %1901 = vmatpush1.msra.mxu0 0.0
    %1902 = vmatprep.subr.mxu0 0.0
    %1903 = vmatpush1.msra.mxu0 0.0
    %1904 = vmatprep.subr.mxu0 0.0
    %1905 = vmatpush1.msra.mxu0 0.0
    %1906 = vmatprep.subr.mxu0 0.0
    %1907 = vmatpush1.msra.mxu0 0.0
    %1908 = vmatprep.subr.mxu0 0.0
    %1909 = vmatpush1.msra.mxu0 0.0
    %1910 = vmatprep.subr.mxu0 0.0
    %1911 = vmatpush1.msra.mxu0 0.0
    %1912 = vmatprep.mubr.f32.mxu0 0.0
    %1913 = vmatmul.mubr.f32.gmra.mrb[0].mxu0 %v1846
    %v1914 = vpop.f32.mrb[0].mxu0
    %v1915 = vadd.f32 0.0, %v1914
    %v1916 = vpop.f32.mrb[0].mxu0
    %1917 = vdwg.mxu0
    %v1918 = vmul.f32 %v1915, %v1915
    %v1919 = vsel %vm100, %v1918, 0.0
    %1920 = vadd.xlane.f32.xlu0 %v1919
    %v1921 = vpop.xlane.xlu0 %1920
    %v1923 = vsel %vm100, %v1915, 0
    %1925 = vmatprep.subr.mxu0 0.0
    %1926 = vmatpush1.msra.mxu0 %v1839
    %1927 = vmatprep.subr.mxu0 0.0
    %1928 = vmatpush1.msra.mxu0 %v1840
    %1929 = vmatprep.subr.mxu0 0.0
    %1930 = vmatpush1.msra.mxu0 %v1841
    %1931 = vmatprep.subr.mxu0 0.0
    %1932 = vmatpush1.msra.mxu0 %v1842
    %1933 = vmatprep.subr.mxu0 0.0
    %1934 = vmatpush1.msra.mxu0 0.0
    %1935 = vmatprep.subr.mxu0 0.0
    %1936 = vmatpush1.msra.mxu0 0.0
    %1937 = vmatprep.subr.mxu0 0.0
    %1938 = vmatpush1.msra.mxu0 0.0
    %1939 = vmatprep.subr.mxu0 0.0
    %1940 = vmatpush1.msra.mxu0 0.0
    %1941 = vmatprep.subr.mxu0 0.0
    %1942 = vmatpush1.msra.mxu0 0.0
    %1943 = vmatprep.subr.mxu0 0.0
    %1944 = vmatpush1.msra.mxu0 0.0
    %1945 = vmatprep.subr.mxu0 0.0
    %1946 = vmatpush1.msra.mxu0 0.0
    %1947 = vmatprep.subr.mxu0 0.0
    %1948 = vmatpush1.msra.mxu0 0.0
    %1949 = vmatprep.subr.mxu0 0.0
    %1950 = vmatpush1.msra.mxu0 0.0
    %1951 = vmatprep.subr.mxu0 0.0
    %1952 = vmatpush1.msra.mxu0 0.0
    %1953 = vmatprep.subr.mxu0 0.0
    %1954 = vmatpush1.msra.mxu0 0.0
    %1955 = vmatprep.subr.mxu0 0.0
    %1956 = vmatpush1.msra.mxu0 0.0
    %1957 = vmatprep.subr.mxu0 0.0
    %1958 = vmatpush1.msra.mxu0 0.0
    %1959 = vmatprep.subr.mxu0 0.0
    %1960 = vmatpush1.msra.mxu0 0.0
    %1961 = vmatprep.subr.mxu0 0.0
    %1962 = vmatpush1.msra.mxu0 0.0
    %1963 = vmatprep.subr.mxu0 0.0
    %1964 = vmatpush1.msra.mxu0 0.0
    %1965 = vmatprep.subr.mxu0 0.0
    %1966 = vmatpush1.msra.mxu0 0.0
    %1967 = vmatprep.subr.mxu0 0.0
    %1968 = vmatpush1.msra.mxu0 0.0
    %1969 = vmatprep.subr.mxu0 0.0
    %1970 = vmatpush1.msra.mxu0 0.0
    %1971 = vmatprep.subr.mxu0 0.0
    %1972 = vmatpush1.msra.mxu0 0.0
    %1973 = vmatprep.subr.mxu0 0.0
    %1974 = vmatpush1.msra.mxu0 0.0
    %1975 = vmatprep.subr.mxu0 0.0
    %1976 = vmatpush1.msra.mxu0 0.0
    %1977 = vmatprep.subr.mxu0 0.0
    %1978 = vmatpush1.msra.mxu0 0.0
    %1979 = vmatprep.subr.mxu0 0.0
    %1980 = vmatpush1.msra.mxu0 0.0
    %1981 = vmatprep.subr.mxu0 0.0
    %1982 = vmatpush1.msra.mxu0 0.0
    %1983 = vmatprep.subr.mxu0 0.0
    %1984 = vmatpush1.msra.mxu0 0.0
    %1985 = vmatprep.subr.mxu0 0.0
    %1986 = vmatpush1.msra.mxu0 0.0
    %1987 = vmatprep.subr.mxu0 0.0
    %1988 = vmatpush1.msra.mxu0 0.0
    %1989 = vmatprep.mubr.f32.mxu0 0.0
    %1990 = vmatmul.mubr.f32.gmra.mrb[0].mxu0 %v1923
    %v1991 = vpop.f32.mrb[0].mxu0
    %v1992 = vadd.f32 0.0, %v1991
    %v1993 = vpop.f32.mrb[0].mxu0
    %1994 = vdwg.mxu0
    %v1996 = vlaneseq
    %v1997 = vshrl.u32 %v1996, 7
    %v1998 = vsub.s32 0, %v1997
    %v1999 = vrot.slane %v1844, %v1998
    %v2001 = vadd.f32 %v1921, %v1999
    %v2002 = vmul.f32 %v1992, 2.0
    %v2003 = vsub.f32 %v2001, %v2002
    %v2004 = vmax.f32 %v2003, 0.0
    %v2005 = vrsqrt.pop %v2004
    %v2006 = vmul.f32 %v2004, %v2005
    %vm2007 = vcmp.eq.f32.partialorder %v2004, inf
    %v2008 = vsel %vm2007, %v2004, %v2006
    %vm2009 = vcmp.eq.f32.partialorder %v2004, 0.0
    %v2010 = vand.u32 %v2004, 2147483648
    %v2011 = vsel %vm2009, %v2010, %v2008
    %v2012 = vadd.f32 %v2011, 0.01
    %v2013 = vrcp.pop %v2012
    %v2014 = vmul.f32 %v2013, %v1835
    %v2016 = vsel %vm25, %v2014, 0
    %2018 = vmatprep.subr.mxu0 0.0
    %2019 = vmatpush1.msra.mxu0 %v1837
    %2020 = vmatprep.subr.mxu0 0.0
    %2021 = vmatpush1.msra.mxu0 0.0
    %2022 = vmatprep.subr.mxu0 0.0
    %2023 = vmatpush1.msra.mxu0 0.0
    %2024 = vmatprep.subr.mxu0 0.0
    %2025 = vmatpush1.msra.mxu0 0.0
    %2026 = vmatprep.subr.mxu0 0.0
    %2027 = vmatpush1.msra.mxu0 0.0
    %2028 = vmatprep.subr.mxu0 0.0
    %2029 = vmatpush1.msra.mxu0 0.0
    %2030 = vmatprep.subr.mxu0 0.0
    %2031 = vmatpush1.msra.mxu0 0.0
    %2032 = vmatprep.subr.mxu0 0.0
    %2033 = vmatpush1.msra.mxu0 0.0
    %2034 = vmatprep.subr.mxu0 0.0
    %2035 = vmatpush1.msra.mxu0 0.0
    %2036 = vmatprep.subr.mxu0 0.0
    %2037 = vmatpush1.msra.mxu0 0.0
    %2038 = vmatprep.subr.mxu0 0.0
    %2039 = vmatpush1.msra.mxu0 0.0
    %2040 = vmatprep.subr.mxu0 0.0
    %2041 = vmatpush1.msra.mxu0 0.0
    %2042 = vmatprep.subr.mxu0 0.0
    %2043 = vmatpush1.msra.mxu0 0.0
    %2044 = vmatprep.subr.mxu0 0.0
    %2045 = vmatpush1.msra.mxu0 0.0
    %2046 = vmatprep.subr.mxu0 0.0
    %2047 = vmatpush1.msra.mxu0 0.0
    %2048 = vmatprep.subr.mxu0 0.0
    %2049 = vmatpush1.msra.mxu0 0.0
    %2050 = vmatprep.subr.mxu0 0.0
    %2051 = vmatpush1.msra.mxu0 0.0
    %2052 = vmatprep.subr.mxu0 0.0
    %2053 = vmatpush1.msra.mxu0 0.0
    %2054 = vmatprep.subr.mxu0 0.0
    %2055 = vmatpush1.msra.mxu0 0.0
    %2056 = vmatprep.subr.mxu0 0.0
    %2057 = vmatpush1.msra.mxu0 0.0
    %2058 = vmatprep.subr.mxu0 0.0
    %2059 = vmatpush1.msra.mxu0 0.0
    %2060 = vmatprep.subr.mxu0 0.0
    %2061 = vmatpush1.msra.mxu0 0.0
    %2062 = vmatprep.subr.mxu0 0.0
    %2063 = vmatpush1.msra.mxu0 0.0
    %2064 = vmatprep.subr.mxu0 0.0
    %2065 = vmatpush1.msra.mxu0 0.0
    %2066 = vmatprep.subr.mxu0 0.0
    %2067 = vmatpush1.msra.mxu0 0.0
    %2068 = vmatprep.subr.mxu0 0.0
    %2069 = vmatpush1.msra.mxu0 0.0
    %2070 = vmatprep.subr.mxu0 0.0
    %2071 = vmatpush1.msra.mxu0 0.0
    %2072 = vmatprep.subr.mxu0 0.0
    %2073 = vmatpush1.msra.mxu0 0.0
    %2074 = vmatprep.subr.mxu0 0.0
    %2075 = vmatpush1.msra.mxu0 0.0
    %2076 = vmatprep.subr.mxu0 0.0
    %2077 = vmatpush1.msra.mxu0 0.0
    %2078 = vmatprep.subr.mxu0 0.0
    %2079 = vmatpush1.msra.mxu0 0.0
    %2080 = vmatprep.subr.mxu0 0.0
    %2081 = vmatpush1.msra.mxu0 0.0
    %2082 = vmatprep.mubr.f32.mxu0 0.0
    %2083 = vmatmul.mubr.f32.gmra.mrb[0].mxu0 %v2016
    %v2084 = vpop.f32.mrb[0].mxu0
    %v2085 = vadd.f32 0.0, %v2084
    %v2086 = vpop.f32.mrb[0].mxu0
    %2087 = vdwg.mxu0
    %v2088 = vmax.f32 %v2085, 1e-12
    %v2089 = vrcp.pop %v2088
    %2091 = vset.pattern.permute.xlu0 32
    %2092 = vperm.xlu0 %2091, %v2089
    %v2093 = vpop.permute.xlu0 %2092
    %v2095 = vmul.f32 %v2085, %v2093
    %v2096 = vmul.f32 %v2095, %v2095
    %v2097 = vsel %vm100, %v2096, 0.0
    %2098 = vadd.xlane.f32.xlu0 %v2097
    %v2099 = vpop.xlane.xlu0 %2098
    %v2101 = vsel %vm100, %v2095, 0
    %2103 = vmatprep.subr.mxu0 0.0
    %2104 = vmatpush1.msra.mxu0 %v1839
    %2105 = vmatprep.subr.mxu0 0.0
    %2106 = vmatpush1.msra.mxu0 %v1840
    %2107 = vmatprep.subr.mxu0 0.0
    %2108 = vmatpush1.msra.mxu0 %v1841
    %2109 = vmatprep.subr.mxu0 0.0
    %2110 = vmatpush1.msra.mxu0 %v1842
    %2111 = vmatprep.subr.mxu0 0.0
    %2112 = vmatpush1.msra.mxu0 0.0
    %2113 = vmatprep.subr.mxu0 0.0
    %2114 = vmatpush1.msra.mxu0 0.0
    %2115 = vmatprep.subr.mxu0 0.0
    %2116 = vmatpush1.msra.mxu0 0.0
    %2117 = vmatprep.subr.mxu0 0.0
    %2118 = vmatpush1.msra.mxu0 0.0
    %2119 = vmatprep.subr.mxu0 0.0
    %2120 = vmatpush1.msra.mxu0 0.0
    %2121 = vmatprep.subr.mxu0 0.0
    %2122 = vmatpush1.msra.mxu0 0.0
    %2123 = vmatprep.subr.mxu0 0.0
    %2124 = vmatpush1.msra.mxu0 0.0
    %2125 = vmatprep.subr.mxu0 0.0
    %2126 = vmatpush1.msra.mxu0 0.0
    %2127 = vmatprep.subr.mxu0 0.0
    %2128 = vmatpush1.msra.mxu0 0.0
    %2129 = vmatprep.subr.mxu0 0.0
    %2130 = vmatpush1.msra.mxu0 0.0
    %2131 = vmatprep.subr.mxu0 0.0
    %2132 = vmatpush1.msra.mxu0 0.0
    %2133 = vmatprep.subr.mxu0 0.0
    %2134 = vmatpush1.msra.mxu0 0.0
    %2135 = vmatprep.subr.mxu0 0.0
    %2136 = vmatpush1.msra.mxu0 0.0
    %2137 = vmatprep.subr.mxu0 0.0
    %2138 = vmatpush1.msra.mxu0 0.0
    %2139 = vmatprep.subr.mxu0 0.0
    %2140 = vmatpush1.msra.mxu0 0.0
    %2141 = vmatprep.subr.mxu0 0.0
    %2142 = vmatpush1.msra.mxu0 0.0
    %2143 = vmatprep.subr.mxu0 0.0
    %2144 = vmatpush1.msra.mxu0 0.0
    %2145 = vmatprep.subr.mxu0 0.0
    %2146 = vmatpush1.msra.mxu0 0.0
    %2147 = vmatprep.subr.mxu0 0.0
    %2148 = vmatpush1.msra.mxu0 0.0
    %2149 = vmatprep.subr.mxu0 0.0
    %2150 = vmatpush1.msra.mxu0 0.0
    %2151 = vmatprep.subr.mxu0 0.0
    %2152 = vmatpush1.msra.mxu0 0.0
    %2153 = vmatprep.subr.mxu0 0.0
    %2154 = vmatpush1.msra.mxu0 0.0
    %2155 = vmatprep.subr.mxu0 0.0
    %2156 = vmatpush1.msra.mxu0 0.0
    %2157 = vmatprep.subr.mxu0 0.0
    %2158 = vmatpush1.msra.mxu0 0.0
    %2159 = vmatprep.subr.mxu0 0.0
    %2160 = vmatpush1.msra.mxu0 0.0
    %2161 = vmatprep.subr.mxu0 0.0
    %2162 = vmatpush1.msra.mxu0 0.0
    %2163 = vmatprep.subr.mxu0 0.0
    %2164 = vmatpush1.msra.mxu0 0.0
    %2165 = vmatprep.subr.mxu0 0.0
    %2166 = vmatpush1.msra.mxu0 0.0
    %2167 = vmatprep.mubr.f32.mxu0 0.0
    %2168 = vmatmul.mubr.f32.gmra.mrb[0].mxu0 %v2101
    %v2169 = vpop.f32.mrb[0].mxu0
    %v2170 = vadd.f32 0.0, %v2169
    %v2171 = vpop.f32.mrb[0].mxu0
    %2172 = vdwg.mxu0
    %v2173 = vadd.f32 %v2099, %v1999
    %v2174 = vmul.f32 %v2170, 2.0
    %v2175 = vsub.f32 %v2173, %v2174
    %v2176 = vmax.f32 %v2175, 0.0
    %v2177 = vrsqrt.pop %v2176
    %v2178 = vmul.f32 %v2176, %v2177
    %vm2179 = vcmp.eq.f32.partialorder %v2176, inf
    %v2180 = vsel %vm2179, %v2176, %v2178
    %vm2181 = vcmp.eq.f32.partialorder %v2176, 0.0
    %v2182 = vand.u32 %v2176, 2147483648
    %v2183 = vsel %vm2181, %v2182, %v2180
    %v2184 = vadd.f32 %v2183, 0.01
    %v2185 = vrcp.pop %v2184
    %v2186 = vmul.f32 %v2185, %v1835
    %v2188 = vsel %vm25, %v2186, 0
    %2190 = vmatprep.subr.mxu0 0.0
    %2191 = vmatpush1.msra.mxu0 %v1837
    %2192 = vmatprep.subr.mxu0 0.0
    %2193 = vmatpush1.msra.mxu0 0.0
    %2194 = vmatprep.subr.mxu0 0.0
    %2195 = vmatpush1.msra.mxu0 0.0
    %2196 = vmatprep.subr.mxu0 0.0
    %2197 = vmatpush1.msra.mxu0 0.0
    %2198 = vmatprep.subr.mxu0 0.0
    %2199 = vmatpush1.msra.mxu0 0.0
    %2200 = vmatprep.subr.mxu0 0.0
    %2201 = vmatpush1.msra.mxu0 0.0
    %2202 = vmatprep.subr.mxu0 0.0
    %2203 = vmatpush1.msra.mxu0 0.0
    %2204 = vmatprep.subr.mxu0 0.0
    %2205 = vmatpush1.msra.mxu0 0.0
    %2206 = vmatprep.subr.mxu0 0.0
    %2207 = vmatpush1.msra.mxu0 0.0
    %2208 = vmatprep.subr.mxu0 0.0
    %2209 = vmatpush1.msra.mxu0 0.0
    %2210 = vmatprep.subr.mxu0 0.0
    %2211 = vmatpush1.msra.mxu0 0.0
    %2212 = vmatprep.subr.mxu0 0.0
    %2213 = vmatpush1.msra.mxu0 0.0
    %2214 = vmatprep.subr.mxu0 0.0
    %2215 = vmatpush1.msra.mxu0 0.0
    %2216 = vmatprep.subr.mxu0 0.0
    %2217 = vmatpush1.msra.mxu0 0.0
    %2218 = vmatprep.subr.mxu0 0.0
    %2219 = vmatpush1.msra.mxu0 0.0
    %2220 = vmatprep.subr.mxu0 0.0
    %2221 = vmatpush1.msra.mxu0 0.0
    %2222 = vmatprep.subr.mxu0 0.0
    %2223 = vmatpush1.msra.mxu0 0.0
    %2224 = vmatprep.subr.mxu0 0.0
    %2225 = vmatpush1.msra.mxu0 0.0
    %2226 = vmatprep.subr.mxu0 0.0
    %2227 = vmatpush1.msra.mxu0 0.0
    %2228 = vmatprep.subr.mxu0 0.0
    %2229 = vmatpush1.msra.mxu0 0.0
    %2230 = vmatprep.subr.mxu0 0.0
    %2231 = vmatpush1.msra.mxu0 0.0
    %2232 = vmatprep.subr.mxu0 0.0
    %2233 = vmatpush1.msra.mxu0 0.0
    %2234 = vmatprep.subr.mxu0 0.0
    %2235 = vmatpush1.msra.mxu0 0.0
    %2236 = vmatprep.subr.mxu0 0.0
    %2237 = vmatpush1.msra.mxu0 0.0
    %2238 = vmatprep.subr.mxu0 0.0
    %2239 = vmatpush1.msra.mxu0 0.0
    %2240 = vmatprep.subr.mxu0 0.0
    %2241 = vmatpush1.msra.mxu0 0.0
    %2242 = vmatprep.subr.mxu0 0.0
    %2243 = vmatpush1.msra.mxu0 0.0
    %2244 = vmatprep.subr.mxu0 0.0
    %2245 = vmatpush1.msra.mxu0 0.0
    %2246 = vmatprep.subr.mxu0 0.0
    %2247 = vmatpush1.msra.mxu0 0.0
    %2248 = vmatprep.subr.mxu0 0.0
    %2249 = vmatpush1.msra.mxu0 0.0
    %2250 = vmatprep.subr.mxu0 0.0
    %2251 = vmatpush1.msra.mxu0 0.0
    %2252 = vmatprep.subr.mxu0 0.0
    %2253 = vmatpush1.msra.mxu0 0.0
    %2254 = vmatprep.mubr.f32.mxu0 0.0
    %2255 = vmatmul.mubr.f32.gmra.mrb[0].mxu0 %v2188
    %v2256 = vpop.f32.mrb[0].mxu0
    %v2257 = vadd.f32 0.0, %v2256
    %v2258 = vpop.f32.mrb[0].mxu0
    %2259 = vdwg.mxu0
    %v2260 = vmax.f32 %v2257, 1e-12
    %v2261 = vrcp.pop %v2260
    %2263 = vset.pattern.permute.xlu0 32
    %2264 = vperm.xlu0 %2263, %v2261
    %v2265 = vpop.permute.xlu0 %2264
    %v2267 = vmul.f32 %v2257, %v2265
    %v2268 = vmul.f32 %v2267, %v2267
    %v2269 = vsel %vm100, %v2268, 0.0
    %2270 = vadd.xlane.f32.xlu0 %v2269
    %v2271 = vpop.xlane.xlu0 %2270
    %v2273 = vsel %vm100, %v2267, 0
    %2275 = vmatprep.subr.mxu0 0.0
    %2276 = vmatpush1.msra.mxu0 %v1839
    %2277 = vmatprep.subr.mxu0 0.0
    %2278 = vmatpush1.msra.mxu0 %v1840
    %2279 = vmatprep.subr.mxu0 0.0
    %2280 = vmatpush1.msra.mxu0 %v1841
    %2281 = vmatprep.subr.mxu0 0.0
    %2282 = vmatpush1.msra.mxu0 %v1842
    %2283 = vmatprep.subr.mxu0 0.0
    %2284 = vmatpush1.msra.mxu0 0.0
    %2285 = vmatprep.subr.mxu0 0.0
    %2286 = vmatpush1.msra.mxu0 0.0
    %2287 = vmatprep.subr.mxu0 0.0
    %2288 = vmatpush1.msra.mxu0 0.0
    %2289 = vmatprep.subr.mxu0 0.0
    %2290 = vmatpush1.msra.mxu0 0.0
    %2291 = vmatprep.subr.mxu0 0.0
    %2292 = vmatpush1.msra.mxu0 0.0
    %2293 = vmatprep.subr.mxu0 0.0
    %2294 = vmatpush1.msra.mxu0 0.0
    %2295 = vmatprep.subr.mxu0 0.0
    %2296 = vmatpush1.msra.mxu0 0.0
    %2297 = vmatprep.subr.mxu0 0.0
    %2298 = vmatpush1.msra.mxu0 0.0
    %2299 = vmatprep.subr.mxu0 0.0
    %2300 = vmatpush1.msra.mxu0 0.0
    %2301 = vmatprep.subr.mxu0 0.0
    %2302 = vmatpush1.msra.mxu0 0.0
    %2303 = vmatprep.subr.mxu0 0.0
    %2304 = vmatpush1.msra.mxu0 0.0
    %2305 = vmatprep.subr.mxu0 0.0
    %2306 = vmatpush1.msra.mxu0 0.0
    %2307 = vmatprep.subr.mxu0 0.0
    %2308 = vmatpush1.msra.mxu0 0.0
    %2309 = vmatprep.subr.mxu0 0.0
    %2310 = vmatpush1.msra.mxu0 0.0
    %2311 = vmatprep.subr.mxu0 0.0
    %2312 = vmatpush1.msra.mxu0 0.0
    %2313 = vmatprep.subr.mxu0 0.0
    %2314 = vmatpush1.msra.mxu0 0.0
    %2315 = vmatprep.subr.mxu0 0.0
    %2316 = vmatpush1.msra.mxu0 0.0
    %2317 = vmatprep.subr.mxu0 0.0
    %2318 = vmatpush1.msra.mxu0 0.0
    %2319 = vmatprep.subr.mxu0 0.0
    %2320 = vmatpush1.msra.mxu0 0.0
    %2321 = vmatprep.subr.mxu0 0.0
    %2322 = vmatpush1.msra.mxu0 0.0
    %2323 = vmatprep.subr.mxu0 0.0
    %2324 = vmatpush1.msra.mxu0 0.0
    %2325 = vmatprep.subr.mxu0 0.0
    %2326 = vmatpush1.msra.mxu0 0.0
    %2327 = vmatprep.subr.mxu0 0.0
    %2328 = vmatpush1.msra.mxu0 0.0
    %2329 = vmatprep.subr.mxu0 0.0
    %2330 = vmatpush1.msra.mxu0 0.0
    %2331 = vmatprep.subr.mxu0 0.0
    %2332 = vmatpush1.msra.mxu0 0.0
    %2333 = vmatprep.subr.mxu0 0.0
    %2334 = vmatpush1.msra.mxu0 0.0
    %2335 = vmatprep.subr.mxu0 0.0
    %2336 = vmatpush1.msra.mxu0 0.0
    %2337 = vmatprep.subr.mxu0 0.0
    %2338 = vmatpush1.msra.mxu0 0.0
    %2339 = vmatprep.mubr.f32.mxu0 0.0
    %2340 = vmatmul.mubr.f32.gmra.mrb[0].mxu0 %v2273
    %v2341 = vpop.f32.mrb[0].mxu0
    %v2342 = vadd.f32 0.0, %v2341
    %v2343 = vpop.f32.mrb[0].mxu0
    %2344 = vdwg.mxu0
    %v2345 = vadd.f32 %v2271, %v1999
    %v2346 = vmul.f32 %v2342, 2.0
    %v2347 = vsub.f32 %v2345, %v2346
    %v2348 = vmax.f32 %v2347, 0.0
    %v2349 = vrsqrt.pop %v2348
    %v2350 = vmul.f32 %v2348, %v2349
    %vm2351 = vcmp.eq.f32.partialorder %v2348, inf
    %v2352 = vsel %vm2351, %v2348, %v2350
    %vm2353 = vcmp.eq.f32.partialorder %v2348, 0.0
    %v2354 = vand.u32 %v2348, 2147483648
    %v2355 = vsel %vm2353, %v2354, %v2352
    %v2356 = vadd.f32 %v2355, 0.01
    %v2357 = vrcp.pop %v2356
    %v2358 = vmul.f32 %v2357, %v1835
    %v2360 = vsel %vm25, %v2358, 0
    %2362 = vmatprep.subr.mxu0 0.0
    %2363 = vmatpush1.msra.mxu0 %v1837
    %2364 = vmatprep.subr.mxu0 0.0
    %2365 = vmatpush1.msra.mxu0 0.0
    %2366 = vmatprep.subr.mxu0 0.0
    %2367 = vmatpush1.msra.mxu0 0.0
    %2368 = vmatprep.subr.mxu0 0.0
    %2369 = vmatpush1.msra.mxu0 0.0
    %2370 = vmatprep.subr.mxu0 0.0
    %2371 = vmatpush1.msra.mxu0 0.0
    %2372 = vmatprep.subr.mxu0 0.0
    %2373 = vmatpush1.msra.mxu0 0.0
    %2374 = vmatprep.subr.mxu0 0.0
    %2375 = vmatpush1.msra.mxu0 0.0
    %2376 = vmatprep.subr.mxu0 0.0
    %2377 = vmatpush1.msra.mxu0 0.0
    %2378 = vmatprep.subr.mxu0 0.0
    %2379 = vmatpush1.msra.mxu0 0.0
    %2380 = vmatprep.subr.mxu0 0.0
    %2381 = vmatpush1.msra.mxu0 0.0
    %2382 = vmatprep.subr.mxu0 0.0
    %2383 = vmatpush1.msra.mxu0 0.0
    %2384 = vmatprep.subr.mxu0 0.0
    %2385 = vmatpush1.msra.mxu0 0.0
    %2386 = vmatprep.subr.mxu0 0.0
    %2387 = vmatpush1.msra.mxu0 0.0
    %2388 = vmatprep.subr.mxu0 0.0
    %2389 = vmatpush1.msra.mxu0 0.0
    %2390 = vmatprep.subr.mxu0 0.0
    %2391 = vmatpush1.msra.mxu0 0.0
    %2392 = vmatprep.subr.mxu0 0.0
    %2393 = vmatpush1.msra.mxu0 0.0
    %2394 = vmatprep.subr.mxu0 0.0
    %2395 = vmatpush1.msra.mxu0 0.0
    %2396 = vmatprep.subr.mxu0 0.0
    %2397 = vmatpush1.msra.mxu0 0.0
    %2398 = vmatprep.subr.mxu0 0.0
    %2399 = vmatpush1.msra.mxu0 0.0
    %2400 = vmatprep.subr.mxu0 0.0
    %2401 = vmatpush1.msra.mxu0 0.0
    %2402 = vmatprep.subr.mxu0 0.0
    %2403 = vmatpush1.msra.mxu0 0.0
    %2404 = vmatprep.subr.mxu0 0.0
    %2405 = vmatpush1.msra.mxu0 0.0
    %2406 = vmatprep.subr.mxu0 0.0
    %2407 = vmatpush1.msra.mxu0 0.0
    %2408 = vmatprep.subr.mxu0 0.0
    %2409 = vmatpush1.msra.mxu0 0.0
    %2410 = vmatprep.subr.mxu0 0.0
    %2411 = vmatpush1.msra.mxu0 0.0
    %2412 = vmatprep.subr.mxu0 0.0
    %2413 = vmatpush1.msra.mxu0 0.0
    %2414 = vmatprep.subr.mxu0 0.0
    %2415 = vmatpush1.msra.mxu0 0.0
    %2416 = vmatprep.subr.mxu0 0.0
    %2417 = vmatpush1.msra.mxu0 0.0
    %2418 = vmatprep.subr.mxu0 0.0
    %2419 = vmatpush1.msra.mxu0 0.0
    %2420 = vmatprep.subr.mxu0 0.0
    %2421 = vmatpush1.msra.mxu0 0.0
    %2422 = vmatprep.subr.mxu0 0.0
    %2423 = vmatpush1.msra.mxu0 0.0
    %2424 = vmatprep.subr.mxu0 0.0
    %2425 = vmatpush1.msra.mxu0 0.0
    %2426 = vmatprep.mubr.f32.mxu0 0.0
    %2427 = vmatmul.mubr.f32.gmra.mrb[0].mxu0 %v2360
    %v2428 = vpop.f32.mrb[0].mxu0
    %v2429 = vadd.f32 0.0, %v2428
    %v2430 = vpop.f32.mrb[0].mxu0
    %2431 = vdwg.mxu0
    %v2432 = vmax.f32 %v2429, 1e-12
    %v2433 = vrcp.pop %v2432
    %2435 = vset.pattern.permute.xlu0 32
    %2436 = vperm.xlu0 %2435, %v2433
    %v2437 = vpop.permute.xlu0 %2436
    %v2439 = vmul.f32 %v2429, %v2437
    %2441 = vrot.lane.b32.xlu0 %v1227, 32
    %v2442 = vpop.permute.xlu0 %2441
    %2445 = vrot.lane.b32.xlu0 %v1833, 64
    %v2446 = vpop.permute.xlu0 %2445
    %2449 = vrot.lane.b32.xlu0 %v2439, 96
    %v2450 = vpop.permute.xlu0 %2449
    %v2452 = vsel %vm100, %v621, %v2442
    %vm2453 = vcmask 523264
    %v2454 = vsel %vm2453, %v2452, %v2446
    %vm2455 = vcmask 785408
    %v2456 = vsel %vm2455, %v2454, %v2450
    %2457 = vst [vmem:[#allocation2] sm:$0xff] %v2456
    // Predicated region
    $region18: #{tpu_custom_call.1} parent=1 // pred_check
      _
    $region19: #{tpu_custom_call.1} parent=1 // pred_check_branch
      %2459 = sbr.rel (0) target = $region21
    $region20: #{tpu_custom_call.1} parent=1 // pred_region
      %s2461 = ssub.s32 128, 128
      %2462 = vsyncadd [#allocation3], %s2461
      %s2464 = sshll.u32 [#allocation2], 4
      %s2465 = int_to_ptr.vmem [resolvable:$true] %s2464
      %2467 = dma.vmem_to_hbm [thread:$0]  %s2465, 128, %s4, [#allocation3]
    $region21: #{tpu_custom_call.1} parent=1 // pred_fallthru
      _
    // Predicated region
    $region22: #{tpu_custom_call.1} parent=1 // pred_check
      _
    $region23: #{tpu_custom_call.1} parent=1 // pred_check_branch
      %2469 = sbr.rel (0) target = $region25
    $region24: #{tpu_custom_call.1} parent=1 // pred_region
      %2470 = dma.done [#allocation3], 128
    $region25: #{tpu_custom_call.1} parent=1 // pred_fallthru
      _
    %2471 = vsyncpa [#allocation3], 1

</llo_original>
